<compile_context>
chip_gen: v7x
topology: tpu7x:2x2x1
jax: 0.10.0
libtpu: 0.0.40
codegen_flags: <defaults>
</compile_context>

<pallas_src>
import functools
import math

import jax
import jax.numpy as jnp
from jax.experimental import pallas as pl
from jax.experimental.pallas import tpu as pltpu

F32 = jnp.float32
BF16 = jnp.bfloat16
NUM_CLASSES = 2
FEATURE_DIM = 64   # stands in for EfficientNet-B0's 1280
CP = 128           # every channel dim is zero-padded to 128 lanes


def _cparams(semantics):
    return pltpu.CompilerParams(
        dimension_semantics=semantics,
        vmem_limit_bytes=32 * 1024 * 1024,   # explicit; safe on v5e/v6e/v7x
    )


def _pick_tile(m, cap=256):
    """Largest row tile <= cap that divides m (full dim if m <= cap)."""
    if m <= cap:
        return m
    t = cap - (cap % 8)
    while t > 8 and m % t != 0:
        t -= 8
    return t if m % t == 0 else m


# ----------------------------- Pallas kernels ------------------------------

def _matmul_bn_act_kernel(a_ref, w_ref, scale_ref, bias_ref, o_ref, *, act):
    """out = act((a @ w) * scale + bias); a/w are bf16 (MXU-native), the
    accumulation and folded-BN scale/bias math stay in f32."""
    acc = jnp.dot(a_ref[...], w_ref[...], preferred_element_type=jnp.float32)
    y = acc * scale_ref[...] + bias_ref[...]
    if act == "swish":
        y = y * jax.nn.sigmoid(y)
    o_ref[...] = y.astype(o_ref.dtype)


def matmul_bn_act(a, w, scale, bias, act=None, out_dtype=BF16):
    M, K = a.shape
    N = w.shape[1]
    tm = _pick_tile(M, 256)
    # K <= 128 for every layer here; a K grid axis + f32 accumulator would be
    # added once K grows past a few hundred.
    kernel = functools.partial(_matmul_bn_act_kernel, act=act)
    return pl.pallas_call(
        kernel,
        out_shape=jax.ShapeDtypeStruct((M, N), out_dtype),
        grid=(M // tm,),
        in_specs=[
            pl.BlockSpec((tm, K), lambda i: (i, 0)),
            pl.BlockSpec((K, N), lambda i: (0, 0)),
            pl.BlockSpec((1, N), lambda i: (0, 0)),
            pl.BlockSpec((1, N), lambda i: (0, 0)),
        ],
        out_specs=pl.BlockSpec((tm, N), lambda i: (i, 0)),
        compiler_params=_cparams(("parallel",)),
    )(a, w, scale, bias)


def _gated_project_kernel(a_ref, g_ref, w_ref, scale_ref, bias_ref, *rest,
                          residual):
    """Fused MBConv tail: out = ((a * gate) @ w) * scale + bias (+ residual)."""
    if residual:
        r_ref, o_ref = rest
    else:
        (o_ref,) = rest
    gate = g_ref[0]                                              # (1, Cin) f32
    xg = (a_ref[...].astype(jnp.float32) * gate).astype(BF16)
    acc = jnp.dot(xg, w_ref[...], preferred_element_type=jnp.float32)
    y = acc * scale_ref[...] + bias_ref[...]
    if residual:
        y = y + r_ref[...].astype(jnp.float32)
    o_ref[...] = y.astype(o_ref.dtype)


def gated_project(x_flat, gate, w, scale, bias, hw, residual=None):
    """x_flat: (B*hw, K) bf16, gate: (B, K) f32 (per-batch SE gate)."""
    M, K = x_flat.shape
    B = M // hw
    N = w.shape[1]
    thw = _pick_tile(hw, 256)
    nb = hw // thw
    has_res = residual is not None
    gate3 = gate.reshape(B, 1, K)
    in_specs = [
        pl.BlockSpec((thw, K), lambda b, m: (b * nb + m, 0)),
        pl.BlockSpec((1, 1, K), lambda b, m: (b, 0, 0)),
        pl.BlockSpec((K, N), lambda b, m: (0, 0)),
        pl.BlockSpec((1, N), lambda b, m: (0, 0)),
        pl.BlockSpec((1, N), lambda b, m: (0, 0)),
    ]
    args = [x_flat, gate3, w, scale, bias]
    if has_res:
        in_specs.append(pl.BlockSpec((thw, N), lambda b, m: (b * nb + m, 0)))
        args.append(residual)
    kernel = functools.partial(_gated_project_kernel, residual=has_res)
    return pl.pallas_call(
        kernel,
        out_shape=jax.ShapeDtypeStruct((M, N), BF16),
        grid=(B, nb),
        in_specs=in_specs,
        out_specs=pl.BlockSpec((thw, N), lambda b, m: (b * nb + m, 0)),
        compiler_params=_cparams(("parallel", "parallel")),
    )(*args)


def _dw_kernel(p_ref, w_ref, scale_ref, bias_ref, o_ref):
    """Depthwise 3x3 + folded BN + swish.  Patches arrive as (T, tm, C) so each
    tap p_ref[t] is a full lane-dense (tm, C) tile (no mid-axis slicing)."""
    T = p_ref.shape[0]
    w = w_ref[...].astype(jnp.float32)                           # (T, C)
    acc = p_ref[0].astype(jnp.float32) * w[0:1, :]
    for t in range(1, T):
        acc = acc + p_ref[t].astype(jnp.float32) * w[t:t + 1, :]
    y = acc * scale_ref[...] + bias_ref[...]
    o_ref[...] = (y * jax.nn.sigmoid(y)).astype(o_ref.dtype)


def dwconv_bn_swish(x, w_tc, scale, bias, stride, pad):
    """x: (B, H, W, CP) bf16; w_tc: (9, CP) bf16 -> (B, Ho, Wo, CP) bf16."""
    B, H, W, C = x.shape
    xp = jnp.pad(x, ((0, 0), (pad, pad), (pad, pad), (0, 0)))
    Ho = (H + 2 * pad - 3) // stride + 1
    Wo = (W + 2 * pad - 3) // stride + 1
    taps = []
    for i in range(3):
        for j in range(3):
            taps.append(xp[:, i:i + (Ho - 1) * stride + 1:stride,
                            j:j + (Wo - 1) * stride + 1:stride, :])
    # TODO(synk): the 9x im2col HBM expansion could be removed by computing the
    # shifted windows inside the kernel from an NHWC VMEM tile (v5e bandwidth).
    p = jnp.stack(taps, axis=0).reshape(9, B * Ho * Wo, C)       # (T, M, C)
    M = B * Ho * Wo
    tm = _pick_tile(M, 256)
    y = pl.pallas_call(
        _dw_kernel,
        out_shape=jax.ShapeDtypeStruct((M, C), BF16),
        grid=(M // tm,),
        in_specs=[
            pl.BlockSpec((9, tm, C), lambda i: (0, i, 0)),
            pl.BlockSpec((9, C), lambda i: (0, 0)),
            pl.BlockSpec((1, C), lambda i: (0, 0)),
            pl.BlockSpec((1, C), lambda i: (0, 0)),
        ],
        out_specs=pl.BlockSpec((tm, C), lambda i: (i, 0)),
        compiler_params=_cparams(("parallel",)),
    )(p, w_tc, scale, bias)
    return y.reshape(B, Ho, Wo, C)


def _gap_kernel(x_ref, o_ref, *, inv_hw):
    @pl.when(pl.program_id(0) == 0)
    def _():
        o_ref[...] = jnp.zeros_like(o_ref)
    o_ref[...] += jnp.sum(x_ref[...].astype(jnp.float32), axis=1)

    @pl.when(pl.program_id(0) == pl.num_programs(0) - 1)
    def _():
        o_ref[...] = o_ref[...] * inv_hw


def global_avg_pool(x):  # x: (B, HW, C) bf16 -> (B, C) f32
    B, HW, C = x.shape
    thw = _pick_tile(HW, 512)
    kernel = functools.partial(_gap_kernel, inv_hw=1.0 / HW)
    return pl.pallas_call(
        kernel,
        out_shape=jax.ShapeDtypeStruct((B, C), F32),
        grid=(HW // thw,),
        in_specs=[pl.BlockSpec((B, thw, C), lambda h: (0, h, 0))],
        out_specs=pl.BlockSpec((B, C), lambda h: (0, 0)),
        compiler_params=_cparams(("arbitrary",)),
    )(x)


# ------------------------------ JAX glue ops --------------------------------

def _im2col(x, k, stride, pad):
    """x: (B, H, W, C) NHWC -> (B*Ho*Wo, k*k*C), Ho, Wo."""
    B, H, W, C = x.shape
    xp = jnp.pad(x, ((0, 0), (pad, pad), (pad, pad), (0, 0)))
    Ho = (H + 2 * pad - k) // stride + 1
    Wo = (W + 2 * pad - k) // stride + 1
    taps = []
    for i in range(k):
        for j in range(k):
            taps.append(xp[:, i:i + (Ho - 1) * stride + 1:stride,
                            j:j + (Wo - 1) * stride + 1:stride, :])
    p = jnp.stack(taps, axis=3)                                  # (B,Ho,Wo,k*k,C)
    return p.reshape(B * Ho * Wo, k * k * C), Ho, Wo


def se_gate(x, c_real, w1, b1, w2, b2):
    """Squeeze-excite gate (plain JAX: sub-vreg (B, C) tensors -- a Pallas call
    here is pure launch/DMA overhead per the perf review)."""
    pooled = jnp.mean(x[..., :c_real].astype(F32), axis=(1, 2))  # (B, c)
    h = pooled @ w1 + b1
    h = h * jax.nn.sigmoid(h)
    g = jax.nn.sigmoid(h @ w2 + b2)                              # (B, c)
    return jnp.pad(g, ((0, 0), (0, CP - c_real)))                # (B, CP) f32


def mbconv(x, p, stride, use_residual, c_mid):
    B, H, W, _ = x.shape
    inp = x
    if "expand" in p:
        w, s, b = p["expand"]
        x = matmul_bn_act(x.reshape(B * H * W, CP), w, s, b, act="swish")
        x = x.reshape(B, H, W, CP)
    w, s, b = p["dw"]
    x = dwconv_bn_swish(x, w, s, b, stride=stride, pad=1)
    B, Ho, Wo, _ = x.shape
    gate = se_gate(x, c_mid, *p["se"])                           # (B, CP) f32
    # Fused: SE gating * x -> 1x1 project conv -> folded BN -> (+ residual)
    w, s, b = p["project"]
    res = inp.reshape(B * Ho * Wo, CP) if use_residual else None
    y = gated_project(x.reshape(B * Ho * Wo, CP), gate, w, s, b,
                      hw=Ho * Wo, residual=res)
    return y.reshape(B, Ho, Wo, CP)


def efficientnet_model(x_nchw, kp):
    """Returns (output, features) matching the PyTorch module's forward."""
    x = jnp.transpose(x_nchw, (0, 2, 3, 1)).astype(BF16)         # NCHW -> NHWC
    B = x.shape[0]
    # Stem: 3x3 s2 conv + folded BN + swish (im2col + MXU matmul)
    a, Ho, Wo = _im2col(x, 3, 2, 1)                              # (M, 27)
    x = matmul_bn_act(a, kp["stem_w"], kp["stem_s"], kp["stem_b"], act="swish")
    x = x.reshape(B, Ho, Wo, CP)
    # MBConv block 1 (expand ratio 1, stride 1, residual)
    x = mbconv(x, kp["block1"], stride=1, use_residual=True, c_mid=16)
    # MBConv block 2 (expand, stride 2, no residual)
    x = mbconv(x, kp["block2"], stride=2, use_residual=False, c_mid=32)
    # Head 1x1 conv + folded BN + swish
    B, H, W, _ = x.shape
    x = matmul_bn_act(x.reshape(B * H * W, CP), kp["head_w"], kp["head_s"],
                      kp["head_b"], act="swish")
    # Global average pool -> features (drop padded lanes, they are exactly 0)
    feats = global_avg_pool(x.reshape(B, H * W, CP))             # (B, CP) f32
    features = feats[:, :FEATURE_DIM]
    # fc head: Dropout(0.2) is identity at inference; (B,64)@(64,2) is far below
    # a vreg, so it stays in plain JAX (perf feedback: avoid tiny pallas_calls).
    output = features @ kp["fc_w"] + kp["fc_b"]
    return output, features


# ------------------------------ parameters ----------------------------------

def init_params(key):
    ks = iter(jax.random.split(key, 40))

    def conv_w(kh, kw, cin, cout):
        return jax.random.normal(next(ks), (kh, kw, cin, cout), F32) / math.sqrt(kh * kw * cin)

    def mat_w(cin, cout):
        return jax.random.normal(next(ks), (cin, cout), F32) / math.sqrt(cin)

    def vec(c, scale=0.05):
        return scale * jax.random.normal(next(ks), (c,), F32)

    def bn(c):
        return 1.0 + vec(c), vec(c)

    def dw_w(c):
        return jax.random.normal(next(ks), (3, 3, c), F32) / 3.0

    def se(c, cr):
        return (mat_w(c, cr), vec(cr), mat_w(cr, c), vec(c))

    p = {}
    p["stem_w"] = conv_w(3, 3, 3, 16)
    p["stem_s"], p["stem_b"] = bn(16)
    p["block1"] = {
        "dw": (dw_w(16),) + bn(16),
        "se": se(16, 4),
        "project": (mat_w(16, 16),) + bn(16),
    }
    p["block2"] = {
        "expand": (mat_w(16, 32),) + bn(32),
        "dw": (dw_w(32),) + bn(32),
        "se": se(32, 8),
        "project": (mat_w(32, 24),) + bn(24),
    }
    p["head_w"] = mat_w(24, FEATURE_DIM)
    p["head_s"], p["head_b"] = bn(FEATURE_DIM)
    p["fc_w"] = mat_w(FEATURE_DIM, NUM_CLASSES)
    p["fc_b"] = vec(NUM_CLASSES)
    return p


def prepare_params(p):
    """Zero-pad every channel dim to CP=128 lanes once (outside the jitted
    forward) and cast matmul weights to bf16; BN scale/bias stay f32.
    Padded bias lanes are 0 so padded activation lanes stay exactly 0."""

    def pad_mat(w, pad_rows=False):
        K, N = w.shape
        Kp = CP if pad_rows else K
        out = jnp.zeros((Kp, CP), F32).at[:K, :N].set(w)
        return out.astype(BF16)

    def pad_bn(scale, bias):
        n = scale.shape[0]
        s = jnp.ones((1, CP), F32).at[0, :n].set(scale)
        b = jnp.zeros((1, CP), F32).at[0, :n].set(bias)
        return s, b

    def block(bp):
        out = {}
        if "expand" in bp:
            w, s, b = bp["expand"]
            out["expand"] = (pad_mat(w, pad_rows=True),) + pad_bn(s, b)
        w, s, b = bp["dw"]
        out["dw"] = (pad_mat(w.reshape(9, -1)),) + pad_bn(s, b)
        out["se"] = bp["se"]                      # tiny, stays f32 / unpadded
        w, s, b = bp["project"]
        out["project"] = (pad_mat(w, pad_rows=True),) + pad_bn(s, b)
        return out

    kp = {}
    kh, kw, cin, cout = p["stem_w"].shape
    kp["stem_w"] = pad_mat(p["stem_w"].reshape(kh * kw * cin, cout))  # (27,128)
    kp["stem_s"], kp["stem_b"] = pad_bn(p["stem_s"], p["stem_b"])
    kp["block1"] = block(p["block1"])
    kp["block2"] = block(p["block2"])
    kp["head_w"] = pad_mat(p["head_w"], pad_rows=True)
    kp["head_s"], kp["head_b"] = pad_bn(p["head_s"], p["head_b"])
    kp["fc_w"] = p["fc_w"]
    kp["fc_b"] = p["fc_b"]
    return kp


# --------------------------------- main --------------------------------------

if __name__ == "__main__":
    key = jax.random.PRNGKey(0)
    pkey, xkey = jax.random.split(key)
    params = init_params(pkey)
    kparams = prepare_params(params)
    x = jax.random.normal(xkey, (2, 3, 16, 16), F32)   # NCHW, like PyTorch input
    fwd = jax.jit(efficientnet_model)
    output, features = fwd(x, kparams)
    jax.block_until_ready((output, features))
    assert output.shape == (2, NUM_CLASSES)
    assert features.shape == (2, FEATURE_DIM)
    assert output.dtype == jnp.float32 and features.dtype == jnp.float32
    print("KERNEL_OK")
</pallas_src>

<mosaic_0001>
module attributes {stable_mosaic.version = 11 : i64} {
  func.func @_matmul_bn_act_kernel(%arg0: i32, %arg1: memref<128x27xbf16, #tpu.memory_space<vmem>>, %arg2: memref<27x128xbf16, #tpu.memory_space<vmem>>, %arg3: memref<1x128xf32, #tpu.memory_space<vmem>>, %arg4: memref<1x128xf32, #tpu.memory_space<vmem>>, %arg5: memref<128x128xbf16, #tpu.memory_space<vmem>>) attributes {dimension_semantics = [#tpu.dimension_semantics<parallel>], iteration_bounds = array<i64: 1>, scalar_prefetch = 0 : i64, scratch_operands = 0 : i64, tpu.core_type = #tpu.core_type<tc>, window_params = [{transform_indices = @transform_0, window_bounds = array<i64: 128, 27>}, {pipeline_mode = #tpu.pipeline_mode<synchronous>, transform_indices = @transform_1, window_bounds = array<i64: 27, 128>}, {pipeline_mode = #tpu.pipeline_mode<synchronous>, transform_indices = @transform_2, window_bounds = array<i64: 1, 128>}, {pipeline_mode = #tpu.pipeline_mode<synchronous>, transform_indices = @transform_3, window_bounds = array<i64: 1, 128>}, {transform_indices = @transform_4, window_bounds = array<i64: 128, 128>}]} {
    %c0 = arith.constant 0 : index
    %c0_0 = arith.constant 0 : index
    %0 = vector.load %arg1[%c0, %c0_0] : memref<128x27xbf16, #tpu.memory_space<vmem>>, vector<128x27xbf16>
    %c0_1 = arith.constant 0 : index
    %c0_2 = arith.constant 0 : index
    %1 = vector.load %arg2[%c0_1, %c0_2] : memref<27x128xbf16, #tpu.memory_space<vmem>>, vector<27x128xbf16>
    %cst = arith.constant dense<0.000000e+00> : vector<128x128xf32>
    %2 = tpu.matmul %0, %1, %cst {dimension_numbers = #tpu.dot_dimension_numbers<[1], [0], [0], [1], [0, 0, 1, 1], [], []>} : vector<128x27xbf16>, vector<27x128xbf16>, vector<128x128xf32> -> vector<128x128xf32>
    %c0_3 = arith.constant 0 : index
    %c0_4 = arith.constant 0 : index
    %3 = vector.load %arg3[%c0_3, %c0_4] : memref<1x128xf32, #tpu.memory_space<vmem>>, vector<1x128xf32>
    %4 = vector.broadcast %3 : vector<1x128xf32> to vector<128x128xf32>
    %5 = arith.mulf %2, %4 : vector<128x128xf32>
    %c0_5 = arith.constant 0 : index
    %c0_6 = arith.constant 0 : index
    %6 = vector.load %arg4[%c0_5, %c0_6] : memref<1x128xf32, #tpu.memory_space<vmem>>, vector<1x128xf32>
    %7 = vector.broadcast %6 : vector<1x128xf32> to vector<128x128xf32>
    %8 = arith.addf %5, %7 : vector<128x128xf32>
    %9 = arith.negf %8 : vector<128x128xf32>
    %10 = math.exp %9 : vector<128x128xf32>
    %cst_7 = arith.constant 1.000000e+00 : f32
    %11 = vector.broadcast %cst_7 : f32 to vector<128x128xf32>
    %12 = arith.addf %11, %10 : vector<128x128xf32>
    %13 = arith.divf %11, %12 : vector<128x128xf32>
    %14 = arith.mulf %8, %13 : vector<128x128xf32>
    %15 = arith.truncf %14 : vector<128x128xf32> to vector<128x128xbf16>
    %c0_8 = arith.constant 0 : index
    %c0_9 = arith.constant 0 : index
    %16 = vector.load %arg5[%c0_8, %c0_9] : memref<128x128xbf16, #tpu.memory_space<vmem>>, vector<128x128xbf16>
    tpu.vector_store %arg5[%c0_8, %c0_9], %15 {strides = array<i32>} : memref<128x128xbf16, #tpu.memory_space<vmem>>, vector<128x128xbf16>,
    return
  }
  func.func @transform_0(%arg0: i32) -> (i32, i32) {
    %c0_i32 = arith.constant 0 : i32
    %c0_i32_0 = arith.constant 0 : i32
    return %arg0, %c0_i32 : i32, i32
  }
  func.func @transform_1(%arg0: i32) -> (i32, i32) {
    %c0_i32 = arith.constant 0 : i32
    %c0_i32_0 = arith.constant 0 : i32
    %c0_i32_1 = arith.constant 0 : i32
    return %c0_i32, %c0_i32_0 : i32, i32
  }
  func.func @transform_2(%arg0: i32) -> (i32, i32) {
    %c0_i32 = arith.constant 0 : i32
    %c0_i32_0 = arith.constant 0 : i32
    %c0_i32_1 = arith.constant 0 : i32
    return %c0_i32, %c0_i32_0 : i32, i32
  }
  func.func @transform_3(%arg0: i32) -> (i32, i32) {
    %c0_i32 = arith.constant 0 : i32
    %c0_i32_0 = arith.constant 0 : i32
    %c0_i32_1 = arith.constant 0 : i32
    return %c0_i32, %c0_i32_0 : i32, i32
  }
  func.func @transform_4(%arg0: i32) -> (i32, i32) {
    %c0_i32 = arith.constant 0 : i32
    %c0_i32_0 = arith.constant 0 : i32
    return %arg0, %c0_i32 : i32, i32
  }
}

module attributes {stable_mosaic.version = 11 : i64} {
  func.func @_dw_kernel(%arg0: i32, %arg1: memref<9x128x128xbf16, #tpu.memory_space<vmem>>, %arg2: memref<9x128xbf16, #tpu.memory_space<vmem>>, %arg3: memref<1x128xf32, #tpu.memory_space<vmem>>, %arg4: memref<1x128xf32, #tpu.memory_space<vmem>>, %arg5: memref<128x128xbf16, #tpu.memory_space<vmem>>) attributes {dimension_semantics = [#tpu.dimension_semantics<parallel>], iteration_bounds = array<i64: 1>, scalar_prefetch = 0 : i64, scratch_operands = 0 : i64, tpu.core_type = #tpu.core_type<tc>, window_params = [{transform_indices = @transform_0, window_bounds = array<i64: 9, 128, 128>}, {pipeline_mode = #tpu.pipeline_mode<synchronous>, transform_indices = @transform_1, window_bounds = array<i64: 9, 128>}, {pipeline_mode = #tpu.pipeline_mode<synchronous>, transform_indices = @transform_2, window_bounds = array<i64: 1, 128>}, {pipeline_mode = #tpu.pipeline_mode<synchronous>, transform_indices = @transform_3, window_bounds = array<i64: 1, 128>}, {transform_indices = @transform_4, window_bounds = array<i64: 128, 128>}]} {
    %c0 = arith.constant 0 : index
    %c0_0 = arith.constant 0 : index
    %0 = vector.load %arg2[%c0, %c0_0] : memref<9x128xbf16, #tpu.memory_space<vmem>>, vector<9x128xbf16>
    %1 = arith.extf %0 : vector<9x128xbf16> to vector<9x128xf32>
    %c0_1 = arith.constant 0 : index
    %c0_2 = arith.constant 0 : index
    %c0_3 = arith.constant 0 : index
    %2 = vector.load %arg1[%c0_1, %c0_2, %c0_3] : memref<9x128x128xbf16, #tpu.memory_space<vmem>>, vector<1x128x128xbf16>
    %3 = vector.shape_cast %2 : vector<1x128x128xbf16> to vector<128x128xbf16>
    %4 = arith.extf %3 : vector<128x128xbf16> to vector<128x128xf32>
    %5 = vector.extract_strided_slice %1 {offsets = [0, 0], sizes = [1, 128], strides = [1, 1]} : vector<9x128xf32> to vector<1x128xf32>
    %6 = vector.broadcast %5 : vector<1x128xf32> to vector<128x128xf32>
    %7 = arith.mulf %4, %6 : vector<128x128xf32>
    %c1 = arith.constant 1 : index
    %c0_4 = arith.constant 0 : index
    %c0_5 = arith.constant 0 : index
    %8 = vector.load %arg1[%c1, %c0_4, %c0_5] : memref<9x128x128xbf16, #tpu.memory_space<vmem>>, vector<1x128x128xbf16>
    %9 = vector.shape_cast %8 : vector<1x128x128xbf16> to vector<128x128xbf16>
    %10 = arith.extf %9 : vector<128x128xbf16> to vector<128x128xf32>
    %11 = vector.extract_strided_slice %1 {offsets = [1, 0], sizes = [1, 128], strides = [1, 1]} : vector<9x128xf32> to vector<1x128xf32>
    %12 = vector.broadcast %11 : vector<1x128xf32> to vector<128x128xf32>
    %13 = arith.mulf %10, %12 : vector<128x128xf32>
    %14 = arith.addf %7, %13 : vector<128x128xf32>
    %c2 = arith.constant 2 : index
    %c0_6 = arith.constant 0 : index
    %c0_7 = arith.constant 0 : index
    %15 = vector.load %arg1[%c2, %c0_6, %c0_7] : memref<9x128x128xbf16, #tpu.memory_space<vmem>>, vector<1x128x128xbf16>
    %16 = vector.shape_cast %15 : vector<1x128x128xbf16> to vector<128x128xbf16>
    %17 = arith.extf %16 : vector<128x128xbf16> to vector<128x128xf32>
    %18 = vector.extract_strided_slice %1 {offsets = [2, 0], sizes = [1, 128], strides = [1, 1]} : vector<9x128xf32> to vector<1x128xf32>
    %19 = vector.broadcast %18 : vector<1x128xf32> to vector<128x128xf32>
    %20 = arith.mulf %17, %19 : vector<128x128xf32>
    %21 = arith.addf %14, %20 : vector<128x128xf32>
    %c3 = arith.constant 3 : index
    %c0_8 = arith.constant 0 : index
    %c0_9 = arith.constant 0 : index
    %22 = vector.load %arg1[%c3, %c0_8, %c0_9] : memref<9x128x128xbf16, #tpu.memory_space<vmem>>, vector<1x128x128xbf16>
    %23 = vector.shape_cast %22 : vector<1x128x128xbf16> to vector<128x128xbf16>
    %24 = arith.extf %23 : vector<128x128xbf16> to vector<128x128xf32>
    %25 = vector.extract_strided_slice %1 {offsets = [3, 0], sizes = [1, 128], strides = [1, 1]} : vector<9x128xf32> to vector<1x128xf32>
    %26 = vector.broadcast %25 : vector<1x128xf32> to vector<128x128xf32>
    %27 = arith.mulf %24, %26 : vector<128x128xf32>
    %28 = arith.addf %21, %27 : vector<128x128xf32>
    %c4 = arith.constant 4 : index
    %c0_10 = arith.constant 0 : index
    %c0_11 = arith.constant 0 : index
    %29 = vector.load %arg1[%c4, %c0_10, %c0_11] : memref<9x128x128xbf16, #tpu.memory_space<vmem>>, vector<1x128x128xbf16>
    %30 = vector.shape_cast %29 : vector<1x128x128xbf16> to vector<128x128xbf16>
    %31 = arith.extf %30 : vector<128x128xbf16> to vector<128x128xf32>
    %32 = vector.extract_strided_slice %1 {offsets = [4, 0], sizes = [1, 128], strides = [1, 1]} : vector<9x128xf32> to vector<1x128xf32>
    %33 = vector.broadcast %32 : vector<1x128xf32> to vector<128x128xf32>
    %34 = arith.mulf %31, %33 : vector<128x128xf32>
    %35 = arith.addf %28, %34 : vector<128x128xf32>
    %c5 = arith.constant 5 : index
    %c0_12 = arith.constant 0 : index
    %c0_13 = arith.constant 0 : index
    %36 = vector.load %arg1[%c5, %c0_12, %c0_13] : memref<9x128x128xbf16, #tpu.memory_space<vmem>>, vector<1x128x128xbf16>
    %37 = vector.shape_cast %36 : vector<1x128x128xbf16> to vector<128x128xbf16>
    %38 = arith.extf %37 : vector<128x128xbf16> to vector<128x128xf32>
    %39 = vector.extract_strided_slice %1 {offsets = [5, 0], sizes = [1, 128], strides = [1, 1]} : vector<9x128xf32> to vector<1x128xf32>
    %40 = vector.broadcast %39 : vector<1x128xf32> to vector<128x128xf32>
    %41 = arith.mulf %38, %40 : vector<128x128xf32>
    %42 = arith.addf %35, %41 : vector<128x128xf32>
    %c6 = arith.constant 6 : index
    %c0_14 = arith.constant 0 : index
    %c0_15 = arith.constant 0 : index
    %43 = vector.load %arg1[%c6, %c0_14, %c0_15] : memref<9x128x128xbf16, #tpu.memory_space<vmem>>, vector<1x128x128xbf16>
    %44 = vector.shape_cast %43 : vector<1x128x128xbf16> to vector<128x128xbf16>
    %45 = arith.extf %44 : vector<128x128xbf16> to vector<128x128xf32>
    %46 = vector.extract_strided_slice %1 {offsets = [6, 0], sizes = [1, 128], strides = [1, 1]} : vector<9x128xf32> to vector<1x128xf32>
    %47 = vector.broadcast %46 : vector<1x128xf32> to vector<128x128xf32>
    %48 = arith.mulf %45, %47 : vector<128x128xf32>
    %49 = arith.addf %42, %48 : vector<128x128xf32>
    %c7 = arith.constant 7 : index
    %c0_16 = arith.constant 0 : index
    %c0_17 = arith.constant 0 : index
    %50 = vector.load %arg1[%c7, %c0_16, %c0_17] : memref<9x128x128xbf16, #tpu.memory_space<vmem>>, vector<1x128x128xbf16>
    %51 = vector.shape_cast %50 : vector<1x128x128xbf16> to vector<128x128xbf16>
    %52 = arith.extf %51 : vector<128x128xbf16> to vector<128x128xf32>
    %53 = vector.extract_strided_slice %1 {offsets = [7, 0], sizes = [1, 128], strides = [1, 1]} : vector<9x128xf32> to vector<1x128xf32>
    %54 = vector.broadcast %53 : vector<1x128xf32> to vector<128x128xf32>
    %55 = arith.mulf %52, %54 : vector<128x128xf32>
    %56 = arith.addf %49, %55 : vector<128x128xf32>
    %c8 = arith.constant 8 : index
    %c0_18 = arith.constant 0 : index
    %c0_19 = arith.constant 0 : index
    %57 = vector.load %arg1[%c8, %c0_18, %c0_19] : memref<9x128x128xbf16, #tpu.memory_space<vmem>>, vector<1x128x128xbf16>
    %58 = vector.shape_cast %57 : vector<1x128x128xbf16> to vector<128x128xbf16>
    %59 = arith.extf %58 : vector<128x128xbf16> to vector<128x128xf32>
    %60 = vector.extract_strided_slice %1 {offsets = [8, 0], sizes = [1, 128], strides = [1, 1]} : vector<9x128xf32> to vector<1x128xf32>
    %61 = vector.broadcast %60 : vector<1x128xf32> to vector<128x128xf32>
    %62 = arith.mulf %59, %61 : vector<128x128xf32>
    %63 = arith.addf %56, %62 : vector<128x128xf32>
    %c0_20 = arith.constant 0 : index
    %c0_21 = arith.constant 0 : index
    %64 = vector.load %arg3[%c0_20, %c0_21] : memref<1x128xf32, #tpu.memory_space<vmem>>, vector<1x128xf32>
    %65 = vector.broadcast %64 : vector<1x128xf32> to vector<128x128xf32>
    %66 = arith.mulf %63, %65 : vector<128x128xf32>
    %c0_22 = arith.constant 0 : index
    %c0_23 = arith.constant 0 : index
    %67 = vector.load %arg4[%c0_22, %c0_23] : memref<1x128xf32, #tpu.memory_space<vmem>>, vector<1x128xf32>
    %68 = vector.broadcast %67 : vector<1x128xf32> to vector<128x128xf32>
    %69 = arith.addf %66, %68 : vector<128x128xf32>
    %70 = arith.negf %69 : vector<128x128xf32>
    %71 = math.exp %70 : vector<128x128xf32>
    %cst = arith.constant 1.000000e+00 : f32
    %72 = vector.broadcast %cst : f32 to vector<128x128xf32>
    %73 = arith.addf %72, %71 : vector<128x128xf32>
    %74 = arith.divf %72, %73 : vector<128x128xf32>
    %75 = arith.mulf %69, %74 : vector<128x128xf32>
    %76 = arith.truncf %75 : vector<128x128xf32> to vector<128x128xbf16>
    %c0_24 = arith.constant 0 : index
    %c0_25 = arith.constant 0 : index
    %77 = vector.load %arg5[%c0_24, %c0_25] : memref<128x128xbf16, #tpu.memory_space<vmem>>, vector<128x128xbf16>
    tpu.vector_store %arg5[%c0_24, %c0_25], %76 {strides = array<i32>} : memref<128x128xbf16, #tpu.memory_space<vmem>>, vector<128x128xbf16>,
    return
  }
  func.func @transform_0(%arg0: i32) -> (i32, i32, i32) {
    %c0_i32 = arith.constant 0 : i32
    %c0_i32_0 = arith.constant 0 : i32
    %c0_i32_1 = arith.constant 0 : i32
    return %c0_i32, %arg0, %c0_i32_0 : i32, i32, i32
  }
  func.func @transform_1(%arg0: i32) -> (i32, i32) {
    %c0_i32 = arith.constant 0 : i32
    %c0_i32_0 = arith.constant 0 : i32
    %c0_i32_1 = arith.constant 0 : i32
    return %c0_i32, %c0_i32_0 : i32, i32
  }
  func.func @transform_2(%arg0: i32) -> (i32, i32) {
    %c0_i32 = arith.constant 0 : i32
    %c0_i32_0 = arith.constant 0 : i32
    %c0_i32_1 = arith.constant 0 : i32
    return %c0_i32, %c0_i32_0 : i32, i32
  }
  func.func @transform_3(%arg0: i32) -> (i32, i32) {
    %c0_i32 = arith.constant 0 : i32
    %c0_i32_0 = arith.constant 0 : i32
    %c0_i32_1 = arith.constant 0 : i32
    return %c0_i32, %c0_i32_0 : i32, i32
  }
  func.func @transform_4(%arg0: i32) -> (i32, i32) {
    %c0_i32 = arith.constant 0 : i32
    %c0_i32_0 = arith.constant 0 : i32
    return %arg0, %c0_i32 : i32, i32
  }
}

module attributes {stable_mosaic.version = 11 : i64} {
  func.func @_gated_project_kernel(%arg0: i32, %arg1: i32, %arg2: memref<64x128xbf16, #tpu.memory_space<vmem>>, %arg3: memref<1x1x128xf32, #tpu.memory_space<vmem>>, %arg4: memref<128x128xbf16, #tpu.memory_space<vmem>>, %arg5: memref<1x128xf32, #tpu.memory_space<vmem>>, %arg6: memref<1x128xf32, #tpu.memory_space<vmem>>, %arg7: memref<64x128xbf16, #tpu.memory_space<vmem>>, %arg8: memref<64x128xbf16, #tpu.memory_space<vmem>>) attributes {dimension_semantics = [#tpu.dimension_semantics<parallel>, #tpu.dimension_semantics<parallel>], iteration_bounds = array<i64: 2, 1>, scalar_prefetch = 0 : i64, scratch_operands = 0 : i64, tpu.core_type = #tpu.core_type<tc>, window_params = [{transform_indices = @transform_0, window_bounds = array<i64: 64, 128>}, {transform_indices = @transform_1, window_bounds = array<i64: 1, 1, 128>}, {pipeline_mode = #tpu.pipeline_mode<synchronous>, transform_indices = @transform_2, window_bounds = array<i64: 128, 128>}, {pipeline_mode = #tpu.pipeline_mode<synchronous>, transform_indices = @transform_3, window_bounds = array<i64: 1, 128>}, {pipeline_mode = #tpu.pipeline_mode<synchronous>, transform_indices = @transform_4, window_bounds = array<i64: 1, 128>}, {transform_indices = @transform_5, window_bounds = array<i64: 64, 128>}, {transform_indices = @transform_6, window_bounds = array<i64: 64, 128>}]} {
    %c0 = arith.constant 0 : index
    %c0_0 = arith.constant 0 : index
    %c0_1 = arith.constant 0 : index
    %0 = vector.load %arg3[%c0, %c0_0, %c0_1] : memref<1x1x128xf32, #tpu.memory_space<vmem>>, vector<1x1x128xf32>
    %1 = vector.shape_cast %0 : vector<1x1x128xf32> to vector<1x128xf32>
    %c0_2 = arith.constant 0 : index
    %c0_3 = arith.constant 0 : index
    %2 = vector.load %arg2[%c0_2, %c0_3] : memref<64x128xbf16, #tpu.memory_space<vmem>>, vector<64x128xbf16>
    %3 = arith.extf %2 : vector<64x128xbf16> to vector<64x128xf32>
    %4 = vector.broadcast %1 : vector<1x128xf32> to vector<64x128xf32>
    %5 = arith.mulf %3, %4 : vector<64x128xf32>
    %6 = arith.truncf %5 : vector<64x128xf32> to vector<64x128xbf16>
    %c0_4 = arith.constant 0 : index
    %c0_5 = arith.constant 0 : index
    %7 = vector.load %arg4[%c0_4, %c0_5] : memref<128x128xbf16, #tpu.memory_space<vmem>>, vector<128x128xbf16>
    %cst = arith.constant dense<0.000000e+00> : vector<64x128xf32>
    %8 = tpu.matmul %6, %7, %cst {dimension_numbers = #tpu.dot_dimension_numbers<[1], [0], [0], [1], [0, 0, 1, 1], [], []>} : vector<64x128xbf16>, vector<128x128xbf16>, vector<64x128xf32> -> vector<64x128xf32>
    %c0_6 = arith.constant 0 : index
    %c0_7 = arith.constant 0 : index
    %9 = vector.load %arg5[%c0_6, %c0_7] : memref<1x128xf32, #tpu.memory_space<vmem>>, vector<1x128xf32>
    %10 = vector.broadcast %9 : vector<1x128xf32> to vector<64x128xf32>
    %11 = arith.mulf %8, %10 : vector<64x128xf32>
    %c0_8 = arith.constant 0 : index
    %c0_9 = arith.constant 0 : index
    %12 = vector.load %arg6[%c0_8, %c0_9] : memref<1x128xf32, #tpu.memory_space<vmem>>, vector<1x128xf32>
    %13 = vector.broadcast %12 : vector<1x128xf32> to vector<64x128xf32>
    %14 = arith.addf %11, %13 : vector<64x128xf32>
    %c0_10 = arith.constant 0 : index
    %c0_11 = arith.constant 0 : index
    %15 = vector.load %arg7[%c0_10, %c0_11] : memref<64x128xbf16, #tpu.memory_space<vmem>>, vector<64x128xbf16>
    %16 = arith.extf %15 : vector<64x128xbf16> to vector<64x128xf32>
    %17 = arith.addf %14, %16 : vector<64x128xf32>
    %18 = arith.truncf %17 : vector<64x128xf32> to vector<64x128xbf16>
    %c0_12 = arith.constant 0 : index
    %c0_13 = arith.constant 0 : index
    %19 = vector.load %arg8[%c0_12, %c0_13] : memref<64x128xbf16, #tpu.memory_space<vmem>>, vector<64x128xbf16>
    tpu.vector_store %arg8[%c0_12, %c0_13], %18 {strides = array<i32>} : memref<64x128xbf16, #tpu.memory_space<vmem>>, vector<64x128xbf16>,
    return
  }
  func.func @transform_0(%arg0: i32, %arg1: i32) -> (i32, i32) {
    %c1_i32 = arith.constant 1 : i32
    %0 = arith.muli %arg0, %c1_i32 : i32
    %1 = arith.addi %0, %arg1 : i32
    %c0_i32 = arith.constant 0 : i32
    %c0_i32_0 = arith.constant 0 : i32
    return %1, %c0_i32 : i32, i32
  }
  func.func @transform_1(%arg0: i32, %arg1: i32) -> (i32, i32, i32) {
    %c0_i32 = arith.constant 0 : i32
    %c0_i32_0 = arith.constant 0 : i32
    %c0_i32_1 = arith.constant 0 : i32
    return %arg0, %c0_i32, %c0_i32_0 : i32, i32, i32
  }
  func.func @transform_2(%arg0: i32, %arg1: i32) -> (i32, i32) {
    %c0_i32 = arith.constant 0 : i32
    %c0_i32_0 = arith.constant 0 : i32
    %c0_i32_1 = arith.constant 0 : i32
    return %c0_i32, %c0_i32_0 : i32, i32
  }
  func.func @transform_3(%arg0: i32, %arg1: i32) -> (i32, i32) {
    %c0_i32 = arith.constant 0 : i32
    %c0_i32_0 = arith.constant 0 : i32
    %c0_i32_1 = arith.constant 0 : i32
    return %c0_i32, %c0_i32_0 : i32, i32
  }
  func.func @transform_4(%arg0: i32, %arg1: i32) -> (i32, i32) {
    %c0_i32 = arith.constant 0 : i32
    %c0_i32_0 = arith.constant 0 : i32
    %c0_i32_1 = arith.constant 0 : i32
    return %c0_i32, %c0_i32_0 : i32, i32
  }
  func.func @transform_5(%arg0: i32, %arg1: i32) -> (i32, i32) {
    %c1_i32 = arith.constant 1 : i32
    %0 = arith.muli %arg0, %c1_i32 : i32
    %1 = arith.addi %0, %arg1 : i32
    %c0_i32 = arith.constant 0 : i32
    %c0_i32_0 = arith.constant 0 : i32
    return %1, %c0_i32 : i32, i32
  }
  func.func @transform_6(%arg0: i32, %arg1: i32) -> (i32, i32) {
    %c1_i32 = arith.constant 1 : i32
    %0 = arith.muli %arg0, %c1_i32 : i32
    %1 = arith.addi %0, %arg1 : i32
    %c0_i32 = arith.constant 0 : i32
    %c0_i32_0 = arith.constant 0 : i32
    return %1, %c0_i32 : i32, i32
  }
}

module attributes {stable_mosaic.version = 11 : i64} {
  func.func @_matmul_bn_act_kernel(%arg0: i32, %arg1: memref<128x128xbf16, #tpu.memory_space<vmem>>, %arg2: memref<128x128xbf16, #tpu.memory_space<vmem>>, %arg3: memref<1x128xf32, #tpu.memory_space<vmem>>, %arg4: memref<1x128xf32, #tpu.memory_space<vmem>>, %arg5: memref<128x128xbf16, #tpu.memory_space<vmem>>) attributes {dimension_semantics = [#tpu.dimension_semantics<parallel>], iteration_bounds = array<i64: 1>, scalar_prefetch = 0 : i64, scratch_operands = 0 : i64, tpu.core_type = #tpu.core_type<tc>, window_params = [{transform_indices = @transform_0, window_bounds = array<i64: 128, 128>}, {pipeline_mode = #tpu.pipeline_mode<synchronous>, transform_indices = @transform_1, window_bounds = array<i64: 128, 128>}, {pipeline_mode = #tpu.pipeline_mode<synchronous>, transform_indices = @transform_2, window_bounds = array<i64: 1, 128>}, {pipeline_mode = #tpu.pipeline_mode<synchronous>, transform_indices = @transform_3, window_bounds = array<i64: 1, 128>}, {transform_indices = @transform_4, window_bounds = array<i64: 128, 128>}]} {
    %c0 = arith.constant 0 : index
    %c0_0 = arith.constant 0 : index
    %0 = vector.load %arg1[%c0, %c0_0] : memref<128x128xbf16, #tpu.memory_space<vmem>>, vector<128x128xbf16>
    %c0_1 = arith.constant 0 : index
    %c0_2 = arith.constant 0 : index
    %1 = vector.load %arg2[%c0_1, %c0_2] : memref<128x128xbf16, #tpu.memory_space<vmem>>, vector<128x128xbf16>
    %cst = arith.constant dense<0.000000e+00> : vector<128x128xf32>
    %2 = tpu.matmul %0, %1, %cst {dimension_numbers = #tpu.dot_dimension_numbers<[1], [0], [0], [1], [0, 0, 1, 1], [], []>} : vector<128x128xbf16>, vector<128x128xbf16>, vector<128x128xf32> -> vector<128x128xf32>
    %c0_3 = arith.constant 0 : index
    %c0_4 = arith.constant 0 : index
    %3 = vector.load %arg3[%c0_3, %c0_4] : memref<1x128xf32, #tpu.memory_space<vmem>>, vector<1x128xf32>
    %4 = vector.broadcast %3 : vector<1x128xf32> to vector<128x128xf32>
    %5 = arith.mulf %2, %4 : vector<128x128xf32>
    %c0_5 = arith.constant 0 : index
    %c0_6 = arith.constant 0 : index
    %6 = vector.load %arg4[%c0_5, %c0_6] : memref<1x128xf32, #tpu.memory_space<vmem>>, vector<1x128xf32>
    %7 = vector.broadcast %6 : vector<1x128xf32> to vector<128x128xf32>
    %8 = arith.addf %5, %7 : vector<128x128xf32>
    %9 = arith.negf %8 : vector<128x128xf32>
    %10 = math.exp %9 : vector<128x128xf32>
    %cst_7 = arith.constant 1.000000e+00 : f32
    %11 = vector.broadcast %cst_7 : f32 to vector<128x128xf32>
    %12 = arith.addf %11, %10 : vector<128x128xf32>
    %13 = arith.divf %11, %12 : vector<128x128xf32>
    %14 = arith.mulf %8, %13 : vector<128x128xf32>
    %15 = arith.truncf %14 : vector<128x128xf32> to vector<128x128xbf16>
    %c0_8 = arith.constant 0 : index
    %c0_9 = arith.constant 0 : index
    %16 = vector.load %arg5[%c0_8, %c0_9] : memref<128x128xbf16, #tpu.memory_space<vmem>>, vector<128x128xbf16>
    tpu.vector_store %arg5[%c0_8, %c0_9], %15 {strides = array<i32>} : memref<128x128xbf16, #tpu.memory_space<vmem>>, vector<128x128xbf16>,
    return
  }
  func.func @transform_0(%arg0: i32) -> (i32, i32) {
    %c0_i32 = arith.constant 0 : i32
    %c0_i32_0 = arith.constant 0 : i32
    return %arg0, %c0_i32 : i32, i32
  }
  func.func @transform_1(%arg0: i32) -> (i32, i32) {
    %c0_i32 = arith.constant 0 : i32
    %c0_i32_0 = arith.constant 0 : i32
    %c0_i32_1 = arith.constant 0 : i32
    return %c0_i32, %c0_i32_0 : i32, i32
  }
  func.func @transform_2(%arg0: i32) -> (i32, i32) {
    %c0_i32 = arith.constant 0 : i32
    %c0_i32_0 = arith.constant 0 : i32
    %c0_i32_1 = arith.constant 0 : i32
    return %c0_i32, %c0_i32_0 : i32, i32
  }
  func.func @transform_3(%arg0: i32) -> (i32, i32) {
    %c0_i32 = arith.constant 0 : i32
    %c0_i32_0 = arith.constant 0 : i32
    %c0_i32_1 = arith.constant 0 : i32
    return %c0_i32, %c0_i32_0 : i32, i32
  }
  func.func @transform_4(%arg0: i32) -> (i32, i32) {
    %c0_i32 = arith.constant 0 : i32
    %c0_i32_0 = arith.constant 0 : i32
    return %arg0, %c0_i32 : i32, i32
  }
}

module attributes {stable_mosaic.version = 11 : i64} {
  func.func @_dw_kernel(%arg0: i32, %arg1: memref<9x32x128xbf16, #tpu.memory_space<vmem>>, %arg2: memref<9x128xbf16, #tpu.memory_space<vmem>>, %arg3: memref<1x128xf32, #tpu.memory_space<vmem>>, %arg4: memref<1x128xf32, #tpu.memory_space<vmem>>, %arg5: memref<32x128xbf16, #tpu.memory_space<vmem>>) attributes {dimension_semantics = [#tpu.dimension_semantics<parallel>], iteration_bounds = array<i64: 1>, scalar_prefetch = 0 : i64, scratch_operands = 0 : i64, tpu.core_type = #tpu.core_type<tc>, window_params = [{transform_indices = @transform_0, window_bounds = array<i64: 9, 32, 128>}, {pipeline_mode = #tpu.pipeline_mode<synchronous>, transform_indices = @transform_1, window_bounds = array<i64: 9, 128>}, {pipeline_mode = #tpu.pipeline_mode<synchronous>, transform_indices = @transform_2, window_bounds = array<i64: 1, 128>}, {pipeline_mode = #tpu.pipeline_mode<synchronous>, transform_indices = @transform_3, window_bounds = array<i64: 1, 128>}, {transform_indices = @transform_4, window_bounds = array<i64: 32, 128>}]} {
    %c0 = arith.constant 0 : index
    %c0_0 = arith.constant 0 : index
    %0 = vector.load %arg2[%c0, %c0_0] : memref<9x128xbf16, #tpu.memory_space<vmem>>, vector<9x128xbf16>
    %1 = arith.extf %0 : vector<9x128xbf16> to vector<9x128xf32>
    %c0_1 = arith.constant 0 : index
    %c0_2 = arith.constant 0 : index
    %c0_3 = arith.constant 0 : index
    %2 = vector.load %arg1[%c0_1, %c0_2, %c0_3] : memref<9x32x128xbf16, #tpu.memory_space<vmem>>, vector<1x32x128xbf16>
    %3 = vector.shape_cast %2 : vector<1x32x128xbf16> to vector<32x128xbf16>
    %4 = arith.extf %3 : vector<32x128xbf16> to vector<32x128xf32>
    %5 = vector.extract_strided_slice %1 {offsets = [0, 0], sizes = [1, 128], strides = [1, 1]} : vector<9x128xf32> to vector<1x128xf32>
    %6 = vector.broadcast %5 : vector<1x128xf32> to vector<32x128xf32>
    %7 = arith.mulf %4, %6 : vector<32x128xf32>
    %c1 = arith.constant 1 : index
    %c0_4 = arith.constant 0 : index
    %c0_5 = arith.constant 0 : index
    %8 = vector.load %arg1[%c1, %c0_4, %c0_5] : memref<9x32x128xbf16, #tpu.memory_space<vmem>>, vector<1x32x128xbf16>
    %9 = vector.shape_cast %8 : vector<1x32x128xbf16> to vector<32x128xbf16>
    %10 = arith.extf %9 : vector<32x128xbf16> to vector<32x128xf32>
    %11 = vector.extract_strided_slice %1 {offsets = [1, 0], sizes = [1, 128], strides = [1, 1]} : vector<9x128xf32> to vector<1x128xf32>
    %12 = vector.broadcast %11 : vector<1x128xf32> to vector<32x128xf32>
    %13 = arith.mulf %10, %12 : vector<32x128xf32>
    %14 = arith.addf %7, %13 : vector<32x128xf32>
    %c2 = arith.constant 2 : index
    %c0_6 = arith.constant 0 : index
    %c0_7 = arith.constant 0 : index
    %15 = vector.load %arg1[%c2, %c0_6, %c0_7] : memref<9x32x128xbf16, #tpu.memory_space<vmem>>, vector<1x32x128xbf16>
    %16 = vector.shape_cast %15 : vector<1x32x128xbf16> to vector<32x128xbf16>
    %17 = arith.extf %16 : vector<32x128xbf16> to vector<32x128xf32>
    %18 = vector.extract_strided_slice %1 {offsets = [2, 0], sizes = [1, 128], strides = [1, 1]} : vector<9x128xf32> to vector<1x128xf32>
    %19 = vector.broadcast %18 : vector<1x128xf32> to vector<32x128xf32>
    %20 = arith.mulf %17, %19 : vector<32x128xf32>
    %21 = arith.addf %14, %20 : vector<32x128xf32>
    %c3 = arith.constant 3 : index
    %c0_8 = arith.constant 0 : index
    %c0_9 = arith.constant 0 : index
    %22 = vector.load %arg1[%c3, %c0_8, %c0_9] : memref<9x32x128xbf16, #tpu.memory_space<vmem>>, vector<1x32x128xbf16>
    %23 = vector.shape_cast %22 : vector<1x32x128xbf16> to vector<32x128xbf16>
    %24 = arith.extf %23 : vector<32x128xbf16> to vector<32x128xf32>
    %25 = vector.extract_strided_slice %1 {offsets = [3, 0], sizes = [1, 128], strides = [1, 1]} : vector<9x128xf32> to vector<1x128xf32>
    %26 = vector.broadcast %25 : vector<1x128xf32> to vector<32x128xf32>
    %27 = arith.mulf %24, %26 : vector<32x128xf32>
    %28 = arith.addf %21, %27 : vector<32x128xf32>
    %c4 = arith.constant 4 : index
    %c0_10 = arith.constant 0 : index
    %c0_11 = arith.constant 0 : index
    %29 = vector.load %arg1[%c4, %c0_10, %c0_11] : memref<9x32x128xbf16, #tpu.memory_space<vmem>>, vector<1x32x128xbf16>
    %30 = vector.shape_cast %29 : vector<1x32x128xbf16> to vector<32x128xbf16>
    %31 = arith.extf %30 : vector<32x128xbf16> to vector<32x128xf32>
    %32 = vector.extract_strided_slice %1 {offsets = [4, 0], sizes = [1, 128], strides = [1, 1]} : vector<9x128xf32> to vector<1x128xf32>
    %33 = vector.broadcast %32 : vector<1x128xf32> to vector<32x128xf32>
    %34 = arith.mulf %31, %33 : vector<32x128xf32>
    %35 = arith.addf %28, %34 : vector<32x128xf32>
    %c5 = arith.constant 5 : index
    %c0_12 = arith.constant 0 : index
    %c0_13 = arith.constant 0 : index
    %36 = vector.load %arg1[%c5, %c0_12, %c0_13] : memref<9x32x128xbf16, #tpu.memory_space<vmem>>, vector<1x32x128xbf16>
    %37 = vector.shape_cast %36 : vector<1x32x128xbf16> to vector<32x128xbf16>
    %38 = arith.extf %37 : vector<32x128xbf16> to vector<32x128xf32>
    %39 = vector.extract_strided_slice %1 {offsets = [5, 0], sizes = [1, 128], strides = [1, 1]} : vector<9x128xf32> to vector<1x128xf32>
    %40 = vector.broadcast %39 : vector<1x128xf32> to vector<32x128xf32>
    %41 = arith.mulf %38, %40 : vector<32x128xf32>
    %42 = arith.addf %35, %41 : vector<32x128xf32>
    %c6 = arith.constant 6 : index
    %c0_14 = arith.constant 0 : index
    %c0_15 = arith.constant 0 : index
    %43 = vector.load %arg1[%c6, %c0_14, %c0_15] : memref<9x32x128xbf16, #tpu.memory_space<vmem>>, vector<1x32x128xbf16>
    %44 = vector.shape_cast %43 : vector<1x32x128xbf16> to vector<32x128xbf16>
    %45 = arith.extf %44 : vector<32x128xbf16> to vector<32x128xf32>
    %46 = vector.extract_strided_slice %1 {offsets = [6, 0], sizes = [1, 128], strides = [1, 1]} : vector<9x128xf32> to vector<1x128xf32>
    %47 = vector.broadcast %46 : vector<1x128xf32> to vector<32x128xf32>
    %48 = arith.mulf %45, %47 : vector<32x128xf32>
    %49 = arith.addf %42, %48 : vector<32x128xf32>
    %c7 = arith.constant 7 : index
    %c0_16 = arith.constant 0 : index
    %c0_17 = arith.constant 0 : index
    %50 = vector.load %arg1[%c7, %c0_16, %c0_17] : memref<9x32x128xbf16, #tpu.memory_space<vmem>>, vector<1x32x128xbf16>
    %51 = vector.shape_cast %50 : vector<1x32x128xbf16> to vector<32x128xbf16>
    %52 = arith.extf %51 : vector<32x128xbf16> to vector<32x128xf32>
    %53 = vector.extract_strided_slice %1 {offsets = [7, 0], sizes = [1, 128], strides = [1, 1]} : vector<9x128xf32> to vector<1x128xf32>
    %54 = vector.broadcast %53 : vector<1x128xf32> to vector<32x128xf32>
    %55 = arith.mulf %52, %54 : vector<32x128xf32>
    %56 = arith.addf %49, %55 : vector<32x128xf32>
    %c8 = arith.constant 8 : index
    %c0_18 = arith.constant 0 : index
    %c0_19 = arith.constant 0 : index
    %57 = vector.load %arg1[%c8, %c0_18, %c0_19] : memref<9x32x128xbf16, #tpu.memory_space<vmem>>, vector<1x32x128xbf16>
    %58 = vector.shape_cast %57 : vector<1x32x128xbf16> to vector<32x128xbf16>
    %59 = arith.extf %58 : vector<32x128xbf16> to vector<32x128xf32>
    %60 = vector.extract_strided_slice %1 {offsets = [8, 0], sizes = [1, 128], strides = [1, 1]} : vector<9x128xf32> to vector<1x128xf32>
    %61 = vector.broadcast %60 : vector<1x128xf32> to vector<32x128xf32>
    %62 = arith.mulf %59, %61 : vector<32x128xf32>
    %63 = arith.addf %56, %62 : vector<32x128xf32>
    %c0_20 = arith.constant 0 : index
    %c0_21 = arith.constant 0 : index
    %64 = vector.load %arg3[%c0_20, %c0_21] : memref<1x128xf32, #tpu.memory_space<vmem>>, vector<1x128xf32>
    %65 = vector.broadcast %64 : vector<1x128xf32> to vector<32x128xf32>
    %66 = arith.mulf %63, %65 : vector<32x128xf32>
    %c0_22 = arith.constant 0 : index
    %c0_23 = arith.constant 0 : index
    %67 = vector.load %arg4[%c0_22, %c0_23] : memref<1x128xf32, #tpu.memory_space<vmem>>, vector<1x128xf32>
    %68 = vector.broadcast %67 : vector<1x128xf32> to vector<32x128xf32>
    %69 = arith.addf %66, %68 : vector<32x128xf32>
    %70 = arith.negf %69 : vector<32x128xf32>
    %71 = math.exp %70 : vector<32x128xf32>
    %cst = arith.constant 1.000000e+00 : f32
    %72 = vector.broadcast %cst : f32 to vector<32x128xf32>
    %73 = arith.addf %72, %71 : vector<32x128xf32>
    %74 = arith.divf %72, %73 : vector<32x128xf32>
    %75 = arith.mulf %69, %74 : vector<32x128xf32>
    %76 = arith.truncf %75 : vector<32x128xf32> to vector<32x128xbf16>
    %c0_24 = arith.constant 0 : index
    %c0_25 = arith.constant 0 : index
    %77 = vector.load %arg5[%c0_24, %c0_25] : memref<32x128xbf16, #tpu.memory_space<vmem>>, vector<32x128xbf16>
    tpu.vector_store %arg5[%c0_24, %c0_25], %76 {strides = array<i32>} : memref<32x128xbf16, #tpu.memory_space<vmem>>, vector<32x128xbf16>,
    return
  }
  func.func @transform_0(%arg0: i32) -> (i32, i32, i32) {
    %c0_i32 = arith.constant 0 : i32
    %c0_i32_0 = arith.constant 0 : i32
    %c0_i32_1 = arith.constant 0 : i32
    return %c0_i32, %arg0, %c0_i32_0 : i32, i32, i32
  }
  func.func @transform_1(%arg0: i32) -> (i32, i32) {
    %c0_i32 = arith.constant 0 : i32
    %c0_i32_0 = arith.constant 0 : i32
    %c0_i32_1 = arith.constant 0 : i32
    return %c0_i32, %c0_i32_0 : i32, i32
  }
  func.func @transform_2(%arg0: i32) -> (i32, i32) {
    %c0_i32 = arith.constant 0 : i32
    %c0_i32_0 = arith.constant 0 : i32
    %c0_i32_1 = arith.constant 0 : i32
    return %c0_i32, %c0_i32_0 : i32, i32
  }
  func.func @transform_3(%arg0: i32) -> (i32, i32) {
    %c0_i32 = arith.constant 0 : i32
    %c0_i32_0 = arith.constant 0 : i32
    %c0_i32_1 = arith.constant 0 : i32
    return %c0_i32, %c0_i32_0 : i32, i32
  }
  func.func @transform_4(%arg0: i32) -> (i32, i32) {
    %c0_i32 = arith.constant 0 : i32
    %c0_i32_0 = arith.constant 0 : i32
    return %arg0, %c0_i32 : i32, i32
  }
}

module attributes {stable_mosaic.version = 11 : i64} {
  func.func @_gated_project_kernel(%arg0: i32, %arg1: i32, %arg2: memref<16x128xbf16, #tpu.memory_space<vmem>>, %arg3: memref<1x1x128xf32, #tpu.memory_space<vmem>>, %arg4: memref<128x128xbf16, #tpu.memory_space<vmem>>, %arg5: memref<1x128xf32, #tpu.memory_space<vmem>>, %arg6: memref<1x128xf32, #tpu.memory_space<vmem>>, %arg7: memref<16x128xbf16, #tpu.memory_space<vmem>>) attributes {dimension_semantics = [#tpu.dimension_semantics<parallel>, #tpu.dimension_semantics<parallel>], iteration_bounds = array<i64: 2, 1>, scalar_prefetch = 0 : i64, scratch_operands = 0 : i64, tpu.core_type = #tpu.core_type<tc>, window_params = [{transform_indices = @transform_0, window_bounds = array<i64: 16, 128>}, {transform_indices = @transform_1, window_bounds = array<i64: 1, 1, 128>}, {pipeline_mode = #tpu.pipeline_mode<synchronous>, transform_indices = @transform_2, window_bounds = array<i64: 128, 128>}, {pipeline_mode = #tpu.pipeline_mode<synchronous>, transform_indices = @transform_3, window_bounds = array<i64: 1, 128>}, {pipeline_mode = #tpu.pipeline_mode<synchronous>, transform_indices = @transform_4, window_bounds = array<i64: 1, 128>}, {transform_indices = @transform_5, window_bounds = array<i64: 16, 128>}]} {
    %c0 = arith.constant 0 : index
    %c0_0 = arith.constant 0 : index
    %c0_1 = arith.constant 0 : index
    %0 = vector.load %arg3[%c0, %c0_0, %c0_1] : memref<1x1x128xf32, #tpu.memory_space<vmem>>, vector<1x1x128xf32>
    %1 = vector.shape_cast %0 : vector<1x1x128xf32> to vector<1x128xf32>
    %c0_2 = arith.constant 0 : index
    %c0_3 = arith.constant 0 : index
    %2 = vector.load %arg2[%c0_2, %c0_3] : memref<16x128xbf16, #tpu.memory_space<vmem>>, vector<16x128xbf16>
    %3 = arith.extf %2 : vector<16x128xbf16> to vector<16x128xf32>
    %4 = vector.broadcast %1 : vector<1x128xf32> to vector<16x128xf32>
    %5 = arith.mulf %3, %4 : vector<16x128xf32>
    %6 = arith.truncf %5 : vector<16x128xf32> to vector<16x128xbf16>
    %c0_4 = arith.constant 0 : index
    %c0_5 = arith.constant 0 : index
    %7 = vector.load %arg4[%c0_4, %c0_5] : memref<128x128xbf16, #tpu.memory_space<vmem>>, vector<128x128xbf16>
    %cst = arith.constant dense<0.000000e+00> : vector<16x128xf32>
    %8 = tpu.matmul %6, %7, %cst {dimension_numbers = #tpu.dot_dimension_numbers<[1], [0], [0], [1], [0, 0, 1, 1], [], []>} : vector<16x128xbf16>, vector<128x128xbf16>, vector<16x128xf32> -> vector<16x128xf32>
    %c0_6 = arith.constant 0 : index
    %c0_7 = arith.constant 0 : index
    %9 = vector.load %arg5[%c0_6, %c0_7] : memref<1x128xf32, #tpu.memory_space<vmem>>, vector<1x128xf32>
    %10 = vector.broadcast %9 : vector<1x128xf32> to vector<16x128xf32>
    %11 = arith.mulf %8, %10 : vector<16x128xf32>
    %c0_8 = arith.constant 0 : index
    %c0_9 = arith.constant 0 : index
    %12 = vector.load %arg6[%c0_8, %c0_9] : memref<1x128xf32, #tpu.memory_space<vmem>>, vector<1x128xf32>
    %13 = vector.broadcast %12 : vector<1x128xf32> to vector<16x128xf32>
    %14 = arith.addf %11, %13 : vector<16x128xf32>
    %15 = arith.truncf %14 : vector<16x128xf32> to vector<16x128xbf16>
    %c0_10 = arith.constant 0 : index
    %c0_11 = arith.constant 0 : index
    %16 = vector.load %arg7[%c0_10, %c0_11] : memref<16x128xbf16, #tpu.memory_space<vmem>>, vector<16x128xbf16>
    tpu.vector_store %arg7[%c0_10, %c0_11], %15 {strides = array<i32>} : memref<16x128xbf16, #tpu.memory_space<vmem>>, vector<16x128xbf16>,
    return
  }
  func.func @transform_0(%arg0: i32, %arg1: i32) -> (i32, i32) {
    %c1_i32 = arith.constant 1 : i32
    %0 = arith.muli %arg0, %c1_i32 : i32
    %1 = arith.addi %0, %arg1 : i32
    %c0_i32 = arith.constant 0 : i32
    %c0_i32_0 = arith.constant 0 : i32
    return %1, %c0_i32 : i32, i32
  }
  func.func @transform_1(%arg0: i32, %arg1: i32) -> (i32, i32, i32) {
    %c0_i32 = arith.constant 0 : i32
    %c0_i32_0 = arith.constant 0 : i32
    %c0_i32_1 = arith.constant 0 : i32
    return %arg0, %c0_i32, %c0_i32_0 : i32, i32, i32
  }
  func.func @transform_2(%arg0: i32, %arg1: i32) -> (i32, i32) {
    %c0_i32 = arith.constant 0 : i32
    %c0_i32_0 = arith.constant 0 : i32
    %c0_i32_1 = arith.constant 0 : i32
    return %c0_i32, %c0_i32_0 : i32, i32
  }
  func.func @transform_3(%arg0: i32, %arg1: i32) -> (i32, i32) {
    %c0_i32 = arith.constant 0 : i32
    %c0_i32_0 = arith.constant 0 : i32
    %c0_i32_1 = arith.constant 0 : i32
    return %c0_i32, %c0_i32_0 : i32, i32
  }
  func.func @transform_4(%arg0: i32, %arg1: i32) -> (i32, i32) {
    %c0_i32 = arith.constant 0 : i32
    %c0_i32_0 = arith.constant 0 : i32
    %c0_i32_1 = arith.constant 0 : i32
    return %c0_i32, %c0_i32_0 : i32, i32
  }
  func.func @transform_5(%arg0: i32, %arg1: i32) -> (i32, i32) {
    %c1_i32 = arith.constant 1 : i32
    %0 = arith.muli %arg0, %c1_i32 : i32
    %1 = arith.addi %0, %arg1 : i32
    %c0_i32 = arith.constant 0 : i32
    %c0_i32_0 = arith.constant 0 : i32
    return %1, %c0_i32 : i32, i32
  }
}

module attributes {stable_mosaic.version = 11 : i64} {
  func.func @_matmul_bn_act_kernel(%arg0: i32, %arg1: memref<32x128xbf16, #tpu.memory_space<vmem>>, %arg2: memref<128x128xbf16, #tpu.memory_space<vmem>>, %arg3: memref<1x128xf32, #tpu.memory_space<vmem>>, %arg4: memref<1x128xf32, #tpu.memory_space<vmem>>, %arg5: memref<32x128xbf16, #tpu.memory_space<vmem>>) attributes {dimension_semantics = [#tpu.dimension_semantics<parallel>], iteration_bounds = array<i64: 1>, scalar_prefetch = 0 : i64, scratch_operands = 0 : i64, tpu.core_type = #tpu.core_type<tc>, window_params = [{transform_indices = @transform_0, window_bounds = array<i64: 32, 128>}, {pipeline_mode = #tpu.pipeline_mode<synchronous>, transform_indices = @transform_1, window_bounds = array<i64: 128, 128>}, {pipeline_mode = #tpu.pipeline_mode<synchronous>, transform_indices = @transform_2, window_bounds = array<i64: 1, 128>}, {pipeline_mode = #tpu.pipeline_mode<synchronous>, transform_indices = @transform_3, window_bounds = array<i64: 1, 128>}, {transform_indices = @transform_4, window_bounds = array<i64: 32, 128>}]} {
    %c0 = arith.constant 0 : index
    %c0_0 = arith.constant 0 : index
    %0 = vector.load %arg1[%c0, %c0_0] : memref<32x128xbf16, #tpu.memory_space<vmem>>, vector<32x128xbf16>
    %c0_1 = arith.constant 0 : index
    %c0_2 = arith.constant 0 : index
    %1 = vector.load %arg2[%c0_1, %c0_2] : memref<128x128xbf16, #tpu.memory_space<vmem>>, vector<128x128xbf16>
    %cst = arith.constant dense<0.000000e+00> : vector<32x128xf32>
    %2 = tpu.matmul %0, %1, %cst {dimension_numbers = #tpu.dot_dimension_numbers<[1], [0], [0], [1], [0, 0, 1, 1], [], []>} : vector<32x128xbf16>, vector<128x128xbf16>, vector<32x128xf32> -> vector<32x128xf32>
    %c0_3 = arith.constant 0 : index
    %c0_4 = arith.constant 0 : index
    %3 = vector.load %arg3[%c0_3, %c0_4] : memref<1x128xf32, #tpu.memory_space<vmem>>, vector<1x128xf32>
    %4 = vector.broadcast %3 : vector<1x128xf32> to vector<32x128xf32>
    %5 = arith.mulf %2, %4 : vector<32x128xf32>
    %c0_5 = arith.constant 0 : index
    %c0_6 = arith.constant 0 : index
    %6 = vector.load %arg4[%c0_5, %c0_6] : memref<1x128xf32, #tpu.memory_space<vmem>>, vector<1x128xf32>
    %7 = vector.broadcast %6 : vector<1x128xf32> to vector<32x128xf32>
    %8 = arith.addf %5, %7 : vector<32x128xf32>
    %9 = arith.negf %8 : vector<32x128xf32>
    %10 = math.exp %9 : vector<32x128xf32>
    %cst_7 = arith.constant 1.000000e+00 : f32
    %11 = vector.broadcast %cst_7 : f32 to vector<32x128xf32>
    %12 = arith.addf %11, %10 : vector<32x128xf32>
    %13 = arith.divf %11, %12 : vector<32x128xf32>
    %14 = arith.mulf %8, %13 : vector<32x128xf32>
    %15 = arith.truncf %14 : vector<32x128xf32> to vector<32x128xbf16>
    %c0_8 = arith.constant 0 : index
    %c0_9 = arith.constant 0 : index
    %16 = vector.load %arg5[%c0_8, %c0_9] : memref<32x128xbf16, #tpu.memory_space<vmem>>, vector<32x128xbf16>
    tpu.vector_store %arg5[%c0_8, %c0_9], %15 {strides = array<i32>} : memref<32x128xbf16, #tpu.memory_space<vmem>>, vector<32x128xbf16>,
    return
  }
  func.func @transform_0(%arg0: i32) -> (i32, i32) {
    %c0_i32 = arith.constant 0 : i32
    %c0_i32_0 = arith.constant 0 : i32
    return %arg0, %c0_i32 : i32, i32
  }
  func.func @transform_1(%arg0: i32) -> (i32, i32) {
    %c0_i32 = arith.constant 0 : i32
    %c0_i32_0 = arith.constant 0 : i32
    %c0_i32_1 = arith.constant 0 : i32
    return %c0_i32, %c0_i32_0 : i32, i32
  }
  func.func @transform_2(%arg0: i32) -> (i32, i32) {
    %c0_i32 = arith.constant 0 : i32
    %c0_i32_0 = arith.constant 0 : i32
    %c0_i32_1 = arith.constant 0 : i32
    return %c0_i32, %c0_i32_0 : i32, i32
  }
  func.func @transform_3(%arg0: i32) -> (i32, i32) {
    %c0_i32 = arith.constant 0 : i32
    %c0_i32_0 = arith.constant 0 : i32
    %c0_i32_1 = arith.constant 0 : i32
    return %c0_i32, %c0_i32_0 : i32, i32
  }
  func.func @transform_4(%arg0: i32) -> (i32, i32) {
    %c0_i32 = arith.constant 0 : i32
    %c0_i32_0 = arith.constant 0 : i32
    return %arg0, %c0_i32 : i32, i32
  }
}

module attributes {stable_mosaic.version = 11 : i64} {
  func.func @_gap_kernel(%arg0: i32, %arg1: memref<2x16x128xbf16, #tpu.memory_space<vmem>>, %arg2: memref<2x128xf32, #tpu.memory_space<vmem>>) attributes {dimension_semantics = [#tpu.dimension_semantics<arbitrary>], iteration_bounds = array<i64: 1>, scalar_prefetch = 0 : i64, scratch_operands = 0 : i64, tpu.core_type = #tpu.core_type<tc>, window_params = [{transform_indices = @transform_0, window_bounds = array<i64: 2, 16, 128>}, {pipeline_mode = #tpu.pipeline_mode<synchronous>, transform_indices = @transform_1, window_bounds = array<i64: 2, 128>}]} {
    %c0_i32 = arith.constant 0 : i32
    %0 = arith.cmpi eq, %arg0, %c0_i32 : i32
    %1 = arith.extui %0 : i1 to i32
    %c0_i32_0 = arith.constant 0 : i32
    %2 = arith.cmpi ne, %1, %c0_i32_0 : i32
    scf.if %2 {
      %cst_9 = arith.constant 0.000000e+00 : f32
      %12 = vector.broadcast %cst_9 : f32 to vector<2x128xf32>
      %c0_10 = arith.constant 0 : index
      %c0_11 = arith.constant 0 : index
      %13 = vector.load %arg2[%c0_10, %c0_11] : memref<2x128xf32, #tpu.memory_space<vmem>>, vector<2x128xf32>
      tpu.vector_store %arg2[%c0_10, %c0_11], %12 {strides = array<i32>} : memref<2x128xf32, #tpu.memory_space<vmem>>, vector<2x128xf32>,
    } else {
    }
    %c0 = arith.constant 0 : index
    %c0_1 = arith.constant 0 : index
    %3 = vector.load %arg2[%c0, %c0_1] : memref<2x128xf32, #tpu.memory_space<vmem>>, vector<2x128xf32>
    %c0_2 = arith.constant 0 : index
    %c0_3 = arith.constant 0 : index
    %c0_4 = arith.constant 0 : index
    %4 = vector.load %arg1[%c0_2, %c0_3, %c0_4] : memref<2x16x128xbf16, #tpu.memory_space<vmem>>, vector<2x16x128xbf16>
    %5 = arith.extf %4 : vector<2x16x128xbf16> to vector<2x16x128xf32>
    %cst = arith.constant dense<0.000000e+00> : vector<2x128xf32>
    %6 = vector.multi_reduction <add>, %5, %cst [1] : vector<2x16x128xf32> to vector<2x128xf32>
    %7 = arith.addf %3, %6 : vector<2x128xf32>
    %c0_5 = arith.constant 0 : index
    %c0_6 = arith.constant 0 : index
    %8 = vector.load %arg2[%c0_5, %c0_6] : memref<2x128xf32, #tpu.memory_space<vmem>>, vector<2x128xf32>
    tpu.vector_store %arg2[%c0_5, %c0_6], %7 {strides = array<i32>} : memref<2x128xf32, #tpu.memory_space<vmem>>, vector<2x128xf32>,
    %c0_i32_7 = arith.constant 0 : i32
    %9 = arith.cmpi eq, %arg0, %c0_i32_7 : i32
    %10 = arith.extui %9 : i1 to i32
    %c0_i32_8 = arith.constant 0 : i32
    %11 = arith.cmpi ne, %10, %c0_i32_8 : i32
    scf.if %11 {
      %c0_9 = arith.constant 0 : index
      %c0_10 = arith.constant 0 : index
      %12 = vector.load %arg2[%c0_9, %c0_10] : memref<2x128xf32, #tpu.memory_space<vmem>>, vector<2x128xf32>
      %cst_11 = arith.constant 6.250000e-02 : f32
      %13 = vector.broadcast %cst_11 : f32 to vector<2x128xf32>
      %14 = arith.mulf %12, %13 : vector<2x128xf32>
      %c0_12 = arith.constant 0 : index
      %c0_13 = arith.constant 0 : index
      %15 = vector.load %arg2[%c0_12, %c0_13] : memref<2x128xf32, #tpu.memory_space<vmem>>, vector<2x128xf32>
      tpu.vector_store %arg2[%c0_12, %c0_13], %14 {strides = array<i32>} : memref<2x128xf32, #tpu.memory_space<vmem>>, vector<2x128xf32>,
    } else {
    }
    return
  }
  func.func @transform_0(%arg0: i32) -> (i32, i32, i32) {
    %c0_i32 = arith.constant 0 : i32
    %c0_i32_0 = arith.constant 0 : i32
    %c0_i32_1 = arith.constant 0 : i32
    return %c0_i32, %arg0, %c0_i32_0 : i32, i32, i32
  }
  func.func @transform_1(%arg0: i32) -> (i32, i32) {
    %c0_i32 = arith.constant 0 : i32
    %c0_i32_0 = arith.constant 0 : i32
    %c0_i32_1 = arith.constant 0 : i32
    return %c0_i32, %c0_i32_0 : i32, i32
  }
}

</mosaic_0001>

<llo_original>
// kernel: efficientnet_model.8
$region0: #{efficientnet_model.8}
  #allocation0 [shape = 'u32[]', space=smem, size = 0x4, offset = 0x4, fixed_abs, tag = 'smem constant byte address 0x4 - core index']
  #allocation1 [shape = 'u32[144,128]{1,0:T(1,128)}', space=vmem, size = 0x12000, scoped, tag = 'internal scratch']
  %s0 = inlined_call_operand.vmem [shape: bf16[128,27], index: 0, kind: input, shape index: {}]
  %s1 = inlined_call_operand.vmem [shape: bf16[27,128], index: 1, kind: input, shape index: {}]
  %s2 = inlined_call_operand.vmem [shape: f32[1,128], index: 2, kind: input, shape index: {}]
  %s3 = inlined_call_operand.vmem [shape: f32[1,128], index: 3, kind: input, shape index: {}]
  %s4 = inlined_call_operand.vmem [shape: bf16[128,128], index: 4, kind: output, shape index: {}]
  %s5 = sld [smem:[#allocation0]]
  $region26: #{efficientnet_model.8} parent=0
    _
  %s7 = ssub.s32 1, %s5
  %s8 = scalar_select 0, %s7, %s5
  // Predicated region
  $region2: #{efficientnet_model.8} parent=0 // pred_check
    _
  $region3: #{efficientnet_model.8} parent=0 // pred_check_branch
    %10 = sbr.rel (0) target = $region5
  $region4: #{efficientnet_model.8} parent=0 // pred_region
    _
  $region5: #{efficientnet_model.8} parent=0 // pred_fallthru
    _
  // Predicated region
  $region6: #{efficientnet_model.8} parent=0 // pred_check
    _
  $region7: #{efficientnet_model.8} parent=0 // pred_check_branch
    %12 = sbr.rel (0) target = $region9
  $region8: #{efficientnet_model.8} parent=0 // pred_region
    _
  $region9: #{efficientnet_model.8} parent=0 // pred_fallthru
    _
  // Predicated region
  $region10: #{efficientnet_model.8} parent=0 // pred_check
    _
  $region11: #{efficientnet_model.8} parent=0 // pred_check_branch
    %14 = sbr.rel (0) target = $region13
  $region12: #{efficientnet_model.8} parent=0 // pred_region
    _
  $region13: #{efficientnet_model.8} parent=0 // pred_fallthru
    _
  // Predicated region
  $region14: #{efficientnet_model.8} parent=0 // pred_check
    _
  $region15: #{efficientnet_model.8} parent=0 // pred_check_branch
    %16 = sbr.rel (0) target = $region17
  $region16: #{efficientnet_model.8} parent=0 // pred_region
    _
  $region17: #{efficientnet_model.8} parent=0 // pred_fallthru
    _
  %v18 = vld [vmem:[%s0] sm:$0xf]
  %v19 = vld [vmem:[%s0 + $0x4] sm:$0xf]
  %v20 = vld [vmem:[%s0 + $0x8] sm:$0xf]
  %v21 = vld [vmem:[%s0 + $0xc] sm:$0xf]
  %v22 = vld [vmem:[%s0 + $0x10] sm:$0xf]
  %v23 = vld [vmem:[%s0 + $0x14] sm:$0xf]
  %v24 = vld [vmem:[%s0 + $0x18] sm:$0xf]
  %v25 = vld [vmem:[%s0 + $0x1c] sm:$0xf]
  %v26 = vld [vmem:[%s0 + $0x20] sm:$0xf]
  %v27 = vld [vmem:[%s0 + $0x24] sm:$0xf]
  %v28 = vld [vmem:[%s0 + $0x28] sm:$0xf]
  %v29 = vld [vmem:[%s0 + $0x2c] sm:$0xf]
  %v30 = vld [vmem:[%s0 + $0x30] sm:$0xf]
  %v31 = vld [vmem:[%s0 + $0x34] sm:$0xf]
  %v32 = vld [vmem:[%s0 + $0x38] sm:$0xf]
  %v33 = vld [vmem:[%s0 + $0x3c] sm:$0xf]
  %v34 = vld [vmem:[%s1] sm:$0xf]
  %v35 = vld [vmem:[%s1 + $0x4] sm:$0xf]
  %v36 = vld [vmem:[%s1 + $0x8] sm:$0xf]
  %v37 = vld [vmem:[%s1 + $0xc] sm:$0x3]
  %v54 = vunpack.c.l.b16 %v18
  %v55 = vunpack.c.l.b16 %v19
  %v56 = vunpack.c.l.b16 %v20
  %v57 = vunpack.c.l.b16 %v21
  %v58 = vunpack.c.l.b16 %v22
  %v59 = vunpack.c.l.b16 %v23
  %v60 = vunpack.c.l.b16 %v24
  %v61 = vunpack.c.l.b16 %v25
  %v62 = vunpack.c.l.b16 %v26
  %v63 = vunpack.c.l.b16 %v27
  %v64 = vunpack.c.l.b16 %v28
  %v65 = vunpack.c.l.b16 %v29
  %v66 = vunpack.c.l.b16 %v30
  %v67 = vunpack.c.l.b16 %v31
  %v68 = vunpack.c.l.b16 %v32
  %v69 = vunpack.c.l.b16 %v33
  %v70 = vpack.c.b16 %v55, %v54
  %v71 = vpack.c.b16 %v57, %v56
  %v72 = vpack.c.b16 %v59, %v58
  %v73 = vpack.c.b16 %v61, %v60
  %v74 = vpack.c.b16 %v63, %v62
  %v75 = vpack.c.b16 %v65, %v64
  %v76 = vpack.c.b16 %v67, %v66
  %v77 = vpack.c.b16 %v69, %v68
  %v82 = vunpack.c.l.b16 %v34
  %v83 = vunpack.c.l.b16 %v35
  %v84 = vunpack.c.l.b16 %v36
  %v85 = vunpack.c.l.b16 %v37
  %v86 = vpack.c.b16 %v83, %v82
  %v87 = vpack.c.b16 %v85, %v84
  %vm89 = vcmask 220160
  %v91 = vsel %vm89, %v70, 0
  %v94 = vsel %vm89, %v71, 0
  %v97 = vsel %vm89, %v72, 0
  %v100 = vsel %vm89, %v73, 0
  %v103 = vsel %vm89, %v74, 0
  %v106 = vsel %vm89, %v75, 0
  %v109 = vsel %vm89, %v76, 0
  %v112 = vsel %vm89, %v77, 0
  %vm114 = vcmask 1044480
  %vm115 = vcmask 1045504
  %v116 = vsel %vm114, 4294967295, 65535
  %v117 = vsel %vm115, %v116, 0
  %v119 = vand.u32 %v87, %v117
  %121 = vmatprep.subr.bf16.mxu0 0
  %122 = vmatpush1.bf16.msra.mxu0 %v86
  %123 = vmatprep.subr.bf16.mxu0 0
  %124 = vmatpush1.bf16.msra.mxu0 %v119
  %125 = vmatprep.subr.bf16.mxu0 0
  %126 = vmatpush1.bf16.msra.mxu0 0
  %127 = vmatprep.subr.bf16.mxu0 0
  %128 = vmatpush1.bf16.msra.mxu0 0
  %129 = vmatprep.subr.bf16.mxu0 0
  %130 = vmatpush1.bf16.msra.mxu0 0
  %131 = vmatprep.subr.bf16.mxu0 0
  %132 = vmatpush1.bf16.msra.mxu0 0
  %133 = vmatprep.subr.bf16.mxu0 0
  %134 = vmatpush1.bf16.msra.mxu0 0
  %135 = vmatprep.subr.bf16.mxu0 0
  %136 = vmatpush1.bf16.msra.mxu0 0
  %137 = vmatprep.subr.bf16.mxu0 0
  %138 = vmatpush1.bf16.msra.mxu0 0
  %139 = vmatprep.subr.bf16.mxu0 0
  %140 = vmatpush1.bf16.msra.mxu0 0
  %141 = vmatprep.subr.bf16.mxu0 0
  %142 = vmatpush1.bf16.msra.mxu0 0
  %143 = vmatprep.subr.bf16.mxu0 0
  %144 = vmatpush1.bf16.msra.mxu0 0
  %145 = vmatprep.subr.bf16.mxu0 0
  %146 = vmatpush1.bf16.msra.mxu0 0
  %147 = vmatprep.subr.bf16.mxu0 0
  %148 = vmatpush1.bf16.msra.mxu0 0
  %149 = vmatprep.subr.bf16.mxu0 0
  %150 = vmatpush1.bf16.msra.mxu0 0
  %151 = vmatprep.subr.bf16.mxu0 0
  %152 = vmatpush1.bf16.msra.mxu0 0
  %153 = vmatprep.mubr.bf16.mxu0 0
  %154 = vmatmul.mubr.bf16.gmra.mrb[0].mxu0 %v91
  %v155 = vpop.f32.mrb[0].mxu0
  %v156 = vadd.f32 0.0, %v155
  %v157 = vpop.f32.mrb[0].mxu0
  %v158 = vpop.f32.mrb[0].mxu0
  %v159 = vadd.f32 0.0, %v158
  %v160 = vpop.f32.mrb[0].mxu0
  %161 = vmatprep.mubr.bf16.mxu0 0
  %162 = vmatmul.mubr.bf16.gmra.mrb[0].mxu0 %v94
  %v163 = vpop.f32.mrb[0].mxu0
  %v164 = vadd.f32 0.0, %v163
  %v165 = vpop.f32.mrb[0].mxu0
  %v166 = vpop.f32.mrb[0].mxu0
  %v167 = vadd.f32 0.0, %v166
  %v168 = vpop.f32.mrb[0].mxu0
  %169 = vmatprep.mubr.bf16.mxu0 0
  %170 = vmatmul.mubr.bf16.gmra.mrb[0].mxu0 %v97
  %v171 = vpop.f32.mrb[0].mxu0
  %v172 = vadd.f32 0.0, %v171
  %v173 = vpop.f32.mrb[0].mxu0
  %v174 = vpop.f32.mrb[0].mxu0
  %v175 = vadd.f32 0.0, %v174
  %v176 = vpop.f32.mrb[0].mxu0
  %177 = vmatprep.mubr.bf16.mxu0 0
  %178 = vmatmul.mubr.bf16.gmra.mrb[0].mxu0 %v100
  %v179 = vpop.f32.mrb[0].mxu0
  %v180 = vadd.f32 0.0, %v179
  %v181 = vpop.f32.mrb[0].mxu0
  %v182 = vpop.f32.mrb[0].mxu0
  %v183 = vadd.f32 0.0, %v182
  %v184 = vpop.f32.mrb[0].mxu0
  %185 = vmatprep.mubr.bf16.mxu0 0
  %186 = vmatmul.mubr.bf16.gmra.mrb[0].mxu0 %v103
  %v187 = vpop.f32.mrb[0].mxu0
  %v188 = vadd.f32 0.0, %v187
  %v189 = vpop.f32.mrb[0].mxu0
  %v190 = vpop.f32.mrb[0].mxu0
  %v191 = vadd.f32 0.0, %v190
  %v192 = vpop.f32.mrb[0].mxu0
  %193 = vmatprep.mubr.bf16.mxu0 0
  %194 = vmatmul.mubr.bf16.gmra.mrb[0].mxu0 %v106
  %v195 = vpop.f32.mrb[0].mxu0
  %v196 = vadd.f32 0.0, %v195
  %v197 = vpop.f32.mrb[0].mxu0
  %v198 = vpop.f32.mrb[0].mxu0
  %v199 = vadd.f32 0.0, %v198
  %v200 = vpop.f32.mrb[0].mxu0
  %201 = vmatprep.mubr.bf16.mxu0 0
  %202 = vmatmul.mubr.bf16.gmra.mrb[0].mxu0 %v109
  %v203 = vpop.f32.mrb[0].mxu0
  %v204 = vadd.f32 0.0, %v203
  %v205 = vpop.f32.mrb[0].mxu0
  %v206 = vpop.f32.mrb[0].mxu0
  %v207 = vadd.f32 0.0, %v206
  %v208 = vpop.f32.mrb[0].mxu0
  %209 = vmatprep.mubr.bf16.mxu0 0
  %210 = vmatmul.mubr.bf16.gmra.mrb[0].mxu0 %v112
  %v211 = vpop.f32.mrb[0].mxu0
  %v212 = vadd.f32 0.0, %v211
  %v213 = vpop.f32.mrb[0].mxu0
  %v214 = vpop.f32.mrb[0].mxu0
  %v215 = vadd.f32 0.0, %v214
  %v216 = vpop.f32.mrb[0].mxu0
  %217 = vdwg.mxu0
  %v218 = vld [vmem:[%s2] sm:$0x1]
  %v220 = vlaneseq
  %v221 = vshrl.u32 %v220, 7
  %v222 = vsub.s32 0, %v221
  %v223 = vrot.slane %v218, %v222
  %v225 = vmul.f32 %v156, %v223
  %v226 = vmul.f32 %v159, %v223
  %v227 = vmul.f32 %v164, %v223
  %v228 = vmul.f32 %v167, %v223
  %v229 = vmul.f32 %v172, %v223
  %v230 = vmul.f32 %v175, %v223
  %v231 = vmul.f32 %v180, %v223
  %v232 = vmul.f32 %v183, %v223
  %v233 = vmul.f32 %v188, %v223
  %v234 = vmul.f32 %v191, %v223
  %v235 = vmul.f32 %v196, %v223
  %v236 = vmul.f32 %v199, %v223
  %v237 = vmul.f32 %v204, %v223
  %v238 = vmul.f32 %v207, %v223
  %v239 = vmul.f32 %v212, %v223
  %v240 = vmul.f32 %v215, %v223
  %v241 = vld [vmem:[%s3] sm:$0x1]
  %v243 = vlaneseq
  %v244 = vshrl.u32 %v243, 7
  %v245 = vsub.s32 0, %v244
  %v246 = vrot.slane %v241, %v245
  %v248 = vadd.f32 %v225, %v246
  %v249 = vadd.f32 %v226, %v246
  %v250 = vadd.f32 %v227, %v246
  %v251 = vadd.f32 %v228, %v246
  %v252 = vadd.f32 %v229, %v246
  %v253 = vadd.f32 %v230, %v246
  %v254 = vadd.f32 %v231, %v246
  %v255 = vadd.f32 %v232, %v246
  %v256 = vadd.f32 %v233, %v246
  %v257 = vadd.f32 %v234, %v246
  %v258 = vadd.f32 %v235, %v246
  %v259 = vadd.f32 %v236, %v246
  %v260 = vadd.f32 %v237, %v246
  %v261 = vadd.f32 %v238, %v246
  %v262 = vadd.f32 %v239, %v246
  %v263 = vadd.f32 %v240, %v246
  %v264 = vxor.u32 %v248, 2147483648
  %v265 = vxor.u32 %v249, 2147483648
  %v266 = vxor.u32 %v250, 2147483648
  %v267 = vxor.u32 %v251, 2147483648
  %v268 = vxor.u32 %v252, 2147483648
  %v269 = vxor.u32 %v253, 2147483648
  %v270 = vxor.u32 %v254, 2147483648
  %v271 = vxor.u32 %v255, 2147483648
  %v272 = vxor.u32 %v256, 2147483648
  %v273 = vxor.u32 %v257, 2147483648
  %v274 = vxor.u32 %v258, 2147483648
  %v275 = vxor.u32 %v259, 2147483648
  %v276 = vxor.u32 %v260, 2147483648
  %v277 = vxor.u32 %v261, 2147483648
  %v278 = vxor.u32 %v262, 2147483648
  %v279 = vxor.u32 %v263, 2147483648
  %v280 = vmul.f32 %v264, 1.442695
  %v281 = vpow.pop %v280
  %v282 = vmul.f32 %v265, 1.442695
  %v283 = vpow.pop %v282
  %v284 = vmul.f32 %v266, 1.442695
  %v285 = vpow.pop %v284
  %v286 = vmul.f32 %v267, 1.442695
  %v287 = vpow.pop %v286
  %v288 = vmul.f32 %v268, 1.442695
  %v289 = vpow.pop %v288
  %v290 = vmul.f32 %v269, 1.442695
  %v291 = vpow.pop %v290
  %v292 = vmul.f32 %v270, 1.442695
  %v293 = vpow.pop %v292
  %v294 = vmul.f32 %v271, 1.442695
  %v295 = vpow.pop %v294
  %v296 = vmul.f32 %v272, 1.442695
  %v297 = vpow.pop %v296
  %v298 = vmul.f32 %v273, 1.442695
  %v299 = vpow.pop %v298
  %v300 = vmul.f32 %v274, 1.442695
  %v301 = vpow.pop %v300
  %v302 = vmul.f32 %v275, 1.442695
  %v303 = vpow.pop %v302
  %v304 = vmul.f32 %v276, 1.442695
  %v305 = vpow.pop %v304
  %v306 = vmul.f32 %v277, 1.442695
  %v307 = vpow.pop %v306
  %v308 = vmul.f32 %v278, 1.442695
  %v309 = vpow.pop %v308
  %v310 = vmul.f32 %v279, 1.442695
  %v311 = vpow.pop %v310
  %v312 = vadd.f32 %v281, 1.0
  %v313 = vadd.f32 %v283, 1.0
  %v314 = vadd.f32 %v285, 1.0
  %v315 = vadd.f32 %v287, 1.0
  %v316 = vadd.f32 %v289, 1.0
  %v317 = vadd.f32 %v291, 1.0
  %v318 = vadd.f32 %v293, 1.0
  %v319 = vadd.f32 %v295, 1.0
  %v320 = vadd.f32 %v297, 1.0
  %v321 = vadd.f32 %v299, 1.0
  %v322 = vadd.f32 %v301, 1.0
  %v323 = vadd.f32 %v303, 1.0
  %v324 = vadd.f32 %v305, 1.0
  %v325 = vadd.f32 %v307, 1.0
  %v326 = vadd.f32 %v309, 1.0
  %v327 = vadd.f32 %v311, 1.0
  %v328 = vrcp.pop %v312
  %v329 = vmul.f32 1.0, %v328
  %v330 = vrcp.pop %v313
  %v331 = vmul.f32 1.0, %v330
  %v332 = vrcp.pop %v314
  %v333 = vmul.f32 1.0, %v332
  %v334 = vrcp.pop %v315
  %v335 = vmul.f32 1.0, %v334
  %v336 = vrcp.pop %v316
  %v337 = vmul.f32 1.0, %v336
  %v338 = vrcp.pop %v317
  %v339 = vmul.f32 1.0, %v338
  %v340 = vrcp.pop %v318
  %v341 = vmul.f32 1.0, %v340
  %v342 = vrcp.pop %v319
  %v343 = vmul.f32 1.0, %v342
  %v344 = vrcp.pop %v320
  %v345 = vmul.f32 1.0, %v344
  %v346 = vrcp.pop %v321
  %v347 = vmul.f32 1.0, %v346
  %v348 = vrcp.pop %v322
  %v349 = vmul.f32 1.0, %v348
  %v350 = vrcp.pop %v323
  %v351 = vmul.f32 1.0, %v350
  %v352 = vrcp.pop %v324
  %v353 = vmul.f32 1.0, %v352
  %v354 = vrcp.pop %v325
  %v355 = vmul.f32 1.0, %v354
  %v356 = vrcp.pop %v326
  %v357 = vmul.f32 1.0, %v356
  %v358 = vrcp.pop %v327
  %v359 = vmul.f32 1.0, %v358
  %v360 = vmul.f32 %v248, %v329
  %v361 = vmul.f32 %v249, %v331
  %v362 = vmul.f32 %v250, %v333
  %v363 = vmul.f32 %v251, %v335
  %v364 = vmul.f32 %v252, %v337
  %v365 = vmul.f32 %v253, %v339
  %v366 = vmul.f32 %v254, %v341
  %v367 = vmul.f32 %v255, %v343
  %v368 = vmul.f32 %v256, %v345
  %v369 = vmul.f32 %v257, %v347
  %v370 = vmul.f32 %v258, %v349
  %v371 = vmul.f32 %v259, %v351
  %v372 = vmul.f32 %v260, %v353
  %v373 = vmul.f32 %v261, %v355
  %v374 = vmul.f32 %v262, %v357
  %v375 = vmul.f32 %v263, %v359
  %v376 = vpack.c.bf16 %v361, %v360
  %v377 = vpack.c.bf16 %v363, %v362
  %v378 = vpack.c.bf16 %v365, %v364
  %v379 = vpack.c.bf16 %v367, %v366
  %v380 = vpack.c.bf16 %v369, %v368
  %v381 = vpack.c.bf16 %v371, %v370
  %v382 = vpack.c.bf16 %v373, %v372
  %v383 = vpack.c.bf16 %v375, %v374
  %v392 = vunpack.c.l.b16 %v376
  %v393 = vunpack.c.h.b16 %v376
  %v394 = vunpack.c.l.b16 %v377
  %v395 = vunpack.c.h.b16 %v377
  %v396 = vunpack.c.l.b16 %v378
  %v397 = vunpack.c.h.b16 %v378
  %v398 = vunpack.c.l.b16 %v379
  %v399 = vunpack.c.h.b16 %v379
  %v400 = vunpack.c.l.b16 %v380
  %v401 = vunpack.c.h.b16 %v380
  %v402 = vunpack.c.l.b16 %v381
  %v403 = vunpack.c.h.b16 %v381
  %v404 = vunpack.c.l.b16 %v382
  %v405 = vunpack.c.h.b16 %v382
  %v406 = vunpack.c.l.b16 %v383
  %v407 = vunpack.c.h.b16 %v383
  %v408 = vpack.c.b16 %v392, %v392
  %v409 = vpack.c.b16 %v393, %v393
  %v410 = vpack.c.b16 %v394, %v394
  %v411 = vpack.c.b16 %v395, %v395
  %v412 = vpack.c.b16 %v396, %v396
  %v413 = vpack.c.b16 %v397, %v397
  %v414 = vpack.c.b16 %v398, %v398
  %v415 = vpack.c.b16 %v399, %v399
  %v416 = vpack.c.b16 %v400, %v400
  %v417 = vpack.c.b16 %v401, %v401
  %v418 = vpack.c.b16 %v402, %v402
  %v419 = vpack.c.b16 %v403, %v403
  %v420 = vpack.c.b16 %v404, %v404
  %v421 = vpack.c.b16 %v405, %v405
  %v422 = vpack.c.b16 %v406, %v406
  %v423 = vpack.c.b16 %v407, %v407
  %440 = vst [vmem:[%s4] sm:$0xf] %v408
  %441 = vst [vmem:[%s4 + $0x4] sm:$0xf] %v409
  %442 = vst [vmem:[%s4 + $0x8] sm:$0xf] %v410
  %443 = vst [vmem:[%s4 + $0xc] sm:$0xf] %v411
  %444 = vst [vmem:[%s4 + $0x10] sm:$0xf] %v412
  %445 = vst [vmem:[%s4 + $0x14] sm:$0xf] %v413
  %446 = vst [vmem:[%s4 + $0x18] sm:$0xf] %v414
  %447 = vst [vmem:[%s4 + $0x1c] sm:$0xf] %v415
  %448 = vst [vmem:[%s4 + $0x20] sm:$0xf] %v416
  %449 = vst [vmem:[%s4 + $0x24] sm:$0xf] %v417
  %450 = vst [vmem:[%s4 + $0x28] sm:$0xf] %v418
  %451 = vst [vmem:[%s4 + $0x2c] sm:$0xf] %v419
  %452 = vst [vmem:[%s4 + $0x30] sm:$0xf] %v420
  %453 = vst [vmem:[%s4 + $0x34] sm:$0xf] %v421
  %454 = vst [vmem:[%s4 + $0x38] sm:$0xf] %v422
  %455 = vst [vmem:[%s4 + $0x3c] sm:$0xf] %v423
  // Predicated region
  $region18: #{efficientnet_model.8} parent=0 // pred_check
    _
  $region19: #{efficientnet_model.8} parent=0 // pred_check_branch
    %457 = sbr.rel (0) target = $region21
  $region20: #{efficientnet_model.8} parent=0 // pred_region
    _
  $region21: #{efficientnet_model.8} parent=0 // pred_fallthru
    _
  // Predicated region
  $region22: #{efficientnet_model.8} parent=0 // pred_check
    _
  $region23: #{efficientnet_model.8} parent=0 // pred_check_branch
    %459 = sbr.rel (0) target = $region25
  $region24: #{efficientnet_model.8} parent=0 // pred_region
    _
  $region25: #{efficientnet_model.8} parent=0 // pred_fallthru
    _

// kernel: efficientnet_model.10
$region0: #{efficientnet_model.10}
  #allocation0 [shape = 'u32[]', space=smem, size = 0x4, offset = 0x4, fixed_abs, tag = 'smem constant byte address 0x4 - core index']
  #allocation1 [shape = 'u32[144,128]{1,0:T(1,128)}', space=vmem, size = 0x12000, scoped, tag = 'internal scratch']
  %s0 = inlined_call_operand.vmem [shape: bf16[128,128], index: 0, kind: input, shape index: {}]
  %s1 = inlined_call_operand.vmem [shape: f32[2,1,128], index: 1, kind: input, shape index: {}]
  %s2 = inlined_call_operand.vmem [shape: bf16[128,128], index: 2, kind: input, shape index: {}]
  %s3 = inlined_call_operand.vmem [shape: f32[1,128], index: 3, kind: input, shape index: {}]
  %s4 = inlined_call_operand.vmem [shape: f32[1,128], index: 4, kind: input, shape index: {}]
  %s5 = inlined_call_operand.vmem [shape: bf16[128,128], index: 5, kind: input, shape index: {}]
  %s6 = inlined_call_operand.vmem [shape: bf16[128,128], index: 6, kind: output, shape index: {}]
  %s7 = sld [smem:[#allocation0]]
  $region57: #{efficientnet_model.10} parent=0
    _
  %s9 = ssub.s32 1, %s7
  %s10 = scalar_select 0, %s9, %s7
  loop: start=0, step=1, limit=4
  $region2: #{efficientnet_model.10} parent=0 // loop_pre_header
    _
  $region3: #{efficientnet_model.10} parent=0 // loop_header
    %s12 = sphi 0, %s16
    %p13 = scmp.ge.s32.totalorder %s12, 4
    %s19 = sphi 0, %s31
    %s20 = sphi 0, %s27
    %s21 = sphi 0, %s19
    %s22 = sphi 0, %s20
    %s23 = sphi 0, %s21
    %s24 = sphi 0, %s22
    %s36 = sphi 0, %s38
    %s39 = sphi 0, %s36
    %s40 = sphi 0, %s39
    %s56 = sphi 0, %s40
    %s62 = sphi 0, %s64
    %s65 = sphi 0, %s62
    %s66 = sphi 0, %s65
    %s82 = sphi 0, %s66
    %s86 = sphi 0, %s86
    %s88 = sphi 0, %s86
    %s89 = sphi 0, %s88
    %s103 = sphi 0, %s89
    %s107 = sphi 0, %s107
    %s109 = sphi 0, %s107
    %s110 = sphi 0, %s109
    %s124 = sphi 0, %s110
    %s128 = sphi 0, %s128
    %s130 = sphi 0, %s128
    %s131 = sphi 0, %s130
    %s145 = sphi 0, %s131
    %s153 = sphi 0, %s155
    %s156 = sphi 0, %s153
    %s157 = sphi 0, %s156
    %s173 = sphi 0, %s157
    %s181 = sphi 0, %s183
    %s184 = sphi 0, %s181
    %s185 = sphi 0, %s184
    %s201 = sphi 0, %s185
  $region4: #{efficientnet_model.10} parent=0 // loop_header_branch
    %15 = sbr.rel (%p13) target = $region8
  $region5: #{efficientnet_model.10} parent=0 // loop_body
    %s17 = ssub.s32 %s12, 1
    %s18 = ssub.s32 %s12, 2
    %s25 = sadd.s32 1, %s20
    %p26 = scmp.ge.s32.totalorder %s25, 1
    %s27 = scalar_select %p26, 0, %s25
    %s28 = sadd.s32 1, %s19
    %s29 = scalar_select %p26, %s28, %s19
    %p30 = scmp.ge.s32.totalorder %s29, 2
    %s31 = scalar_select %p30, 0, %s29
    %s32 = sadd.s32 %s19, %s20
    %s33 = sadd.s32 %s31, %s27
    %s34 = ssub.s32 %s32, %s33
    %p35 = scmp.eq.s32.totalorder %s34, 0
    %s37 = sadd.s32 %s36, 1
    %s38 = scalar_select %p35, %s36, %s37
    %p41 = pneg %p35
    %p42 = scmp.eq.s32.totalorder %s12, 1
    %p43 = por %p41, %p42
    %p44 = scmp.ne.s32.totalorder %s36, %s39
    %p45 = scmp.eq.s32.totalorder %s12, 0
    %p46 = por %p44, %p45
    %p47 = scmp.ne.s32.totalorder %s36, %s39
    %p48 = scmp.eq.s32.totalorder %s17, 1
    %p49 = por %p47, %p48
    %p50 = scmp.ne.s32.totalorder %s39, %s40
    %p51 = scmp.eq.s32.totalorder %s17, 0
    %p52 = por %p50, %p51
    %p53 = scmp.ne.s32.totalorder %s39, %s40
    %p54 = scmp.eq.s32.totalorder %s18, 1
    %p55 = por %p53, %p54
    %p57 = scmp.ne.s32.totalorder %s40, %s56
    %p58 = scmp.eq.s32.totalorder %s18, 0
    %p59 = por %p57, %p58
    %s60 = ssub.s32 %s19, %s31
    %p61 = scmp.eq.s32.totalorder %s60, 0
    %s63 = sadd.s32 %s62, 1
    %s64 = scalar_select %p61, %s62, %s63
    %p67 = pneg %p61
    %p68 = scmp.eq.s32.totalorder %s12, 1
    %p69 = por %p67, %p68
    %p70 = scmp.ne.s32.totalorder %s62, %s65
    %p71 = scmp.eq.s32.totalorder %s12, 0
    %p72 = por %p70, %p71
    %p73 = scmp.ne.s32.totalorder %s62, %s65
    %p74 = scmp.eq.s32.totalorder %s17, 1
    %p75 = por %p73, %p74
    %p76 = scmp.ne.s32.totalorder %s65, %s66
    %p77 = scmp.eq.s32.totalorder %s17, 0
    %p78 = por %p76, %p77
    %p79 = scmp.ne.s32.totalorder %s65, %s66
    %p80 = scmp.eq.s32.totalorder %s18, 1
    %p81 = por %p79, %p80
    %p83 = scmp.ne.s32.totalorder %s66, %s82
    %p84 = scmp.eq.s32.totalorder %s18, 0
    %p85 = por %p83, %p84
    %s87 = sadd.s32 %s86, 1
    %p90 = scmp.eq.s32.totalorder %s12, 1
    %p91 = scmp.ne.s32.totalorder %s86, %s88
    %p92 = scmp.eq.s32.totalorder %s12, 0
    %p93 = por %p91, %p92
    %p94 = scmp.ne.s32.totalorder %s86, %s88
    %p95 = scmp.eq.s32.totalorder %s17, 1
    %p96 = por %p94, %p95
    %p97 = scmp.ne.s32.totalorder %s88, %s89
    %p98 = scmp.eq.s32.totalorder %s17, 0
    %p99 = por %p97, %p98
    %p100 = scmp.ne.s32.totalorder %s88, %s89
    %p101 = scmp.eq.s32.totalorder %s18, 1
    %p102 = por %p100, %p101
    %p104 = scmp.ne.s32.totalorder %s89, %s103
    %p105 = scmp.eq.s32.totalorder %s18, 0
    %p106 = por %p104, %p105
    %s108 = sadd.s32 %s107, 1
    %p111 = scmp.eq.s32.totalorder %s12, 1
    %p112 = scmp.ne.s32.totalorder %s107, %s109
    %p113 = scmp.eq.s32.totalorder %s12, 0
    %p114 = por %p112, %p113
    %p115 = scmp.ne.s32.totalorder %s107, %s109
    %p116 = scmp.eq.s32.totalorder %s17, 1
    %p117 = por %p115, %p116
    %p118 = scmp.ne.s32.totalorder %s109, %s110
    %p119 = scmp.eq.s32.totalorder %s17, 0
    %p120 = por %p118, %p119
    %p121 = scmp.ne.s32.totalorder %s109, %s110
    %p122 = scmp.eq.s32.totalorder %s18, 1
    %p123 = por %p121, %p122
    %p125 = scmp.ne.s32.totalorder %s110, %s124
    %p126 = scmp.eq.s32.totalorder %s18, 0
    %p127 = por %p125, %p126
    %s129 = sadd.s32 %s128, 1
    %p132 = scmp.eq.s32.totalorder %s12, 1
    %p133 = scmp.ne.s32.totalorder %s128, %s130
    %p134 = scmp.eq.s32.totalorder %s12, 0
    %p135 = por %p133, %p134
    %p136 = scmp.ne.s32.totalorder %s128, %s130
    %p137 = scmp.eq.s32.totalorder %s17, 1
    %p138 = por %p136, %p137
    %p139 = scmp.ne.s32.totalorder %s130, %s131
    %p140 = scmp.eq.s32.totalorder %s17, 0
    %p141 = por %p139, %p140
    %p142 = scmp.ne.s32.totalorder %s130, %s131
    %p143 = scmp.eq.s32.totalorder %s18, 1
    %p144 = por %p142, %p143
    %p146 = scmp.ne.s32.totalorder %s131, %s145
    %p147 = scmp.eq.s32.totalorder %s18, 0
    %p148 = por %p146, %p147
    %s149 = sadd.s32 %s19, %s20
    %s150 = sadd.s32 %s31, %s27
    %s151 = ssub.s32 %s149, %s150
    %p152 = scmp.eq.s32.totalorder %s151, 0
    %s154 = sadd.s32 %s153, 1
    %s155 = scalar_select %p152, %s153, %s154
    %p158 = pneg %p152
    %p159 = scmp.eq.s32.totalorder %s12, 1
    %p160 = por %p158, %p159
    %p161 = scmp.ne.s32.totalorder %s153, %s156
    %p162 = scmp.eq.s32.totalorder %s12, 0
    %p163 = por %p161, %p162
    %p164 = scmp.ne.s32.totalorder %s153, %s156
    %p165 = scmp.eq.s32.totalorder %s17, 1
    %p166 = por %p164, %p165
    %p167 = scmp.ne.s32.totalorder %s156, %s157
    %p168 = scmp.eq.s32.totalorder %s17, 0
    %p169 = por %p167, %p168
    %p170 = scmp.ne.s32.totalorder %s156, %s157
    %p171 = scmp.eq.s32.totalorder %s18, 1
    %p172 = por %p170, %p171
    %p174 = scmp.ne.s32.totalorder %s157, %s173
    %p175 = scmp.eq.s32.totalorder %s18, 0
    %p176 = por %p174, %p175
    %s177 = sadd.s32 %s19, %s20
    %s178 = sadd.s32 %s31, %s27
    %s179 = ssub.s32 %s177, %s178
    %p180 = scmp.eq.s32.totalorder %s179, 0
    %s182 = sadd.s32 %s181, 1
    %s183 = scalar_select %p180, %s181, %s182
    %p186 = pneg %p180
    %p187 = scmp.eq.s32.totalorder %s12, 1
    %p188 = por %p186, %p187
    %p189 = scmp.ne.s32.totalorder %s181, %s184
    %p190 = scmp.eq.s32.totalorder %s12, 0
    %p191 = por %p189, %p190
    %p192 = scmp.ne.s32.totalorder %s181, %s184
    %p193 = scmp.eq.s32.totalorder %s17, 1
    %p194 = por %p192, %p193
    %p195 = scmp.ne.s32.totalorder %s184, %s185
    %p196 = scmp.eq.s32.totalorder %s17, 0
    %p197 = por %p195, %p196
    %p198 = scmp.ne.s32.totalorder %s184, %s185
    %p199 = scmp.eq.s32.totalorder %s18, 1
    %p200 = por %p198, %p199
    %p202 = scmp.ne.s32.totalorder %s185, %s201
    %p203 = scmp.eq.s32.totalorder %s18, 0
    %p204 = por %p202, %p203
    %p205 = scmp.le.s32.totalorder 1, %s12
    %p206 = scmp.lt.s32.totalorder %s12, 3
    %p207 = pnand %p205, %p206
    %p208 = pneg %p207
    // Predicated region
    $region9: #{efficientnet_model.10} parent=5 // pred_check
      _
    $region10: #{efficientnet_model.10} parent=5 // pred_check_branch
      %210 = sbr.rel (%p207) target = $region12
    $region11: #{efficientnet_model.10} parent=5 // pred_region
      %s211 = ssub.s32 %s12, 1
      // Predicated region
      $region13: #{efficientnet_model.10} parent=11 // pred_check
        %p212 = pneg %p99
      $region14: #{efficientnet_model.10} parent=11 // pred_check_branch
        %214 = sbr.rel (%p212) target = $region16
      $region15: #{efficientnet_model.10} parent=11 // pred_region
        _
      $region16: #{efficientnet_model.10} parent=11 // pred_fallthru
        _
      // Predicated region
      $region17: #{efficientnet_model.10} parent=11 // pred_check
        %p215 = pneg %p120
      $region18: #{efficientnet_model.10} parent=11 // pred_check_branch
        %217 = sbr.rel (%p215) target = $region20
      $region19: #{efficientnet_model.10} parent=11 // pred_region
        _
      $region20: #{efficientnet_model.10} parent=11 // pred_fallthru
        _
      // Predicated region
      $region21: #{efficientnet_model.10} parent=11 // pred_check
        %p218 = pneg %p141
      $region22: #{efficientnet_model.10} parent=11 // pred_check_branch
        %220 = sbr.rel (%p218) target = $region24
      $region23: #{efficientnet_model.10} parent=11 // pred_region
        _
      $region24: #{efficientnet_model.10} parent=11 // pred_fallthru
        _
    $region12: #{efficientnet_model.10} parent=5 // pred_fallthru
      _
    %p221 = scmp.lt.s32.totalorder %s12, 2
    // Predicated region
    $region25: #{efficientnet_model.10} parent=5 // pred_check
      %p222 = pneg %p221
    $region26: #{efficientnet_model.10} parent=5 // pred_check_branch
      %224 = sbr.rel (%p222) target = $region28
    $region27: #{efficientnet_model.10} parent=5 // pred_region
      // Predicated region
      $region29: #{efficientnet_model.10} parent=27 // pred_check
        %p225 = pneg %p46
      $region30: #{efficientnet_model.10} parent=27 // pred_check_branch
        %227 = sbr.rel (%p225) target = $region32
      $region31: #{efficientnet_model.10} parent=27 // pred_region
        %s228 = sadd.s32 %s19, %s20
        %s229 = smul.u32 8, %s228
        %p230 = scmp.lt.s32.totalorder %s229, 15
        %s231 = scalar_select %p230, %s229, 15
        %s232 = smul.addr %s231, 4
        %s233 = scalar_lea.vmem %s0, %s232
        %s234 = sadd.s32 %s19, %s20
        %s235 = smul.u32 8, %s234
      $region32: #{efficientnet_model.10} parent=27 // pred_fallthru
        _
      // Predicated region
      $region33: #{efficientnet_model.10} parent=27 // pred_check
        %p236 = pneg %p72
      $region34: #{efficientnet_model.10} parent=27 // pred_check_branch
        %238 = sbr.rel (%p236) target = $region36
      $region35: #{efficientnet_model.10} parent=27 // pred_region
        %p239 = scmp.lt.s32.totalorder %s19, 1
        %s240 = scalar_select %p239, %s19, 1
        %s241 = scalar_lea.vmem %s1, %s240
      $region36: #{efficientnet_model.10} parent=27 // pred_fallthru
        _
      // Predicated region
      $region37: #{efficientnet_model.10} parent=27 // pred_check
        %p242 = pneg %p163
      $region38: #{efficientnet_model.10} parent=27 // pred_check_branch
        %244 = sbr.rel (%p242) target = $region40
      $region39: #{efficientnet_model.10} parent=27 // pred_region
        %s245 = sadd.s32 %s19, %s20
        %s246 = smul.u32 8, %s245
        %p247 = scmp.lt.s32.totalorder %s246, 15
        %s248 = scalar_select %p247, %s246, 15
        %s249 = smul.addr %s248, 4
        %s250 = scalar_lea.vmem %s5, %s249
        %s251 = sadd.s32 %s19, %s20
        %s252 = smul.u32 8, %s251
      $region40: #{efficientnet_model.10} parent=27 // pred_fallthru
        _
    $region28: #{efficientnet_model.10} parent=5 // pred_fallthru
      _
    %p253 = scmp.le.s32.totalorder 1, %s12
    %p254 = scmp.lt.s32.totalorder %s12, 3
    %p255 = pnand %p253, %p254
    %p256 = pneg %p255
    // Predicated region
    $region41: #{efficientnet_model.10} parent=5 // pred_check
      _
    $region42: #{efficientnet_model.10} parent=5 // pred_check_branch
      %258 = sbr.rel (%p255) target = $region44
    $region43: #{efficientnet_model.10} parent=5 // pred_region
      %s259 = ssub.s32 %s12, 1
      %s260 = sadd.s32 %s21, %s22
      %s261 = smul.u32 8, %s260
      %p262 = scmp.lt.s32.totalorder %s261, 15
      %s263 = scalar_select %p262, %s261, 15
      %s264 = smul.addr %s263, 4
      %s265 = scalar_lea.vmem %s0, %s264
      %p266 = pneg %p52
      %p267 = pneg %p49
      %p268 = scmp.lt.s32.totalorder %s21, 1
      %s269 = scalar_select %p268, %s21, 1
      %s270 = scalar_lea.vmem %s1, %s269
      %p271 = pneg %p78
      %p272 = pneg %p75
      %p273 = pneg %p99
      %p274 = pneg %p96
      %p275 = pneg %p120
      %p276 = pneg %p117
      %p277 = pneg %p141
      %p278 = pneg %p138
      %s279 = sadd.s32 %s21, %s22
      %s280 = smul.u32 8, %s279
      %p281 = scmp.lt.s32.totalorder %s280, 15
      %s282 = scalar_select %p281, %s280, 15
      %s283 = smul.addr %s282, 4
      %s284 = scalar_lea.vmem %s5, %s283
      %p285 = pneg %p169
      %p286 = pneg %p166
      %p287 = pneg %p197
      %p288 = pneg %p194
      %s289 = sadd.s32 %s21, %s22
      %s290 = smul.u32 8, %s289
      %p291 = scmp.lt.s32.totalorder %s290, 15
      %s292 = scalar_select %p291, %s290, 15
      %s293 = smul.addr %s292, 4
      %s294 = scalar_lea.vmem %s6, %s293
      %s295 = sadd.s32 %s21, %s22
      %s296 = smul.u32 8, %s295
      %p297 = scmp.lt.s32.totalorder %s296, 15
      %s298 = scalar_select %p297, %s296, 15
      %s299 = smul.addr %s298, 4
      %s300 = scalar_lea.vmem %s0, %s299
      %s301 = sadd.s32 %s21, %s22
      %s302 = smul.u32 8, %s301
      %p303 = scmp.lt.s32.totalorder %s21, 1
      %s304 = scalar_select %p303, %s21, 1
      %s305 = scalar_lea.vmem %s1, %s304
      %s306 = sadd.s32 %s21, %s22
      %s307 = smul.u32 8, %s306
      %p308 = scmp.lt.s32.totalorder %s307, 15
      %s309 = scalar_select %p308, %s307, 15
      %s310 = smul.addr %s309, 4
      %s311 = scalar_lea.vmem %s5, %s310
      %s312 = sadd.s32 %s21, %s22
      %s313 = smul.u32 8, %s312
      %s314 = sadd.s32 %s21, %s22
      %s315 = smul.u32 8, %s314
      %p316 = scmp.lt.s32.totalorder %s315, 15
      %s317 = scalar_select %p316, %s315, 15
      %s318 = smul.addr %s317, 4
      %s319 = scalar_lea.vmem %s6, %s318
      %s320 = sadd.s32 %s21, %s22
      %s321 = smul.u32 8, %s320
      %v323 = vld [vmem:[%s305] sm:$0x1]
      %v324 = vld [vmem:[%s300] sm:$0xf]
      %v325 = vld [vmem:[%s300 + $0x4] sm:$0xf]
      %v326 = vld [vmem:[%s300 + $0x8] sm:$0xf]
      %v327 = vld [vmem:[%s300 + $0xc] sm:$0xf]
      %v328 = vld [vmem:[%s300 + $0x10] sm:$0xf]
      %v329 = vld [vmem:[%s300 + $0x14] sm:$0xf]
      %v330 = vld [vmem:[%s300 + $0x18] sm:$0xf]
      %v331 = vld [vmem:[%s300 + $0x1c] sm:$0xf]
      %v332 = vunpack.c.l.bf16 %v324
      %v333 = vunpack.c.l.bf16 %v325
      %v334 = vunpack.c.l.bf16 %v326
      %v335 = vunpack.c.l.bf16 %v327
      %v336 = vunpack.c.l.bf16 %v328
      %v337 = vunpack.c.l.bf16 %v329
      %v338 = vunpack.c.l.bf16 %v330
      %v339 = vunpack.c.l.bf16 %v331
      %v341 = vlaneseq
      %v342 = vshrl.u32 %v341, 7
      %v343 = vsub.s32 0, %v342
      %v344 = vrot.slane %v323, %v343
      %v346 = vmul.f32 %v332, %v344
      %v347 = vmul.f32 %v333, %v344
      %v348 = vmul.f32 %v334, %v344
      %v349 = vmul.f32 %v335, %v344
      %v350 = vmul.f32 %v336, %v344
      %v351 = vmul.f32 %v337, %v344
      %v352 = vmul.f32 %v338, %v344
      %v353 = vmul.f32 %v339, %v344
      %v354 = vpack.c.bf16 %v347, %v346
      %v355 = vpack.c.bf16 %v349, %v348
      %v356 = vpack.c.bf16 %v351, %v350
      %v357 = vpack.c.bf16 %v353, %v352
      %v358 = vld [vmem:[%s2] sm:$0xf]
      %v359 = vld [vmem:[%s2 + $0x4] sm:$0xf]
      %v360 = vld [vmem:[%s2 + $0x8] sm:$0xf]
      %v361 = vld [vmem:[%s2 + $0xc] sm:$0xf]
      %v362 = vld [vmem:[%s2 + $0x10] sm:$0xf]
      %v363 = vld [vmem:[%s2 + $0x14] sm:$0xf]
      %v364 = vld [vmem:[%s2 + $0x18] sm:$0xf]
      %v365 = vld [vmem:[%s2 + $0x1c] sm:$0xf]
      %v366 = vld [vmem:[%s2 + $0x20] sm:$0xf]
      %v367 = vld [vmem:[%s2 + $0x24] sm:$0xf]
      %v368 = vld [vmem:[%s2 + $0x28] sm:$0xf]
      %v369 = vld [vmem:[%s2 + $0x2c] sm:$0xf]
      %v370 = vld [vmem:[%s2 + $0x30] sm:$0xf]
      %v371 = vld [vmem:[%s2 + $0x34] sm:$0xf]
      %v372 = vld [vmem:[%s2 + $0x38] sm:$0xf]
      %v373 = vld [vmem:[%s2 + $0x3c] sm:$0xf]
      %v390 = vunpack.c.l.b16 %v358
      %v391 = vunpack.c.l.b16 %v359
      %v392 = vunpack.c.l.b16 %v360
      %v393 = vunpack.c.l.b16 %v361
      %v394 = vunpack.c.l.b16 %v362
      %v395 = vunpack.c.l.b16 %v363
      %v396 = vunpack.c.l.b16 %v364
      %v397 = vunpack.c.l.b16 %v365
      %v398 = vunpack.c.l.b16 %v366
      %v399 = vunpack.c.l.b16 %v367
      %v400 = vunpack.c.l.b16 %v368
      %v401 = vunpack.c.l.b16 %v369
      %v402 = vunpack.c.l.b16 %v370
      %v403 = vunpack.c.l.b16 %v371
      %v404 = vunpack.c.l.b16 %v372
      %v405 = vunpack.c.l.b16 %v373
      %v406 = vpack.c.b16 %v391, %v390
      %v407 = vpack.c.b16 %v393, %v392
      %v408 = vpack.c.b16 %v395, %v394
      %v409 = vpack.c.b16 %v397, %v396
      %v410 = vpack.c.b16 %v399, %v398
      %v411 = vpack.c.b16 %v401, %v400
      %v412 = vpack.c.b16 %v403, %v402
      %v413 = vpack.c.b16 %v405, %v404
      %422 = vmatprep.subr.bf16.mxu0 0
      %423 = vmatpush1.bf16.msra.mxu0 %v406
      %424 = vmatprep.subr.bf16.mxu0 0
      %425 = vmatpush1.bf16.msra.mxu0 %v407
      %426 = vmatprep.subr.bf16.mxu0 0
      %427 = vmatpush1.bf16.msra.mxu0 %v408
      %428 = vmatprep.subr.bf16.mxu0 0
      %429 = vmatpush1.bf16.msra.mxu0 %v409
      %430 = vmatprep.subr.bf16.mxu0 0
      %431 = vmatpush1.bf16.msra.mxu0 %v410
      %432 = vmatprep.subr.bf16.mxu0 0
      %433 = vmatpush1.bf16.msra.mxu0 %v411
      %434 = vmatprep.subr.bf16.mxu0 0
      %435 = vmatpush1.bf16.msra.mxu0 %v412
      %436 = vmatprep.subr.bf16.mxu0 0
      %437 = vmatpush1.bf16.msra.mxu0 %v413
      %438 = vmatprep.subr.bf16.mxu0 0
      %439 = vmatpush1.bf16.msra.mxu0 0
      %440 = vmatprep.subr.bf16.mxu0 0
      %441 = vmatpush1.bf16.msra.mxu0 0
      %442 = vmatprep.subr.bf16.mxu0 0
      %443 = vmatpush1.bf16.msra.mxu0 0
      %444 = vmatprep.subr.bf16.mxu0 0
      %445 = vmatpush1.bf16.msra.mxu0 0
      %446 = vmatprep.subr.bf16.mxu0 0
      %447 = vmatpush1.bf16.msra.mxu0 0
      %448 = vmatprep.subr.bf16.mxu0 0
      %449 = vmatpush1.bf16.msra.mxu0 0
      %450 = vmatprep.subr.bf16.mxu0 0
      %451 = vmatpush1.bf16.msra.mxu0 0
      %452 = vmatprep.subr.bf16.mxu0 0
      %453 = vmatpush1.bf16.msra.mxu0 0
      %454 = vmatprep.mubr.bf16.mxu0 0
      %455 = vmatmul.mubr.bf16.gmra.mrb[0].mxu0 %v354
      %v456 = vpop.f32.mrb[0].mxu0
      %v457 = vadd.f32 0.0, %v456
      %v458 = vpop.f32.mrb[0].mxu0
      %v459 = vpop.f32.mrb[0].mxu0
      %v460 = vadd.f32 0.0, %v459
      %v461 = vpop.f32.mrb[0].mxu0
      %462 = vmatprep.mubr.bf16.mxu0 0
      %463 = vmatmul.mubr.bf16.gmra.mrb[0].mxu0 %v355
      %v464 = vpop.f32.mrb[0].mxu0
      %v465 = vadd.f32 0.0, %v464
      %v466 = vpop.f32.mrb[0].mxu0
      %v467 = vpop.f32.mrb[0].mxu0
      %v468 = vadd.f32 0.0, %v467
      %v469 = vpop.f32.mrb[0].mxu0
      %470 = vmatprep.mubr.bf16.mxu0 0
      %471 = vmatmul.mubr.bf16.gmra.mrb[0].mxu0 %v356
      %v472 = vpop.f32.mrb[0].mxu0
      %v473 = vadd.f32 0.0, %v472
      %v474 = vpop.f32.mrb[0].mxu0
      %v475 = vpop.f32.mrb[0].mxu0
      %v476 = vadd.f32 0.0, %v475
      %v477 = vpop.f32.mrb[0].mxu0
      %478 = vmatprep.mubr.bf16.mxu0 0
      %479 = vmatmul.mubr.bf16.gmra.mrb[0].mxu0 %v357
      %v480 = vpop.f32.mrb[0].mxu0
      %v481 = vadd.f32 0.0, %v480
      %v482 = vpop.f32.mrb[0].mxu0
      %v483 = vpop.f32.mrb[0].mxu0
      %v484 = vadd.f32 0.0, %v483
      %v485 = vpop.f32.mrb[0].mxu0
      %486 = vdwg.mxu0
      %v487 = vld [vmem:[%s3] sm:$0x1]
      %v489 = vlaneseq
      %v490 = vshrl.u32 %v489, 7
      %v491 = vsub.s32 0, %v490
      %v492 = vrot.slane %v487, %v491
      %v494 = vmul.f32 %v457, %v492
      %v495 = vmul.f32 %v460, %v492
      %v496 = vmul.f32 %v465, %v492
      %v497 = vmul.f32 %v468, %v492
      %v498 = vmul.f32 %v473, %v492
      %v499 = vmul.f32 %v476, %v492
      %v500 = vmul.f32 %v481, %v492
      %v501 = vmul.f32 %v484, %v492
      %v502 = vld [vmem:[%s4] sm:$0x1]
      %v504 = vlaneseq
      %v505 = vshrl.u32 %v504, 7
      %v506 = vsub.s32 0, %v505
      %v507 = vrot.slane %v502, %v506
      %v509 = vadd.f32 %v494, %v507
      %v510 = vadd.f32 %v495, %v507
      %v511 = vadd.f32 %v496, %v507
      %v512 = vadd.f32 %v497, %v507
      %v513 = vadd.f32 %v498, %v507
      %v514 = vadd.f32 %v499, %v507
      %v515 = vadd.f32 %v500, %v507
      %v516 = vadd.f32 %v501, %v507
      %v517 = vld [vmem:[%s311] sm:$0xf]
      %v518 = vld [vmem:[%s311 + $0x4] sm:$0xf]
      %v519 = vld [vmem:[%s311 + $0x8] sm:$0xf]
      %v520 = vld [vmem:[%s311 + $0xc] sm:$0xf]
      %v521 = vld [vmem:[%s311 + $0x10] sm:$0xf]
      %v522 = vld [vmem:[%s311 + $0x14] sm:$0xf]
      %v523 = vld [vmem:[%s311 + $0x18] sm:$0xf]
      %v524 = vld [vmem:[%s311 + $0x1c] sm:$0xf]
      %v525 = vunpack.c.l.bf16 %v517
      %v526 = vunpack.c.l.bf16 %v518
      %v527 = vunpack.c.l.bf16 %v519
      %v528 = vunpack.c.l.bf16 %v520
      %v529 = vunpack.c.l.bf16 %v521
      %v530 = vunpack.c.l.bf16 %v522
      %v531 = vunpack.c.l.bf16 %v523
      %v532 = vunpack.c.l.bf16 %v524
      %v533 = vadd.f32 %v509, %v525
      %v534 = vadd.f32 %v510, %v526
      %v535 = vadd.f32 %v511, %v527
      %v536 = vadd.f32 %v512, %v528
      %v537 = vadd.f32 %v513, %v529
      %v538 = vadd.f32 %v514, %v530
      %v539 = vadd.f32 %v515, %v531
      %v540 = vadd.f32 %v516, %v532
      %v541 = vpack.c.bf16 %v534, %v533
      %v542 = vpack.c.bf16 %v536, %v535
      %v543 = vpack.c.bf16 %v538, %v537
      %v544 = vpack.c.bf16 %v540, %v539
      %v549 = vunpack.c.l.b16 %v541
      %v550 = vunpack.c.h.b16 %v541
      %v551 = vunpack.c.l.b16 %v542
      %v552 = vunpack.c.h.b16 %v542
      %v553 = vunpack.c.l.b16 %v543
      %v554 = vunpack.c.h.b16 %v543
      %v555 = vunpack.c.l.b16 %v544
      %v556 = vunpack.c.h.b16 %v544
      %v557 = vpack.c.b16 %v549, %v549
      %v558 = vpack.c.b16 %v550, %v550
      %v559 = vpack.c.b16 %v551, %v551
      %v560 = vpack.c.b16 %v552, %v552
      %v561 = vpack.c.b16 %v553, %v553
      %v562 = vpack.c.b16 %v554, %v554
      %v563 = vpack.c.b16 %v555, %v555
      %v564 = vpack.c.b16 %v556, %v556
      %573 = vst [vmem:[%s319] sm:$0xf] %v557
      %574 = vst [vmem:[%s319 + $0x4] sm:$0xf] %v558
      %575 = vst [vmem:[%s319 + $0x8] sm:$0xf] %v559
      %576 = vst [vmem:[%s319 + $0xc] sm:$0xf] %v560
      %577 = vst [vmem:[%s319 + $0x10] sm:$0xf] %v561
      %578 = vst [vmem:[%s319 + $0x14] sm:$0xf] %v562
      %579 = vst [vmem:[%s319 + $0x18] sm:$0xf] %v563
      %580 = vst [vmem:[%s319 + $0x1c] sm:$0xf] %v564
      %s581 = sadd.s32 %s21, %s22
      %s582 = smul.u32 8, %s581
      %p583 = scmp.lt.s32.totalorder %s582, 15
      %s584 = scalar_select %p583, %s582, 15
      %s585 = smul.addr %s584, 4
      %s586 = scalar_lea.vmem %s6, %s585
      // Predicated region
      $region45: #{efficientnet_model.10} parent=43 // pred_check
        %p587 = pneg %p194
      $region46: #{efficientnet_model.10} parent=43 // pred_check_branch
        %589 = sbr.rel (%p587) target = $region48
      $region47: #{efficientnet_model.10} parent=43 // pred_region
        %s590 = sadd.s32 %s21, %s22
        %s591 = smul.u32 8, %s590
      $region48: #{efficientnet_model.10} parent=43 // pred_fallthru
        _
    $region44: #{efficientnet_model.10} parent=5 // pred_fallthru
      _
    %p592 = scmp.le.s32.totalorder 2, %s12
    // Predicated region
    $region49: #{efficientnet_model.10} parent=5 // pred_check
      %p593 = pneg %p592
    $region50: #{efficientnet_model.10} parent=5 // pred_check_branch
      %595 = sbr.rel (%p593) target = $region52
    $region51: #{efficientnet_model.10} parent=5 // pred_region
      %s596 = ssub.s32 %s12, 2
      // Predicated region
      $region53: #{efficientnet_model.10} parent=51 // pred_check
        %p597 = pneg %p200
      $region54: #{efficientnet_model.10} parent=51 // pred_check_branch
        %599 = sbr.rel (%p597) target = $region56
      $region55: #{efficientnet_model.10} parent=51 // pred_region
        %s600 = sadd.s32 %s23, %s24
        %s601 = smul.u32 8, %s600
        %p602 = scmp.lt.s32.totalorder %s601, 15
        %s603 = scalar_select %p602, %s601, 15
        %s604 = smul.addr %s603, 4
        %s605 = scalar_lea.vmem %s6, %s604
      $region56: #{efficientnet_model.10} parent=51 // pred_fallthru
        _
    $region52: #{efficientnet_model.10} parent=5 // pred_fallthru
      _
  $region6: #{efficientnet_model.10} parent=0 // loop_footer
    %s16 = sadd.s32 1, %s12
  $region7: #{efficientnet_model.10} parent=0 // loop_footer_branch
    %11 = sbr.rel target = $region3
  $region8: #{efficientnet_model.10} parent=0 // loop_exit
    _

// kernel: efficientnet_model.11
$region0: #{efficientnet_model.11}
  #allocation0 [shape = 'u32[]', space=smem, size = 0x4, offset = 0x4, fixed_abs, tag = 'smem constant byte address 0x4 - core index']
  #allocation1 [shape = 'u32[144,128]{1,0:T(1,128)}', space=vmem, size = 0x12000, scoped, tag = 'internal scratch']
  %s0 = inlined_call_operand.vmem [shape: bf16[128,128], index: 0, kind: input, shape index: {}]
  %s1 = inlined_call_operand.vmem [shape: bf16[128,128], index: 1, kind: input, shape index: {}]
  %s2 = inlined_call_operand.vmem [shape: f32[1,128], index: 2, kind: input, shape index: {}]
  %s3 = inlined_call_operand.vmem [shape: f32[1,128], index: 3, kind: input, shape index: {}]
  %s4 = inlined_call_operand.vmem [shape: bf16[128,128], index: 4, kind: output, shape index: {}]
  %s5 = sld [smem:[#allocation0]]
  $region26: #{efficientnet_model.11} parent=0
    _
  %s7 = ssub.s32 1, %s5
  %s8 = scalar_select 0, %s7, %s5
  // Predicated region
  $region2: #{efficientnet_model.11} parent=0 // pred_check
    _
  $region3: #{efficientnet_model.11} parent=0 // pred_check_branch
    %10 = sbr.rel (0) target = $region5
  $region4: #{efficientnet_model.11} parent=0 // pred_region
    _
  $region5: #{efficientnet_model.11} parent=0 // pred_fallthru
    _
  // Predicated region
  $region6: #{efficientnet_model.11} parent=0 // pred_check
    _
  $region7: #{efficientnet_model.11} parent=0 // pred_check_branch
    %12 = sbr.rel (0) target = $region9
  $region8: #{efficientnet_model.11} parent=0 // pred_region
    _
  $region9: #{efficientnet_model.11} parent=0 // pred_fallthru
    _
  // Predicated region
  $region10: #{efficientnet_model.11} parent=0 // pred_check
    _
  $region11: #{efficientnet_model.11} parent=0 // pred_check_branch
    %14 = sbr.rel (0) target = $region13
  $region12: #{efficientnet_model.11} parent=0 // pred_region
    _
  $region13: #{efficientnet_model.11} parent=0 // pred_fallthru
    _
  // Predicated region
  $region14: #{efficientnet_model.11} parent=0 // pred_check
    _
  $region15: #{efficientnet_model.11} parent=0 // pred_check_branch
    %16 = sbr.rel (0) target = $region17
  $region16: #{efficientnet_model.11} parent=0 // pred_region
    _
  $region17: #{efficientnet_model.11} parent=0 // pred_fallthru
    _
  %v18 = vld [vmem:[%s0] sm:$0xf]
  %v19 = vld [vmem:[%s0 + $0x4] sm:$0xf]
  %v20 = vld [vmem:[%s0 + $0x8] sm:$0xf]
  %v21 = vld [vmem:[%s0 + $0xc] sm:$0xf]
  %v22 = vld [vmem:[%s0 + $0x10] sm:$0xf]
  %v23 = vld [vmem:[%s0 + $0x14] sm:$0xf]
  %v24 = vld [vmem:[%s0 + $0x18] sm:$0xf]
  %v25 = vld [vmem:[%s0 + $0x1c] sm:$0xf]
  %v26 = vld [vmem:[%s0 + $0x20] sm:$0xf]
  %v27 = vld [vmem:[%s0 + $0x24] sm:$0xf]
  %v28 = vld [vmem:[%s0 + $0x28] sm:$0xf]
  %v29 = vld [vmem:[%s0 + $0x2c] sm:$0xf]
  %v30 = vld [vmem:[%s0 + $0x30] sm:$0xf]
  %v31 = vld [vmem:[%s0 + $0x34] sm:$0xf]
  %v32 = vld [vmem:[%s0 + $0x38] sm:$0xf]
  %v33 = vld [vmem:[%s0 + $0x3c] sm:$0xf]
  %v34 = vld [vmem:[%s1] sm:$0xf]
  %v35 = vld [vmem:[%s1 + $0x4] sm:$0xf]
  %v36 = vld [vmem:[%s1 + $0x8] sm:$0xf]
  %v37 = vld [vmem:[%s1 + $0xc] sm:$0xf]
  %v38 = vld [vmem:[%s1 + $0x10] sm:$0xf]
  %v39 = vld [vmem:[%s1 + $0x14] sm:$0xf]
  %v40 = vld [vmem:[%s1 + $0x18] sm:$0xf]
  %v41 = vld [vmem:[%s1 + $0x1c] sm:$0xf]
  %v42 = vld [vmem:[%s1 + $0x20] sm:$0xf]
  %v43 = vld [vmem:[%s1 + $0x24] sm:$0xf]
  %v44 = vld [vmem:[%s1 + $0x28] sm:$0xf]
  %v45 = vld [vmem:[%s1 + $0x2c] sm:$0xf]
  %v46 = vld [vmem:[%s1 + $0x30] sm:$0xf]
  %v47 = vld [vmem:[%s1 + $0x34] sm:$0xf]
  %v48 = vld [vmem:[%s1 + $0x38] sm:$0xf]
  %v49 = vld [vmem:[%s1 + $0x3c] sm:$0xf]
  %v66 = vunpack.c.l.b16 %v18
  %v67 = vunpack.c.l.b16 %v19
  %v68 = vunpack.c.l.b16 %v20
  %v69 = vunpack.c.l.b16 %v21
  %v70 = vunpack.c.l.b16 %v22
  %v71 = vunpack.c.l.b16 %v23
  %v72 = vunpack.c.l.b16 %v24
  %v73 = vunpack.c.l.b16 %v25
  %v74 = vunpack.c.l.b16 %v26
  %v75 = vunpack.c.l.b16 %v27
  %v76 = vunpack.c.l.b16 %v28
  %v77 = vunpack.c.l.b16 %v29
  %v78 = vunpack.c.l.b16 %v30
  %v79 = vunpack.c.l.b16 %v31
  %v80 = vunpack.c.l.b16 %v32
  %v81 = vunpack.c.l.b16 %v33
  %v82 = vpack.c.b16 %v67, %v66
  %v83 = vpack.c.b16 %v69, %v68
  %v84 = vpack.c.b16 %v71, %v70
  %v85 = vpack.c.b16 %v73, %v72
  %v86 = vpack.c.b16 %v75, %v74
  %v87 = vpack.c.b16 %v77, %v76
  %v88 = vpack.c.b16 %v79, %v78
  %v89 = vpack.c.b16 %v81, %v80
  %v114 = vunpack.c.l.b16 %v34
  %v115 = vunpack.c.l.b16 %v35
  %v116 = vunpack.c.l.b16 %v36
  %v117 = vunpack.c.l.b16 %v37
  %v118 = vunpack.c.l.b16 %v38
  %v119 = vunpack.c.l.b16 %v39
  %v120 = vunpack.c.l.b16 %v40
  %v121 = vunpack.c.l.b16 %v41
  %v122 = vunpack.c.l.b16 %v42
  %v123 = vunpack.c.l.b16 %v43
  %v124 = vunpack.c.l.b16 %v44
  %v125 = vunpack.c.l.b16 %v45
  %v126 = vunpack.c.l.b16 %v46
  %v127 = vunpack.c.l.b16 %v47
  %v128 = vunpack.c.l.b16 %v48
  %v129 = vunpack.c.l.b16 %v49
  %v130 = vpack.c.b16 %v115, %v114
  %v131 = vpack.c.b16 %v117, %v116
  %v132 = vpack.c.b16 %v119, %v118
  %v133 = vpack.c.b16 %v121, %v120
  %v134 = vpack.c.b16 %v123, %v122
  %v135 = vpack.c.b16 %v125, %v124
  %v136 = vpack.c.b16 %v127, %v126
  %v137 = vpack.c.b16 %v129, %v128
  %146 = vmatprep.subr.bf16.mxu0 0
  %147 = vmatpush1.bf16.msra.mxu0 %v130
  %148 = vmatprep.subr.bf16.mxu0 0
  %149 = vmatpush1.bf16.msra.mxu0 %v131
  %150 = vmatprep.subr.bf16.mxu0 0
  %151 = vmatpush1.bf16.msra.mxu0 %v132
  %152 = vmatprep.subr.bf16.mxu0 0
  %153 = vmatpush1.bf16.msra.mxu0 %v133
  %154 = vmatprep.subr.bf16.mxu0 0
  %155 = vmatpush1.bf16.msra.mxu0 %v134
  %156 = vmatprep.subr.bf16.mxu0 0
  %157 = vmatpush1.bf16.msra.mxu0 %v135
  %158 = vmatprep.subr.bf16.mxu0 0
  %159 = vmatpush1.bf16.msra.mxu0 %v136
  %160 = vmatprep.subr.bf16.mxu0 0
  %161 = vmatpush1.bf16.msra.mxu0 %v137
  %162 = vmatprep.subr.bf16.mxu0 0
  %163 = vmatpush1.bf16.msra.mxu0 0
  %164 = vmatprep.subr.bf16.mxu0 0
  %165 = vmatpush1.bf16.msra.mxu0 0
  %166 = vmatprep.subr.bf16.mxu0 0
  %167 = vmatpush1.bf16.msra.mxu0 0
  %168 = vmatprep.subr.bf16.mxu0 0
  %169 = vmatpush1.bf16.msra.mxu0 0
  %170 = vmatprep.subr.bf16.mxu0 0
  %171 = vmatpush1.bf16.msra.mxu0 0
  %172 = vmatprep.subr.bf16.mxu0 0
  %173 = vmatpush1.bf16.msra.mxu0 0
  %174 = vmatprep.subr.bf16.mxu0 0
  %175 = vmatpush1.bf16.msra.mxu0 0
  %176 = vmatprep.subr.bf16.mxu0 0
  %177 = vmatpush1.bf16.msra.mxu0 0
  %178 = vmatprep.mubr.bf16.mxu0 0
  %179 = vmatmul.mubr.bf16.gmra.mrb[0].mxu0 %v82
  %v180 = vpop.f32.mrb[0].mxu0
  %v181 = vadd.f32 0.0, %v180
  %v182 = vpop.f32.mrb[0].mxu0
  %v183 = vpop.f32.mrb[0].mxu0
  %v184 = vadd.f32 0.0, %v183
  %v185 = vpop.f32.mrb[0].mxu0
  %186 = vmatprep.mubr.bf16.mxu0 0
  %187 = vmatmul.mubr.bf16.gmra.mrb[0].mxu0 %v83
  %v188 = vpop.f32.mrb[0].mxu0
  %v189 = vadd.f32 0.0, %v188
  %v190 = vpop.f32.mrb[0].mxu0
  %v191 = vpop.f32.mrb[0].mxu0
  %v192 = vadd.f32 0.0, %v191
  %v193 = vpop.f32.mrb[0].mxu0
  %194 = vmatprep.mubr.bf16.mxu0 0
  %195 = vmatmul.mubr.bf16.gmra.mrb[0].mxu0 %v84
  %v196 = vpop.f32.mrb[0].mxu0
  %v197 = vadd.f32 0.0, %v196
  %v198 = vpop.f32.mrb[0].mxu0
  %v199 = vpop.f32.mrb[0].mxu0
  %v200 = vadd.f32 0.0, %v199
  %v201 = vpop.f32.mrb[0].mxu0
  %202 = vmatprep.mubr.bf16.mxu0 0
  %203 = vmatmul.mubr.bf16.gmra.mrb[0].mxu0 %v85
  %v204 = vpop.f32.mrb[0].mxu0
  %v205 = vadd.f32 0.0, %v204
  %v206 = vpop.f32.mrb[0].mxu0
  %v207 = vpop.f32.mrb[0].mxu0
  %v208 = vadd.f32 0.0, %v207
  %v209 = vpop.f32.mrb[0].mxu0
  %210 = vmatprep.mubr.bf16.mxu0 0
  %211 = vmatmul.mubr.bf16.gmra.mrb[0].mxu0 %v86
  %v212 = vpop.f32.mrb[0].mxu0
  %v213 = vadd.f32 0.0, %v212
  %v214 = vpop.f32.mrb[0].mxu0
  %v215 = vpop.f32.mrb[0].mxu0
  %v216 = vadd.f32 0.0, %v215
  %v217 = vpop.f32.mrb[0].mxu0
  %218 = vmatprep.mubr.bf16.mxu0 0
  %219 = vmatmul.mubr.bf16.gmra.mrb[0].mxu0 %v87
  %v220 = vpop.f32.mrb[0].mxu0
  %v221 = vadd.f32 0.0, %v220
  %v222 = vpop.f32.mrb[0].mxu0
  %v223 = vpop.f32.mrb[0].mxu0
  %v224 = vadd.f32 0.0, %v223
  %v225 = vpop.f32.mrb[0].mxu0
  %226 = vmatprep.mubr.bf16.mxu0 0
  %227 = vmatmul.mubr.bf16.gmra.mrb[0].mxu0 %v88
  %v228 = vpop.f32.mrb[0].mxu0
  %v229 = vadd.f32 0.0, %v228
  %v230 = vpop.f32.mrb[0].mxu0
  %v231 = vpop.f32.mrb[0].mxu0
  %v232 = vadd.f32 0.0, %v231
  %v233 = vpop.f32.mrb[0].mxu0
  %234 = vmatprep.mubr.bf16.mxu0 0
  %235 = vmatmul.mubr.bf16.gmra.mrb[0].mxu0 %v89
  %v236 = vpop.f32.mrb[0].mxu0
  %v237 = vadd.f32 0.0, %v236
  %v238 = vpop.f32.mrb[0].mxu0
  %v239 = vpop.f32.mrb[0].mxu0
  %v240 = vadd.f32 0.0, %v239
  %v241 = vpop.f32.mrb[0].mxu0
  %242 = vdwg.mxu0
  %v243 = vld [vmem:[%s2] sm:$0x1]
  %v245 = vlaneseq
  %v246 = vshrl.u32 %v245, 7
  %v247 = vsub.s32 0, %v246
  %v248 = vrot.slane %v243, %v247
  %v250 = vmul.f32 %v181, %v248
  %v251 = vmul.f32 %v184, %v248
  %v252 = vmul.f32 %v189, %v248
  %v253 = vmul.f32 %v192, %v248
  %v254 = vmul.f32 %v197, %v248
  %v255 = vmul.f32 %v200, %v248
  %v256 = vmul.f32 %v205, %v248
  %v257 = vmul.f32 %v208, %v248
  %v258 = vmul.f32 %v213, %v248
  %v259 = vmul.f32 %v216, %v248
  %v260 = vmul.f32 %v221, %v248
  %v261 = vmul.f32 %v224, %v248
  %v262 = vmul.f32 %v229, %v248
  %v263 = vmul.f32 %v232, %v248
  %v264 = vmul.f32 %v237, %v248
  %v265 = vmul.f32 %v240, %v248
  %v266 = vld [vmem:[%s3] sm:$0x1]
  %v268 = vlaneseq
  %v269 = vshrl.u32 %v268, 7
  %v270 = vsub.s32 0, %v269
  %v271 = vrot.slane %v266, %v270
  %v273 = vadd.f32 %v250, %v271
  %v274 = vadd.f32 %v251, %v271
  %v275 = vadd.f32 %v252, %v271
  %v276 = vadd.f32 %v253, %v271
  %v277 = vadd.f32 %v254, %v271
  %v278 = vadd.f32 %v255, %v271
  %v279 = vadd.f32 %v256, %v271
  %v280 = vadd.f32 %v257, %v271
  %v281 = vadd.f32 %v258, %v271
  %v282 = vadd.f32 %v259, %v271
  %v283 = vadd.f32 %v260, %v271
  %v284 = vadd.f32 %v261, %v271
  %v285 = vadd.f32 %v262, %v271
  %v286 = vadd.f32 %v263, %v271
  %v287 = vadd.f32 %v264, %v271
  %v288 = vadd.f32 %v265, %v271
  %v289 = vxor.u32 %v273, 2147483648
  %v290 = vxor.u32 %v274, 2147483648
  %v291 = vxor.u32 %v275, 2147483648
  %v292 = vxor.u32 %v276, 2147483648
  %v293 = vxor.u32 %v277, 2147483648
  %v294 = vxor.u32 %v278, 2147483648
  %v295 = vxor.u32 %v279, 2147483648
  %v296 = vxor.u32 %v280, 2147483648
  %v297 = vxor.u32 %v281, 2147483648
  %v298 = vxor.u32 %v282, 2147483648
  %v299 = vxor.u32 %v283, 2147483648
  %v300 = vxor.u32 %v284, 2147483648
  %v301 = vxor.u32 %v285, 2147483648
  %v302 = vxor.u32 %v286, 2147483648
  %v303 = vxor.u32 %v287, 2147483648
  %v304 = vxor.u32 %v288, 2147483648
  %v305 = vmul.f32 %v289, 1.442695
  %v306 = vpow.pop %v305
  %v307 = vmul.f32 %v290, 1.442695
  %v308 = vpow.pop %v307
  %v309 = vmul.f32 %v291, 1.442695
  %v310 = vpow.pop %v309
  %v311 = vmul.f32 %v292, 1.442695
  %v312 = vpow.pop %v311
  %v313 = vmul.f32 %v293, 1.442695
  %v314 = vpow.pop %v313
  %v315 = vmul.f32 %v294, 1.442695
  %v316 = vpow.pop %v315
  %v317 = vmul.f32 %v295, 1.442695
  %v318 = vpow.pop %v317
  %v319 = vmul.f32 %v296, 1.442695
  %v320 = vpow.pop %v319
  %v321 = vmul.f32 %v297, 1.442695
  %v322 = vpow.pop %v321
  %v323 = vmul.f32 %v298, 1.442695
  %v324 = vpow.pop %v323
  %v325 = vmul.f32 %v299, 1.442695
  %v326 = vpow.pop %v325
  %v327 = vmul.f32 %v300, 1.442695
  %v328 = vpow.pop %v327
  %v329 = vmul.f32 %v301, 1.442695
  %v330 = vpow.pop %v329
  %v331 = vmul.f32 %v302, 1.442695
  %v332 = vpow.pop %v331
  %v333 = vmul.f32 %v303, 1.442695
  %v334 = vpow.pop %v333
  %v335 = vmul.f32 %v304, 1.442695
  %v336 = vpow.pop %v335
  %v337 = vadd.f32 %v306, 1.0
  %v338 = vadd.f32 %v308, 1.0
  %v339 = vadd.f32 %v310, 1.0
  %v340 = vadd.f32 %v312, 1.0
  %v341 = vadd.f32 %v314, 1.0
  %v342 = vadd.f32 %v316, 1.0
  %v343 = vadd.f32 %v318, 1.0
  %v344 = vadd.f32 %v320, 1.0
  %v345 = vadd.f32 %v322, 1.0
  %v346 = vadd.f32 %v324, 1.0
  %v347 = vadd.f32 %v326, 1.0
  %v348 = vadd.f32 %v328, 1.0
  %v349 = vadd.f32 %v330, 1.0
  %v350 = vadd.f32 %v332, 1.0
  %v351 = vadd.f32 %v334, 1.0
  %v352 = vadd.f32 %v336, 1.0
  %v353 = vrcp.pop %v337
  %v354 = vmul.f32 1.0, %v353
  %v355 = vrcp.pop %v338
  %v356 = vmul.f32 1.0, %v355
  %v357 = vrcp.pop %v339
  %v358 = vmul.f32 1.0, %v357
  %v359 = vrcp.pop %v340
  %v360 = vmul.f32 1.0, %v359
  %v361 = vrcp.pop %v341
  %v362 = vmul.f32 1.0, %v361
  %v363 = vrcp.pop %v342
  %v364 = vmul.f32 1.0, %v363
  %v365 = vrcp.pop %v343
  %v366 = vmul.f32 1.0, %v365
  %v367 = vrcp.pop %v344
  %v368 = vmul.f32 1.0, %v367
  %v369 = vrcp.pop %v345
  %v370 = vmul.f32 1.0, %v369
  %v371 = vrcp.pop %v346
  %v372 = vmul.f32 1.0, %v371
  %v373 = vrcp.pop %v347
  %v374 = vmul.f32 1.0, %v373
  %v375 = vrcp.pop %v348
  %v376 = vmul.f32 1.0, %v375
  %v377 = vrcp.pop %v349
  %v378 = vmul.f32 1.0, %v377
  %v379 = vrcp.pop %v350
  %v380 = vmul.f32 1.0, %v379
  %v381 = vrcp.pop %v351
  %v382 = vmul.f32 1.0, %v381
  %v383 = vrcp.pop %v352
  %v384 = vmul.f32 1.0, %v383
  %v385 = vmul.f32 %v273, %v354
  %v386 = vmul.f32 %v274, %v356
  %v387 = vmul.f32 %v275, %v358
  %v388 = vmul.f32 %v276, %v360
  %v389 = vmul.f32 %v277, %v362
  %v390 = vmul.f32 %v278, %v364
  %v391 = vmul.f32 %v279, %v366
  %v392 = vmul.f32 %v280, %v368
  %v393 = vmul.f32 %v281, %v370
  %v394 = vmul.f32 %v282, %v372
  %v395 = vmul.f32 %v283, %v374
  %v396 = vmul.f32 %v284, %v376
  %v397 = vmul.f32 %v285, %v378
  %v398 = vmul.f32 %v286, %v380
  %v399 = vmul.f32 %v287, %v382
  %v400 = vmul.f32 %v288, %v384
  %v401 = vpack.c.bf16 %v386, %v385
  %v402 = vpack.c.bf16 %v388, %v387
  %v403 = vpack.c.bf16 %v390, %v389
  %v404 = vpack.c.bf16 %v392, %v391
  %v405 = vpack.c.bf16 %v394, %v393
  %v406 = vpack.c.bf16 %v396, %v395
  %v407 = vpack.c.bf16 %v398, %v397
  %v408 = vpack.c.bf16 %v400, %v399
  %v417 = vunpack.c.l.b16 %v401
  %v418 = vunpack.c.h.b16 %v401
  %v419 = vunpack.c.l.b16 %v402
  %v420 = vunpack.c.h.b16 %v402
  %v421 = vunpack.c.l.b16 %v403
  %v422 = vunpack.c.h.b16 %v403
  %v423 = vunpack.c.l.b16 %v404
  %v424 = vunpack.c.h.b16 %v404
  %v425 = vunpack.c.l.b16 %v405
  %v426 = vunpack.c.h.b16 %v405
  %v427 = vunpack.c.l.b16 %v406
  %v428 = vunpack.c.h.b16 %v406
  %v429 = vunpack.c.l.b16 %v407
  %v430 = vunpack.c.h.b16 %v407
  %v431 = vunpack.c.l.b16 %v408
  %v432 = vunpack.c.h.b16 %v408
  %v433 = vpack.c.b16 %v417, %v417
  %v434 = vpack.c.b16 %v418, %v418
  %v435 = vpack.c.b16 %v419, %v419
  %v436 = vpack.c.b16 %v420, %v420
  %v437 = vpack.c.b16 %v421, %v421
  %v438 = vpack.c.b16 %v422, %v422
  %v439 = vpack.c.b16 %v423, %v423
  %v440 = vpack.c.b16 %v424, %v424
  %v441 = vpack.c.b16 %v425, %v425
  %v442 = vpack.c.b16 %v426, %v426
  %v443 = vpack.c.b16 %v427, %v427
  %v444 = vpack.c.b16 %v428, %v428
  %v445 = vpack.c.b16 %v429, %v429
  %v446 = vpack.c.b16 %v430, %v430
  %v447 = vpack.c.b16 %v431, %v431
  %v448 = vpack.c.b16 %v432, %v432
  %465 = vst [vmem:[%s4] sm:$0xf] %v433
  %466 = vst [vmem:[%s4 + $0x4] sm:$0xf] %v434
  %467 = vst [vmem:[%s4 + $0x8] sm:$0xf] %v435
  %468 = vst [vmem:[%s4 + $0xc] sm:$0xf] %v436
  %469 = vst [vmem:[%s4 + $0x10] sm:$0xf] %v437
  %470 = vst [vmem:[%s4 + $0x14] sm:$0xf] %v438
  %471 = vst [vmem:[%s4 + $0x18] sm:$0xf] %v439
  %472 = vst [vmem:[%s4 + $0x1c] sm:$0xf] %v440
  %473 = vst [vmem:[%s4 + $0x20] sm:$0xf] %v441
  %474 = vst [vmem:[%s4 + $0x24] sm:$0xf] %v442
  %475 = vst [vmem:[%s4 + $0x28] sm:$0xf] %v443
  %476 = vst [vmem:[%s4 + $0x2c] sm:$0xf] %v444
  %477 = vst [vmem:[%s4 + $0x30] sm:$0xf] %v445
  %478 = vst [vmem:[%s4 + $0x34] sm:$0xf] %v446
  %479 = vst [vmem:[%s4 + $0x38] sm:$0xf] %v447
  %480 = vst [vmem:[%s4 + $0x3c] sm:$0xf] %v448
  // Predicated region
  $region18: #{efficientnet_model.11} parent=0 // pred_check
    _
  $region19: #{efficientnet_model.11} parent=0 // pred_check_branch
    %482 = sbr.rel (0) target = $region21
  $region20: #{efficientnet_model.11} parent=0 // pred_region
    _
  $region21: #{efficientnet_model.11} parent=0 // pred_fallthru
    _
  // Predicated region
  $region22: #{efficientnet_model.11} parent=0 // pred_check
    _
  $region23: #{efficientnet_model.11} parent=0 // pred_check_branch
    %484 = sbr.rel (0) target = $region25
  $region24: #{efficientnet_model.11} parent=0 // pred_region
    _
  $region25: #{efficientnet_model.11} parent=0 // pred_fallthru
    _

// kernel: efficientnet_model.9
$region0: #{efficientnet_model.9}
  #allocation0 [shape = 'u32[]', space=smem, size = 0x4, offset = 0x4, fixed_abs, tag = 'smem constant byte address 0x4 - core index']
  #allocation1 [shape = 'u32[144,128]{1,0:T(1,128)}', space=vmem, size = 0x12000, scoped, tag = 'internal scratch']
  %s0 = inlined_call_operand.vmem [shape: bf16[9,128,128], index: 0, kind: input, shape index: {}]
  %s1 = inlined_call_operand.vmem [shape: bf16[9,128], index: 1, kind: input, shape index: {}]
  %s2 = inlined_call_operand.vmem [shape: f32[1,128], index: 2, kind: input, shape index: {}]
  %s3 = inlined_call_operand.vmem [shape: f32[1,128], index: 3, kind: input, shape index: {}]
  %s4 = inlined_call_operand.vmem [shape: bf16[128,128], index: 4, kind: output, shape index: {}]
  %s5 = sld [smem:[#allocation0]]
  $region26: #{efficientnet_model.9} parent=0
    _
  %s7 = ssub.s32 1, %s5
  %s8 = scalar_select 0, %s7, %s5
  // Predicated region
  $region2: #{efficientnet_model.9} parent=0 // pred_check
    _
  $region3: #{efficientnet_model.9} parent=0 // pred_check_branch
    %10 = sbr.rel (0) target = $region5
  $region4: #{efficientnet_model.9} parent=0 // pred_region
    _
  $region5: #{efficientnet_model.9} parent=0 // pred_fallthru
    _
  // Predicated region
  $region6: #{efficientnet_model.9} parent=0 // pred_check
    _
  $region7: #{efficientnet_model.9} parent=0 // pred_check_branch
    %12 = sbr.rel (0) target = $region9
  $region8: #{efficientnet_model.9} parent=0 // pred_region
    _
  $region9: #{efficientnet_model.9} parent=0 // pred_fallthru
    _
  // Predicated region
  $region10: #{efficientnet_model.9} parent=0 // pred_check
    _
  $region11: #{efficientnet_model.9} parent=0 // pred_check_branch
    %14 = sbr.rel (0) target = $region13
  $region12: #{efficientnet_model.9} parent=0 // pred_region
    _
  $region13: #{efficientnet_model.9} parent=0 // pred_fallthru
    _
  // Predicated region
  $region14: #{efficientnet_model.9} parent=0 // pred_check
    _
  $region15: #{efficientnet_model.9} parent=0 // pred_check_branch
    %16 = sbr.rel (0) target = $region17
  $region16: #{efficientnet_model.9} parent=0 // pred_region
    _
  $region17: #{efficientnet_model.9} parent=0 // pred_fallthru
    _
  %v17 = vld [vmem:[%s1] sm:$0xf]
  %v18 = vld [vmem:[%s1 + $0x4] sm:$0x1]
  %v19 = vunpack.c.l.bf16 %v17
  %v20 = vunpack.c.l.bf16 %v18
  %v21 = vld [vmem:[%s0] sm:$0xf]
  %v22 = vld [vmem:[%s0 + $0x4] sm:$0xf]
  %v23 = vld [vmem:[%s0 + $0x8] sm:$0xf]
  %v24 = vld [vmem:[%s0 + $0xc] sm:$0xf]
  %v25 = vld [vmem:[%s0 + $0x10] sm:$0xf]
  %v26 = vld [vmem:[%s0 + $0x14] sm:$0xf]
  %v27 = vld [vmem:[%s0 + $0x18] sm:$0xf]
  %v28 = vld [vmem:[%s0 + $0x1c] sm:$0xf]
  %v29 = vld [vmem:[%s0 + $0x20] sm:$0xf]
  %v30 = vld [vmem:[%s0 + $0x24] sm:$0xf]
  %v31 = vld [vmem:[%s0 + $0x28] sm:$0xf]
  %v32 = vld [vmem:[%s0 + $0x2c] sm:$0xf]
  %v33 = vld [vmem:[%s0 + $0x30] sm:$0xf]
  %v34 = vld [vmem:[%s0 + $0x34] sm:$0xf]
  %v35 = vld [vmem:[%s0 + $0x38] sm:$0xf]
  %v36 = vld [vmem:[%s0 + $0x3c] sm:$0xf]
  %v37 = vunpack.c.l.bf16 %v21
  %v38 = vunpack.c.l.bf16 %v22
  %v39 = vunpack.c.l.bf16 %v23
  %v40 = vunpack.c.l.bf16 %v24
  %v41 = vunpack.c.l.bf16 %v25
  %v42 = vunpack.c.l.bf16 %v26
  %v43 = vunpack.c.l.bf16 %v27
  %v44 = vunpack.c.l.bf16 %v28
  %v45 = vunpack.c.l.bf16 %v29
  %v46 = vunpack.c.l.bf16 %v30
  %v47 = vunpack.c.l.bf16 %v31
  %v48 = vunpack.c.l.bf16 %v32
  %v49 = vunpack.c.l.bf16 %v33
  %v50 = vunpack.c.l.bf16 %v34
  %v51 = vunpack.c.l.bf16 %v35
  %v52 = vunpack.c.l.bf16 %v36
  %v53 = vlaneseq
  %v54 = vshrl.u32 %v53, 7
  %v55 = vsub.s32 0, %v54
  %v56 = vrot.slane %v19, %v55
  %v57 = vmul.f32 %v37, %v56
  %v58 = vmul.f32 %v38, %v56
  %v59 = vmul.f32 %v39, %v56
  %v60 = vmul.f32 %v40, %v56
  %v61 = vmul.f32 %v41, %v56
  %v62 = vmul.f32 %v42, %v56
  %v63 = vmul.f32 %v43, %v56
  %v64 = vmul.f32 %v44, %v56
  %v65 = vmul.f32 %v45, %v56
  %v66 = vmul.f32 %v46, %v56
  %v67 = vmul.f32 %v47, %v56
  %v68 = vmul.f32 %v48, %v56
  %v69 = vmul.f32 %v49, %v56
  %v70 = vmul.f32 %v50, %v56
  %v71 = vmul.f32 %v51, %v56
  %v72 = vmul.f32 %v52, %v56
  %s73 = scalar_lea.vmem %s0, 64
  %v74 = vld [vmem:[%s73] sm:$0xf]
  %v75 = vld [vmem:[%s73 + $0x4] sm:$0xf]
  %v76 = vld [vmem:[%s73 + $0x8] sm:$0xf]
  %v77 = vld [vmem:[%s73 + $0xc] sm:$0xf]
  %v78 = vld [vmem:[%s73 + $0x10] sm:$0xf]
  %v79 = vld [vmem:[%s73 + $0x14] sm:$0xf]
  %v80 = vld [vmem:[%s73 + $0x18] sm:$0xf]
  %v81 = vld [vmem:[%s73 + $0x1c] sm:$0xf]
  %v82 = vld [vmem:[%s73 + $0x20] sm:$0xf]
  %v83 = vld [vmem:[%s73 + $0x24] sm:$0xf]
  %v84 = vld [vmem:[%s73 + $0x28] sm:$0xf]
  %v85 = vld [vmem:[%s73 + $0x2c] sm:$0xf]
  %v86 = vld [vmem:[%s73 + $0x30] sm:$0xf]
  %v87 = vld [vmem:[%s73 + $0x34] sm:$0xf]
  %v88 = vld [vmem:[%s73 + $0x38] sm:$0xf]
  %v89 = vld [vmem:[%s73 + $0x3c] sm:$0xf]
  %v90 = vunpack.c.l.bf16 %v74
  %v91 = vunpack.c.l.bf16 %v75
  %v92 = vunpack.c.l.bf16 %v76
  %v93 = vunpack.c.l.bf16 %v77
  %v94 = vunpack.c.l.bf16 %v78
  %v95 = vunpack.c.l.bf16 %v79
  %v96 = vunpack.c.l.bf16 %v80
  %v97 = vunpack.c.l.bf16 %v81
  %v98 = vunpack.c.l.bf16 %v82
  %v99 = vunpack.c.l.bf16 %v83
  %v100 = vunpack.c.l.bf16 %v84
  %v101 = vunpack.c.l.bf16 %v85
  %v102 = vunpack.c.l.bf16 %v86
  %v103 = vunpack.c.l.bf16 %v87
  %v104 = vunpack.c.l.bf16 %v88
  %v105 = vunpack.c.l.bf16 %v89
  %v106 = vlaneseq
  %v107 = vshrl.u32 %v106, 7
  %v108 = vsub.s32 1, %v107
  %v109 = vrot.slane %v19, %v108
  %v110 = vmul.f32 %v90, %v109
  %v111 = vmul.f32 %v91, %v109
  %v112 = vmul.f32 %v92, %v109
  %v113 = vmul.f32 %v93, %v109
  %v114 = vmul.f32 %v94, %v109
  %v115 = vmul.f32 %v95, %v109
  %v116 = vmul.f32 %v96, %v109
  %v117 = vmul.f32 %v97, %v109
  %v118 = vmul.f32 %v98, %v109
  %v119 = vmul.f32 %v99, %v109
  %v120 = vmul.f32 %v100, %v109
  %v121 = vmul.f32 %v101, %v109
  %v122 = vmul.f32 %v102, %v109
  %v123 = vmul.f32 %v103, %v109
  %v124 = vmul.f32 %v104, %v109
  %v125 = vmul.f32 %v105, %v109
  %v126 = vadd.f32 %v57, %v110
  %v127 = vadd.f32 %v58, %v111
  %v128 = vadd.f32 %v59, %v112
  %v129 = vadd.f32 %v60, %v113
  %v130 = vadd.f32 %v61, %v114
  %v131 = vadd.f32 %v62, %v115
  %v132 = vadd.f32 %v63, %v116
  %v133 = vadd.f32 %v64, %v117
  %v134 = vadd.f32 %v65, %v118
  %v135 = vadd.f32 %v66, %v119
  %v136 = vadd.f32 %v67, %v120
  %v137 = vadd.f32 %v68, %v121
  %v138 = vadd.f32 %v69, %v122
  %v139 = vadd.f32 %v70, %v123
  %v140 = vadd.f32 %v71, %v124
  %v141 = vadd.f32 %v72, %v125
  %s142 = scalar_lea.vmem %s0, 128
  %v143 = vld [vmem:[%s142] sm:$0xf]
  %v144 = vld [vmem:[%s142 + $0x4] sm:$0xf]
  %v145 = vld [vmem:[%s142 + $0x8] sm:$0xf]
  %v146 = vld [vmem:[%s142 + $0xc] sm:$0xf]
  %v147 = vld [vmem:[%s142 + $0x10] sm:$0xf]
  %v148 = vld [vmem:[%s142 + $0x14] sm:$0xf]
  %v149 = vld [vmem:[%s142 + $0x18] sm:$0xf]
  %v150 = vld [vmem:[%s142 + $0x1c] sm:$0xf]
  %v151 = vld [vmem:[%s142 + $0x20] sm:$0xf]
  %v152 = vld [vmem:[%s142 + $0x24] sm:$0xf]
  %v153 = vld [vmem:[%s142 + $0x28] sm:$0xf]
  %v154 = vld [vmem:[%s142 + $0x2c] sm:$0xf]
  %v155 = vld [vmem:[%s142 + $0x30] sm:$0xf]
  %v156 = vld [vmem:[%s142 + $0x34] sm:$0xf]
  %v157 = vld [vmem:[%s142 + $0x38] sm:$0xf]
  %v158 = vld [vmem:[%s142 + $0x3c] sm:$0xf]
  %v159 = vunpack.c.l.bf16 %v143
  %v160 = vunpack.c.l.bf16 %v144
  %v161 = vunpack.c.l.bf16 %v145
  %v162 = vunpack.c.l.bf16 %v146
  %v163 = vunpack.c.l.bf16 %v147
  %v164 = vunpack.c.l.bf16 %v148
  %v165 = vunpack.c.l.bf16 %v149
  %v166 = vunpack.c.l.bf16 %v150
  %v167 = vunpack.c.l.bf16 %v151
  %v168 = vunpack.c.l.bf16 %v152
  %v169 = vunpack.c.l.bf16 %v153
  %v170 = vunpack.c.l.bf16 %v154
  %v171 = vunpack.c.l.bf16 %v155
  %v172 = vunpack.c.l.bf16 %v156
  %v173 = vunpack.c.l.bf16 %v157
  %v174 = vunpack.c.l.bf16 %v158
  %v175 = vlaneseq
  %v176 = vshrl.u32 %v175, 7
  %v177 = vsub.s32 2, %v176
  %v178 = vrot.slane %v19, %v177
  %v179 = vmul.f32 %v159, %v178
  %v180 = vmul.f32 %v160, %v178
  %v181 = vmul.f32 %v161, %v178
  %v182 = vmul.f32 %v162, %v178
  %v183 = vmul.f32 %v163, %v178
  %v184 = vmul.f32 %v164, %v178
  %v185 = vmul.f32 %v165, %v178
  %v186 = vmul.f32 %v166, %v178
  %v187 = vmul.f32 %v167, %v178
  %v188 = vmul.f32 %v168, %v178
  %v189 = vmul.f32 %v169, %v178
  %v190 = vmul.f32 %v170, %v178
  %v191 = vmul.f32 %v171, %v178
  %v192 = vmul.f32 %v172, %v178
  %v193 = vmul.f32 %v173, %v178
  %v194 = vmul.f32 %v174, %v178
  %v195 = vadd.f32 %v126, %v179
  %v196 = vadd.f32 %v127, %v180
  %v197 = vadd.f32 %v128, %v181
  %v198 = vadd.f32 %v129, %v182
  %v199 = vadd.f32 %v130, %v183
  %v200 = vadd.f32 %v131, %v184
  %v201 = vadd.f32 %v132, %v185
  %v202 = vadd.f32 %v133, %v186
  %v203 = vadd.f32 %v134, %v187
  %v204 = vadd.f32 %v135, %v188
  %v205 = vadd.f32 %v136, %v189
  %v206 = vadd.f32 %v137, %v190
  %v207 = vadd.f32 %v138, %v191
  %v208 = vadd.f32 %v139, %v192
  %v209 = vadd.f32 %v140, %v193
  %v210 = vadd.f32 %v141, %v194
  %s211 = scalar_lea.vmem %s0, 192
  %v212 = vld [vmem:[%s211] sm:$0xf]
  %v213 = vld [vmem:[%s211 + $0x4] sm:$0xf]
  %v214 = vld [vmem:[%s211 + $0x8] sm:$0xf]
  %v215 = vld [vmem:[%s211 + $0xc] sm:$0xf]
  %v216 = vld [vmem:[%s211 + $0x10] sm:$0xf]
  %v217 = vld [vmem:[%s211 + $0x14] sm:$0xf]
  %v218 = vld [vmem:[%s211 + $0x18] sm:$0xf]
  %v219 = vld [vmem:[%s211 + $0x1c] sm:$0xf]
  %v220 = vld [vmem:[%s211 + $0x20] sm:$0xf]
  %v221 = vld [vmem:[%s211 + $0x24] sm:$0xf]
  %v222 = vld [vmem:[%s211 + $0x28] sm:$0xf]
  %v223 = vld [vmem:[%s211 + $0x2c] sm:$0xf]
  %v224 = vld [vmem:[%s211 + $0x30] sm:$0xf]
  %v225 = vld [vmem:[%s211 + $0x34] sm:$0xf]
  %v226 = vld [vmem:[%s211 + $0x38] sm:$0xf]
  %v227 = vld [vmem:[%s211 + $0x3c] sm:$0xf]
  %v228 = vunpack.c.l.bf16 %v212
  %v229 = vunpack.c.l.bf16 %v213
  %v230 = vunpack.c.l.bf16 %v214
  %v231 = vunpack.c.l.bf16 %v215
  %v232 = vunpack.c.l.bf16 %v216
  %v233 = vunpack.c.l.bf16 %v217
  %v234 = vunpack.c.l.bf16 %v218
  %v235 = vunpack.c.l.bf16 %v219
  %v236 = vunpack.c.l.bf16 %v220
  %v237 = vunpack.c.l.bf16 %v221
  %v238 = vunpack.c.l.bf16 %v222
  %v239 = vunpack.c.l.bf16 %v223
  %v240 = vunpack.c.l.bf16 %v224
  %v241 = vunpack.c.l.bf16 %v225
  %v242 = vunpack.c.l.bf16 %v226
  %v243 = vunpack.c.l.bf16 %v227
  %v244 = vlaneseq
  %v245 = vshrl.u32 %v244, 7
  %v246 = vsub.s32 3, %v245
  %v247 = vrot.slane %v19, %v246
  %v248 = vmul.f32 %v228, %v247
  %v249 = vmul.f32 %v229, %v247
  %v250 = vmul.f32 %v230, %v247
  %v251 = vmul.f32 %v231, %v247
  %v252 = vmul.f32 %v232, %v247
  %v253 = vmul.f32 %v233, %v247
  %v254 = vmul.f32 %v234, %v247
  %v255 = vmul.f32 %v235, %v247
  %v256 = vmul.f32 %v236, %v247
  %v257 = vmul.f32 %v237, %v247
  %v258 = vmul.f32 %v238, %v247
  %v259 = vmul.f32 %v239, %v247
  %v260 = vmul.f32 %v240, %v247
  %v261 = vmul.f32 %v241, %v247
  %v262 = vmul.f32 %v242, %v247
  %v263 = vmul.f32 %v243, %v247
  %v264 = vadd.f32 %v195, %v248
  %v265 = vadd.f32 %v196, %v249
  %v266 = vadd.f32 %v197, %v250
  %v267 = vadd.f32 %v198, %v251
  %v268 = vadd.f32 %v199, %v252
  %v269 = vadd.f32 %v200, %v253
  %v270 = vadd.f32 %v201, %v254
  %v271 = vadd.f32 %v202, %v255
  %v272 = vadd.f32 %v203, %v256
  %v273 = vadd.f32 %v204, %v257
  %v274 = vadd.f32 %v205, %v258
  %v275 = vadd.f32 %v206, %v259
  %v276 = vadd.f32 %v207, %v260
  %v277 = vadd.f32 %v208, %v261
  %v278 = vadd.f32 %v209, %v262
  %v279 = vadd.f32 %v210, %v263
  %s280 = scalar_lea.vmem %s0, 256
  %v281 = vld [vmem:[%s280] sm:$0xf]
  %v282 = vld [vmem:[%s280 + $0x4] sm:$0xf]
  %v283 = vld [vmem:[%s280 + $0x8] sm:$0xf]
  %v284 = vld [vmem:[%s280 + $0xc] sm:$0xf]
  %v285 = vld [vmem:[%s280 + $0x10] sm:$0xf]
  %v286 = vld [vmem:[%s280 + $0x14] sm:$0xf]
  %v287 = vld [vmem:[%s280 + $0x18] sm:$0xf]
  %v288 = vld [vmem:[%s280 + $0x1c] sm:$0xf]
  %v289 = vld [vmem:[%s280 + $0x20] sm:$0xf]
  %v290 = vld [vmem:[%s280 + $0x24] sm:$0xf]
  %v291 = vld [vmem:[%s280 + $0x28] sm:$0xf]
  %v292 = vld [vmem:[%s280 + $0x2c] sm:$0xf]
  %v293 = vld [vmem:[%s280 + $0x30] sm:$0xf]
  %v294 = vld [vmem:[%s280 + $0x34] sm:$0xf]
  %v295 = vld [vmem:[%s280 + $0x38] sm:$0xf]
  %v296 = vld [vmem:[%s280 + $0x3c] sm:$0xf]
  %v297 = vunpack.c.l.bf16 %v281
  %v298 = vunpack.c.l.bf16 %v282
  %v299 = vunpack.c.l.bf16 %v283
  %v300 = vunpack.c.l.bf16 %v284
  %v301 = vunpack.c.l.bf16 %v285
  %v302 = vunpack.c.l.bf16 %v286
  %v303 = vunpack.c.l.bf16 %v287
  %v304 = vunpack.c.l.bf16 %v288
  %v305 = vunpack.c.l.bf16 %v289
  %v306 = vunpack.c.l.bf16 %v290
  %v307 = vunpack.c.l.bf16 %v291
  %v308 = vunpack.c.l.bf16 %v292
  %v309 = vunpack.c.l.bf16 %v293
  %v310 = vunpack.c.l.bf16 %v294
  %v311 = vunpack.c.l.bf16 %v295
  %v312 = vunpack.c.l.bf16 %v296
  %v313 = vlaneseq
  %v314 = vshrl.u32 %v313, 7
  %v315 = vsub.s32 4, %v314
  %v316 = vrot.slane %v19, %v315
  %v317 = vmul.f32 %v297, %v316
  %v318 = vmul.f32 %v298, %v316
  %v319 = vmul.f32 %v299, %v316
  %v320 = vmul.f32 %v300, %v316
  %v321 = vmul.f32 %v301, %v316
  %v322 = vmul.f32 %v302, %v316
  %v323 = vmul.f32 %v303, %v316
  %v324 = vmul.f32 %v304, %v316
  %v325 = vmul.f32 %v305, %v316
  %v326 = vmul.f32 %v306, %v316
  %v327 = vmul.f32 %v307, %v316
  %v328 = vmul.f32 %v308, %v316
  %v329 = vmul.f32 %v309, %v316
  %v330 = vmul.f32 %v310, %v316
  %v331 = vmul.f32 %v311, %v316
  %v332 = vmul.f32 %v312, %v316
  %v333 = vadd.f32 %v264, %v317
  %v334 = vadd.f32 %v265, %v318
  %v335 = vadd.f32 %v266, %v319
  %v336 = vadd.f32 %v267, %v320
  %v337 = vadd.f32 %v268, %v321
  %v338 = vadd.f32 %v269, %v322
  %v339 = vadd.f32 %v270, %v323
  %v340 = vadd.f32 %v271, %v324
  %v341 = vadd.f32 %v272, %v325
  %v342 = vadd.f32 %v273, %v326
  %v343 = vadd.f32 %v274, %v327
  %v344 = vadd.f32 %v275, %v328
  %v345 = vadd.f32 %v276, %v329
  %v346 = vadd.f32 %v277, %v330
  %v347 = vadd.f32 %v278, %v331
  %v348 = vadd.f32 %v279, %v332
  %s349 = scalar_lea.vmem %s0, 320
  %v350 = vld [vmem:[%s349] sm:$0xf]
  %v351 = vld [vmem:[%s349 + $0x4] sm:$0xf]
  %v352 = vld [vmem:[%s349 + $0x8] sm:$0xf]
  %v353 = vld [vmem:[%s349 + $0xc] sm:$0xf]
  %v354 = vld [vmem:[%s349 + $0x10] sm:$0xf]
  %v355 = vld [vmem:[%s349 + $0x14] sm:$0xf]
  %v356 = vld [vmem:[%s349 + $0x18] sm:$0xf]
  %v357 = vld [vmem:[%s349 + $0x1c] sm:$0xf]
  %v358 = vld [vmem:[%s349 + $0x20] sm:$0xf]
  %v359 = vld [vmem:[%s349 + $0x24] sm:$0xf]
  %v360 = vld [vmem:[%s349 + $0x28] sm:$0xf]
  %v361 = vld [vmem:[%s349 + $0x2c] sm:$0xf]
  %v362 = vld [vmem:[%s349 + $0x30] sm:$0xf]
  %v363 = vld [vmem:[%s349 + $0x34] sm:$0xf]
  %v364 = vld [vmem:[%s349 + $0x38] sm:$0xf]
  %v365 = vld [vmem:[%s349 + $0x3c] sm:$0xf]
  %v366 = vunpack.c.l.bf16 %v350
  %v367 = vunpack.c.l.bf16 %v351
  %v368 = vunpack.c.l.bf16 %v352
  %v369 = vunpack.c.l.bf16 %v353
  %v370 = vunpack.c.l.bf16 %v354
  %v371 = vunpack.c.l.bf16 %v355
  %v372 = vunpack.c.l.bf16 %v356
  %v373 = vunpack.c.l.bf16 %v357
  %v374 = vunpack.c.l.bf16 %v358
  %v375 = vunpack.c.l.bf16 %v359
  %v376 = vunpack.c.l.bf16 %v360
  %v377 = vunpack.c.l.bf16 %v361
  %v378 = vunpack.c.l.bf16 %v362
  %v379 = vunpack.c.l.bf16 %v363
  %v380 = vunpack.c.l.bf16 %v364
  %v381 = vunpack.c.l.bf16 %v365
  %v382 = vlaneseq
  %v383 = vshrl.u32 %v382, 7
  %v384 = vsub.s32 5, %v383
  %v385 = vrot.slane %v19, %v384
  %v386 = vmul.f32 %v366, %v385
  %v387 = vmul.f32 %v367, %v385
  %v388 = vmul.f32 %v368, %v385
  %v389 = vmul.f32 %v369, %v385
  %v390 = vmul.f32 %v370, %v385
  %v391 = vmul.f32 %v371, %v385
  %v392 = vmul.f32 %v372, %v385
  %v393 = vmul.f32 %v373, %v385
  %v394 = vmul.f32 %v374, %v385
  %v395 = vmul.f32 %v375, %v385
  %v396 = vmul.f32 %v376, %v385
  %v397 = vmul.f32 %v377, %v385
  %v398 = vmul.f32 %v378, %v385
  %v399 = vmul.f32 %v379, %v385
  %v400 = vmul.f32 %v380, %v385
  %v401 = vmul.f32 %v381, %v385
  %v402 = vadd.f32 %v333, %v386
  %v403 = vadd.f32 %v334, %v387
  %v404 = vadd.f32 %v335, %v388
  %v405 = vadd.f32 %v336, %v389
  %v406 = vadd.f32 %v337, %v390
  %v407 = vadd.f32 %v338, %v391
  %v408 = vadd.f32 %v339, %v392
  %v409 = vadd.f32 %v340, %v393
  %v410 = vadd.f32 %v341, %v394
  %v411 = vadd.f32 %v342, %v395
  %v412 = vadd.f32 %v343, %v396
  %v413 = vadd.f32 %v344, %v397
  %v414 = vadd.f32 %v345, %v398
  %v415 = vadd.f32 %v346, %v399
  %v416 = vadd.f32 %v347, %v400
  %v417 = vadd.f32 %v348, %v401
  %s418 = scalar_lea.vmem %s0, 384
  %v419 = vld [vmem:[%s418] sm:$0xf]
  %v420 = vld [vmem:[%s418 + $0x4] sm:$0xf]
  %v421 = vld [vmem:[%s418 + $0x8] sm:$0xf]
  %v422 = vld [vmem:[%s418 + $0xc] sm:$0xf]
  %v423 = vld [vmem:[%s418 + $0x10] sm:$0xf]
  %v424 = vld [vmem:[%s418 + $0x14] sm:$0xf]
  %v425 = vld [vmem:[%s418 + $0x18] sm:$0xf]
  %v426 = vld [vmem:[%s418 + $0x1c] sm:$0xf]
  %v427 = vld [vmem:[%s418 + $0x20] sm:$0xf]
  %v428 = vld [vmem:[%s418 + $0x24] sm:$0xf]
  %v429 = vld [vmem:[%s418 + $0x28] sm:$0xf]
  %v430 = vld [vmem:[%s418 + $0x2c] sm:$0xf]
  %v431 = vld [vmem:[%s418 + $0x30] sm:$0xf]
  %v432 = vld [vmem:[%s418 + $0x34] sm:$0xf]
  %v433 = vld [vmem:[%s418 + $0x38] sm:$0xf]
  %v434 = vld [vmem:[%s418 + $0x3c] sm:$0xf]
  %v435 = vunpack.c.l.bf16 %v419
  %v436 = vunpack.c.l.bf16 %v420
  %v437 = vunpack.c.l.bf16 %v421
  %v438 = vunpack.c.l.bf16 %v422
  %v439 = vunpack.c.l.bf16 %v423
  %v440 = vunpack.c.l.bf16 %v424
  %v441 = vunpack.c.l.bf16 %v425
  %v442 = vunpack.c.l.bf16 %v426
  %v443 = vunpack.c.l.bf16 %v427
  %v444 = vunpack.c.l.bf16 %v428
  %v445 = vunpack.c.l.bf16 %v429
  %v446 = vunpack.c.l.bf16 %v430
  %v447 = vunpack.c.l.bf16 %v431
  %v448 = vunpack.c.l.bf16 %v432
  %v449 = vunpack.c.l.bf16 %v433
  %v450 = vunpack.c.l.bf16 %v434
  %v451 = vlaneseq
  %v452 = vshrl.u32 %v451, 7
  %v453 = vsub.s32 6, %v452
  %v454 = vrot.slane %v19, %v453
  %v455 = vmul.f32 %v435, %v454
  %v456 = vmul.f32 %v436, %v454
  %v457 = vmul.f32 %v437, %v454
  %v458 = vmul.f32 %v438, %v454
  %v459 = vmul.f32 %v439, %v454
  %v460 = vmul.f32 %v440, %v454
  %v461 = vmul.f32 %v441, %v454
  %v462 = vmul.f32 %v442, %v454
  %v463 = vmul.f32 %v443, %v454
  %v464 = vmul.f32 %v444, %v454
  %v465 = vmul.f32 %v445, %v454
  %v466 = vmul.f32 %v446, %v454
  %v467 = vmul.f32 %v447, %v454
  %v468 = vmul.f32 %v448, %v454
  %v469 = vmul.f32 %v449, %v454
  %v470 = vmul.f32 %v450, %v454
  %v471 = vadd.f32 %v402, %v455
  %v472 = vadd.f32 %v403, %v456
  %v473 = vadd.f32 %v404, %v457
  %v474 = vadd.f32 %v405, %v458
  %v475 = vadd.f32 %v406, %v459
  %v476 = vadd.f32 %v407, %v460
  %v477 = vadd.f32 %v408, %v461
  %v478 = vadd.f32 %v409, %v462
  %v479 = vadd.f32 %v410, %v463
  %v480 = vadd.f32 %v411, %v464
  %v481 = vadd.f32 %v412, %v465
  %v482 = vadd.f32 %v413, %v466
  %v483 = vadd.f32 %v414, %v467
  %v484 = vadd.f32 %v415, %v468
  %v485 = vadd.f32 %v416, %v469
  %v486 = vadd.f32 %v417, %v470
  %s487 = scalar_lea.vmem %s0, 448
  %v488 = vld [vmem:[%s487] sm:$0xf]
  %v489 = vld [vmem:[%s487 + $0x4] sm:$0xf]
  %v490 = vld [vmem:[%s487 + $0x8] sm:$0xf]
  %v491 = vld [vmem:[%s487 + $0xc] sm:$0xf]
  %v492 = vld [vmem:[%s487 + $0x10] sm:$0xf]
  %v493 = vld [vmem:[%s487 + $0x14] sm:$0xf]
  %v494 = vld [vmem:[%s487 + $0x18] sm:$0xf]
  %v495 = vld [vmem:[%s487 + $0x1c] sm:$0xf]
  %v496 = vld [vmem:[%s487 + $0x20] sm:$0xf]
  %v497 = vld [vmem:[%s487 + $0x24] sm:$0xf]
  %v498 = vld [vmem:[%s487 + $0x28] sm:$0xf]
  %v499 = vld [vmem:[%s487 + $0x2c] sm:$0xf]
  %v500 = vld [vmem:[%s487 + $0x30] sm:$0xf]
  %v501 = vld [vmem:[%s487 + $0x34] sm:$0xf]
  %v502 = vld [vmem:[%s487 + $0x38] sm:$0xf]
  %v503 = vld [vmem:[%s487 + $0x3c] sm:$0xf]
  %v504 = vunpack.c.l.bf16 %v488
  %v505 = vunpack.c.l.bf16 %v489
  %v506 = vunpack.c.l.bf16 %v490
  %v507 = vunpack.c.l.bf16 %v491
  %v508 = vunpack.c.l.bf16 %v492
  %v509 = vunpack.c.l.bf16 %v493
  %v510 = vunpack.c.l.bf16 %v494
  %v511 = vunpack.c.l.bf16 %v495
  %v512 = vunpack.c.l.bf16 %v496
  %v513 = vunpack.c.l.bf16 %v497
  %v514 = vunpack.c.l.bf16 %v498
  %v515 = vunpack.c.l.bf16 %v499
  %v516 = vunpack.c.l.bf16 %v500
  %v517 = vunpack.c.l.bf16 %v501
  %v518 = vunpack.c.l.bf16 %v502
  %v519 = vunpack.c.l.bf16 %v503
  %v520 = vlaneseq
  %v521 = vshrl.u32 %v520, 7
  %v522 = vsub.s32 7, %v521
  %v523 = vrot.slane %v19, %v522
  %v524 = vmul.f32 %v504, %v523
  %v525 = vmul.f32 %v505, %v523
  %v526 = vmul.f32 %v506, %v523
  %v527 = vmul.f32 %v507, %v523
  %v528 = vmul.f32 %v508, %v523
  %v529 = vmul.f32 %v509, %v523
  %v530 = vmul.f32 %v510, %v523
  %v531 = vmul.f32 %v511, %v523
  %v532 = vmul.f32 %v512, %v523
  %v533 = vmul.f32 %v513, %v523
  %v534 = vmul.f32 %v514, %v523
  %v535 = vmul.f32 %v515, %v523
  %v536 = vmul.f32 %v516, %v523
  %v537 = vmul.f32 %v517, %v523
  %v538 = vmul.f32 %v518, %v523
  %v539 = vmul.f32 %v519, %v523
  %v540 = vadd.f32 %v471, %v524
  %v541 = vadd.f32 %v472, %v525
  %v542 = vadd.f32 %v473, %v526
  %v543 = vadd.f32 %v474, %v527
  %v544 = vadd.f32 %v475, %v528
  %v545 = vadd.f32 %v476, %v529
  %v546 = vadd.f32 %v477, %v530
  %v547 = vadd.f32 %v478, %v531
  %v548 = vadd.f32 %v479, %v532
  %v549 = vadd.f32 %v480, %v533
  %v550 = vadd.f32 %v481, %v534
  %v551 = vadd.f32 %v482, %v535
  %v552 = vadd.f32 %v483, %v536
  %v553 = vadd.f32 %v484, %v537
  %v554 = vadd.f32 %v485, %v538
  %v555 = vadd.f32 %v486, %v539
  %s556 = scalar_lea.vmem %s0, 512
  %v557 = vld [vmem:[%s556] sm:$0xf]
  %v558 = vld [vmem:[%s556 + $0x4] sm:$0xf]
  %v559 = vld [vmem:[%s556 + $0x8] sm:$0xf]
  %v560 = vld [vmem:[%s556 + $0xc] sm:$0xf]
  %v561 = vld [vmem:[%s556 + $0x10] sm:$0xf]
  %v562 = vld [vmem:[%s556 + $0x14] sm:$0xf]
  %v563 = vld [vmem:[%s556 + $0x18] sm:$0xf]
  %v564 = vld [vmem:[%s556 + $0x1c] sm:$0xf]
  %v565 = vld [vmem:[%s556 + $0x20] sm:$0xf]
  %v566 = vld [vmem:[%s556 + $0x24] sm:$0xf]
  %v567 = vld [vmem:[%s556 + $0x28] sm:$0xf]
  %v568 = vld [vmem:[%s556 + $0x2c] sm:$0xf]
  %v569 = vld [vmem:[%s556 + $0x30] sm:$0xf]
  %v570 = vld [vmem:[%s556 + $0x34] sm:$0xf]
  %v571 = vld [vmem:[%s556 + $0x38] sm:$0xf]
  %v572 = vld [vmem:[%s556 + $0x3c] sm:$0xf]
  %v573 = vunpack.c.l.bf16 %v557
  %v574 = vunpack.c.l.bf16 %v558
  %v575 = vunpack.c.l.bf16 %v559
  %v576 = vunpack.c.l.bf16 %v560
  %v577 = vunpack.c.l.bf16 %v561
  %v578 = vunpack.c.l.bf16 %v562
  %v579 = vunpack.c.l.bf16 %v563
  %v580 = vunpack.c.l.bf16 %v564
  %v581 = vunpack.c.l.bf16 %v565
  %v582 = vunpack.c.l.bf16 %v566
  %v583 = vunpack.c.l.bf16 %v567
  %v584 = vunpack.c.l.bf16 %v568
  %v585 = vunpack.c.l.bf16 %v569
  %v586 = vunpack.c.l.bf16 %v570
  %v587 = vunpack.c.l.bf16 %v571
  %v588 = vunpack.c.l.bf16 %v572
  %v589 = vlaneseq
  %v590 = vshrl.u32 %v589, 7
  %v591 = vsub.s32 0, %v590
  %v592 = vrot.slane %v20, %v591
  %v593 = vmul.f32 %v573, %v592
  %v594 = vmul.f32 %v574, %v592
  %v595 = vmul.f32 %v575, %v592
  %v596 = vmul.f32 %v576, %v592
  %v597 = vmul.f32 %v577, %v592
  %v598 = vmul.f32 %v578, %v592
  %v599 = vmul.f32 %v579, %v592
  %v600 = vmul.f32 %v580, %v592
  %v601 = vmul.f32 %v581, %v592
  %v602 = vmul.f32 %v582, %v592
  %v603 = vmul.f32 %v583, %v592
  %v604 = vmul.f32 %v584, %v592
  %v605 = vmul.f32 %v585, %v592
  %v606 = vmul.f32 %v586, %v592
  %v607 = vmul.f32 %v587, %v592
  %v608 = vmul.f32 %v588, %v592
  %v609 = vadd.f32 %v540, %v593
  %v610 = vadd.f32 %v541, %v594
  %v611 = vadd.f32 %v542, %v595
  %v612 = vadd.f32 %v543, %v596
  %v613 = vadd.f32 %v544, %v597
  %v614 = vadd.f32 %v545, %v598
  %v615 = vadd.f32 %v546, %v599
  %v616 = vadd.f32 %v547, %v600
  %v617 = vadd.f32 %v548, %v601
  %v618 = vadd.f32 %v549, %v602
  %v619 = vadd.f32 %v550, %v603
  %v620 = vadd.f32 %v551, %v604
  %v621 = vadd.f32 %v552, %v605
  %v622 = vadd.f32 %v553, %v606
  %v623 = vadd.f32 %v554, %v607
  %v624 = vadd.f32 %v555, %v608
  %v625 = vld [vmem:[%s2] sm:$0x1]
  %v627 = vlaneseq
  %v628 = vshrl.u32 %v627, 7
  %v629 = vsub.s32 0, %v628
  %v630 = vrot.slane %v625, %v629
  %v632 = vmul.f32 %v609, %v630
  %v633 = vmul.f32 %v610, %v630
  %v634 = vmul.f32 %v611, %v630
  %v635 = vmul.f32 %v612, %v630
  %v636 = vmul.f32 %v613, %v630
  %v637 = vmul.f32 %v614, %v630
  %v638 = vmul.f32 %v615, %v630
  %v639 = vmul.f32 %v616, %v630
  %v640 = vmul.f32 %v617, %v630
  %v641 = vmul.f32 %v618, %v630
  %v642 = vmul.f32 %v619, %v630
  %v643 = vmul.f32 %v620, %v630
  %v644 = vmul.f32 %v621, %v630
  %v645 = vmul.f32 %v622, %v630
  %v646 = vmul.f32 %v623, %v630
  %v647 = vmul.f32 %v624, %v630
  %v648 = vld [vmem:[%s3] sm:$0x1]
  %v650 = vlaneseq
  %v651 = vshrl.u32 %v650, 7
  %v652 = vsub.s32 0, %v651
  %v653 = vrot.slane %v648, %v652
  %v655 = vadd.f32 %v632, %v653
  %v656 = vadd.f32 %v633, %v653
  %v657 = vadd.f32 %v634, %v653
  %v658 = vadd.f32 %v635, %v653
  %v659 = vadd.f32 %v636, %v653
  %v660 = vadd.f32 %v637, %v653
  %v661 = vadd.f32 %v638, %v653
  %v662 = vadd.f32 %v639, %v653
  %v663 = vadd.f32 %v640, %v653
  %v664 = vadd.f32 %v641, %v653
  %v665 = vadd.f32 %v642, %v653
  %v666 = vadd.f32 %v643, %v653
  %v667 = vadd.f32 %v644, %v653
  %v668 = vadd.f32 %v645, %v653
  %v669 = vadd.f32 %v646, %v653
  %v670 = vadd.f32 %v647, %v653
  %v671 = vxor.u32 %v655, 2147483648
  %v672 = vxor.u32 %v656, 2147483648
  %v673 = vxor.u32 %v657, 2147483648
  %v674 = vxor.u32 %v658, 2147483648
  %v675 = vxor.u32 %v659, 2147483648
  %v676 = vxor.u32 %v660, 2147483648
  %v677 = vxor.u32 %v661, 2147483648
  %v678 = vxor.u32 %v662, 2147483648
  %v679 = vxor.u32 %v663, 2147483648
  %v680 = vxor.u32 %v664, 2147483648
  %v681 = vxor.u32 %v665, 2147483648
  %v682 = vxor.u32 %v666, 2147483648
  %v683 = vxor.u32 %v667, 2147483648
  %v684 = vxor.u32 %v668, 2147483648
  %v685 = vxor.u32 %v669, 2147483648
  %v686 = vxor.u32 %v670, 2147483648
  %v687 = vmul.f32 %v671, 1.442695
  %v688 = vpow.pop %v687
  %v689 = vmul.f32 %v672, 1.442695
  %v690 = vpow.pop %v689
  %v691 = vmul.f32 %v673, 1.442695
  %v692 = vpow.pop %v691
  %v693 = vmul.f32 %v674, 1.442695
  %v694 = vpow.pop %v693
  %v695 = vmul.f32 %v675, 1.442695
  %v696 = vpow.pop %v695
  %v697 = vmul.f32 %v676, 1.442695
  %v698 = vpow.pop %v697
  %v699 = vmul.f32 %v677, 1.442695
  %v700 = vpow.pop %v699
  %v701 = vmul.f32 %v678, 1.442695
  %v702 = vpow.pop %v701
  %v703 = vmul.f32 %v679, 1.442695
  %v704 = vpow.pop %v703
  %v705 = vmul.f32 %v680, 1.442695
  %v706 = vpow.pop %v705
  %v707 = vmul.f32 %v681, 1.442695
  %v708 = vpow.pop %v707
  %v709 = vmul.f32 %v682, 1.442695
  %v710 = vpow.pop %v709
  %v711 = vmul.f32 %v683, 1.442695
  %v712 = vpow.pop %v711
  %v713 = vmul.f32 %v684, 1.442695
  %v714 = vpow.pop %v713
  %v715 = vmul.f32 %v685, 1.442695
  %v716 = vpow.pop %v715
  %v717 = vmul.f32 %v686, 1.442695
  %v718 = vpow.pop %v717
  %v719 = vadd.f32 %v688, 1.0
  %v720 = vadd.f32 %v690, 1.0
  %v721 = vadd.f32 %v692, 1.0
  %v722 = vadd.f32 %v694, 1.0
  %v723 = vadd.f32 %v696, 1.0
  %v724 = vadd.f32 %v698, 1.0
  %v725 = vadd.f32 %v700, 1.0
  %v726 = vadd.f32 %v702, 1.0
  %v727 = vadd.f32 %v704, 1.0
  %v728 = vadd.f32 %v706, 1.0
  %v729 = vadd.f32 %v708, 1.0
  %v730 = vadd.f32 %v710, 1.0
  %v731 = vadd.f32 %v712, 1.0
  %v732 = vadd.f32 %v714, 1.0
  %v733 = vadd.f32 %v716, 1.0
  %v734 = vadd.f32 %v718, 1.0
  %v735 = vrcp.pop %v719
  %v736 = vmul.f32 1.0, %v735
  %v737 = vrcp.pop %v720
  %v738 = vmul.f32 1.0, %v737
  %v739 = vrcp.pop %v721
  %v740 = vmul.f32 1.0, %v739
  %v741 = vrcp.pop %v722
  %v742 = vmul.f32 1.0, %v741
  %v743 = vrcp.pop %v723
  %v744 = vmul.f32 1.0, %v743
  %v745 = vrcp.pop %v724
  %v746 = vmul.f32 1.0, %v745
  %v747 = vrcp.pop %v725
  %v748 = vmul.f32 1.0, %v747
  %v749 = vrcp.pop %v726
  %v750 = vmul.f32 1.0, %v749
  %v751 = vrcp.pop %v727
  %v752 = vmul.f32 1.0, %v751
  %v753 = vrcp.pop %v728
  %v754 = vmul.f32 1.0, %v753
  %v755 = vrcp.pop %v729
  %v756 = vmul.f32 1.0, %v755
  %v757 = vrcp.pop %v730
  %v758 = vmul.f32 1.0, %v757
  %v759 = vrcp.pop %v731
  %v760 = vmul.f32 1.0, %v759
  %v761 = vrcp.pop %v732
  %v762 = vmul.f32 1.0, %v761
  %v763 = vrcp.pop %v733
  %v764 = vmul.f32 1.0, %v763
  %v765 = vrcp.pop %v734
  %v766 = vmul.f32 1.0, %v765
  %v767 = vmul.f32 %v655, %v736
  %v768 = vmul.f32 %v656, %v738
  %v769 = vmul.f32 %v657, %v740
  %v770 = vmul.f32 %v658, %v742
  %v771 = vmul.f32 %v659, %v744
  %v772 = vmul.f32 %v660, %v746
  %v773 = vmul.f32 %v661, %v748
  %v774 = vmul.f32 %v662, %v750
  %v775 = vmul.f32 %v663, %v752
  %v776 = vmul.f32 %v664, %v754
  %v777 = vmul.f32 %v665, %v756
  %v778 = vmul.f32 %v666, %v758
  %v779 = vmul.f32 %v667, %v760
  %v780 = vmul.f32 %v668, %v762
  %v781 = vmul.f32 %v669, %v764
  %v782 = vmul.f32 %v670, %v766
  %v783 = vpack.c.bf16 %v768, %v767
  %v784 = vpack.c.bf16 %v770, %v769
  %v785 = vpack.c.bf16 %v772, %v771
  %v786 = vpack.c.bf16 %v774, %v773
  %v787 = vpack.c.bf16 %v776, %v775
  %v788 = vpack.c.bf16 %v778, %v777
  %v789 = vpack.c.bf16 %v780, %v779
  %v790 = vpack.c.bf16 %v782, %v781
  %v799 = vunpack.c.l.b16 %v783
  %v800 = vunpack.c.h.b16 %v783
  %v801 = vunpack.c.l.b16 %v784
  %v802 = vunpack.c.h.b16 %v784
  %v803 = vunpack.c.l.b16 %v785
  %v804 = vunpack.c.h.b16 %v785
  %v805 = vunpack.c.l.b16 %v786
  %v806 = vunpack.c.h.b16 %v786
  %v807 = vunpack.c.l.b16 %v787
  %v808 = vunpack.c.h.b16 %v787
  %v809 = vunpack.c.l.b16 %v788
  %v810 = vunpack.c.h.b16 %v788
  %v811 = vunpack.c.l.b16 %v789
  %v812 = vunpack.c.h.b16 %v789
  %v813 = vunpack.c.l.b16 %v790
  %v814 = vunpack.c.h.b16 %v790
  %v815 = vpack.c.b16 %v799, %v799
  %v816 = vpack.c.b16 %v800, %v800
  %v817 = vpack.c.b16 %v801, %v801
  %v818 = vpack.c.b16 %v802, %v802
  %v819 = vpack.c.b16 %v803, %v803
  %v820 = vpack.c.b16 %v804, %v804
  %v821 = vpack.c.b16 %v805, %v805
  %v822 = vpack.c.b16 %v806, %v806
  %v823 = vpack.c.b16 %v807, %v807
  %v824 = vpack.c.b16 %v808, %v808
  %v825 = vpack.c.b16 %v809, %v809
  %v826 = vpack.c.b16 %v810, %v810
  %v827 = vpack.c.b16 %v811, %v811
  %v828 = vpack.c.b16 %v812, %v812
  %v829 = vpack.c.b16 %v813, %v813
  %v830 = vpack.c.b16 %v814, %v814
  %847 = vst [vmem:[%s4] sm:$0xf] %v815
  %848 = vst [vmem:[%s4 + $0x4] sm:$0xf] %v816
  %849 = vst [vmem:[%s4 + $0x8] sm:$0xf] %v817
  %850 = vst [vmem:[%s4 + $0xc] sm:$0xf] %v818
  %851 = vst [vmem:[%s4 + $0x10] sm:$0xf] %v819
  %852 = vst [vmem:[%s4 + $0x14] sm:$0xf] %v820
  %853 = vst [vmem:[%s4 + $0x18] sm:$0xf] %v821
  %854 = vst [vmem:[%s4 + $0x1c] sm:$0xf] %v822
  %855 = vst [vmem:[%s4 + $0x20] sm:$0xf] %v823
  %856 = vst [vmem:[%s4 + $0x24] sm:$0xf] %v824
  %857 = vst [vmem:[%s4 + $0x28] sm:$0xf] %v825
  %858 = vst [vmem:[%s4 + $0x2c] sm:$0xf] %v826
  %859 = vst [vmem:[%s4 + $0x30] sm:$0xf] %v827
  %860 = vst [vmem:[%s4 + $0x34] sm:$0xf] %v828
  %861 = vst [vmem:[%s4 + $0x38] sm:$0xf] %v829
  %862 = vst [vmem:[%s4 + $0x3c] sm:$0xf] %v830
  // Predicated region
  $region18: #{efficientnet_model.9} parent=0 // pred_check
    _
  $region19: #{efficientnet_model.9} parent=0 // pred_check_branch
    %864 = sbr.rel (0) target = $region21
  $region20: #{efficientnet_model.9} parent=0 // pred_region
    _
  $region21: #{efficientnet_model.9} parent=0 // pred_fallthru
    _
  // Predicated region
  $region22: #{efficientnet_model.9} parent=0 // pred_check
    _
  $region23: #{efficientnet_model.9} parent=0 // pred_check_branch
    %866 = sbr.rel (0) target = $region25
  $region24: #{efficientnet_model.9} parent=0 // pred_region
    _
  $region25: #{efficientnet_model.9} parent=0 // pred_fallthru
    _

// kernel: efficientnet_model.15
$region0: #{efficientnet_model.15}
  #allocation0 [shape = 'u32[]', space=smem, size = 0x4, offset = 0x4, fixed_abs, tag = 'smem constant byte address 0x4 - core index']
  #allocation1 [shape = 'u32[144,128]{1,0:T(1,128)}', space=vmem, size = 0x12000, scoped, tag = 'internal scratch']
  %s0 = inlined_call_operand.vmem [shape: bf16[2,16,128], index: 0, kind: input, shape index: {}]
  %s1 = inlined_call_operand.vmem [shape: f32[2,128], index: 1, kind: output, shape index: {}]
  %s2 = sld [smem:[#allocation0]]
  $region22: #{efficientnet_model.15} parent=0
    _
  %s4 = ssub.s32 1, %s2
  %s5 = scalar_select 0, %s4, %s2
  // Predicated region
  $region2: #{efficientnet_model.15} parent=0 // pred_check
    _
  $region3: #{efficientnet_model.15} parent=0 // pred_check_branch
    %7 = sbr.rel (0) target = $region5
  $region4: #{efficientnet_model.15} parent=0 // pred_region
    _
  $region5: #{efficientnet_model.15} parent=0 // pred_fallthru
    _
  %p8 = scmp.eq.s32.totalorder 0, 0
  // Predicated region
  $region6: #{efficientnet_model.15} parent=0 // pred_check
    %p9 = pneg %p8
  $region7: #{efficientnet_model.15} parent=0 // pred_check_branch
    %11 = sbr.rel (%p9) target = $region9
  $region8: #{efficientnet_model.15} parent=0 // pred_region
    %12 = vst [vmem:[%s1] sm:$0x3] 0.0
  $region9: #{efficientnet_model.15} parent=0 // pred_fallthru
    _
  %v13 = vld [vmem:[%s1] sm:$0x3]
  %v14 = vld [vmem:[%s0] sm:$0xf]
  %v15 = vld [vmem:[%s0 + $0x4] sm:$0xf]
  %v16 = vld [vmem:[%s0 + $0x8] sm:$0xf]
  %v17 = vld [vmem:[%s0 + $0xc] sm:$0xf]
  %v18 = vunpack.c.l.bf16 %v14
  %v19 = vunpack.c.l.bf16 %v15
  %v20 = vunpack.c.l.bf16 %v16
  %v21 = vunpack.c.l.bf16 %v17
  %v22 = vadd.f32 %v18, %v19
  %v23 = vrot.slane %v22, 4
  %v24 = vadd.f32 %v22, %v23
  %v25 = vrot.slane %v24, 2
  %v26 = vadd.f32 %v24, %v25
  %v27 = vrot.slane %v26, 1
  %v28 = vadd.f32 %v26, %v27
  %v29 = vadd.f32 %v20, %v21
  %v30 = vrot.slane %v29, 4
  %v31 = vadd.f32 %v29, %v30
  %v32 = vrot.slane %v31, 2
  %v33 = vadd.f32 %v31, %v32
  %v34 = vrot.slane %v33, 1
  %v35 = vadd.f32 %v33, %v34
  %vm38 = vcmask 1041409
  %v39 = vsel %vm38, %v35, %v28
  %v41 = vadd.f32 %v13, %v39
  %42 = vst [vmem:[%s1] sm:$0x3] %v41
  // Predicated region
  $region10: #{efficientnet_model.15} parent=0 // pred_check
    %p43 = pneg %p8
  $region11: #{efficientnet_model.15} parent=0 // pred_check_branch
    %45 = sbr.rel (%p43) target = $region13
  $region12: #{efficientnet_model.15} parent=0 // pred_region
    %v46 = vld [vmem:[%s1] sm:$0x3]
    %v47 = vmul.f32 %v46, 0.0625
    %48 = vst [vmem:[%s1] sm:$0x3] %v47
  $region13: #{efficientnet_model.15} parent=0 // pred_fallthru
    _
  // Predicated region
  $region14: #{efficientnet_model.15} parent=0 // pred_check
    _
  $region15: #{efficientnet_model.15} parent=0 // pred_check_branch
    %50 = sbr.rel (0) target = $region17
  $region16: #{efficientnet_model.15} parent=0 // pred_region
    _
  $region17: #{efficientnet_model.15} parent=0 // pred_fallthru
    _
  // Predicated region
  $region18: #{efficientnet_model.15} parent=0 // pred_check
    _
  $region19: #{efficientnet_model.15} parent=0 // pred_check_branch
    %52 = sbr.rel (0) target = $region21
  $region20: #{efficientnet_model.15} parent=0 // pred_region
    _
  $region21: #{efficientnet_model.15} parent=0 // pred_fallthru
    _

// kernel: efficientnet_model.13
$region0: #{efficientnet_model.13}
  #allocation0 [shape = 'u32[]', space=smem, size = 0x4, offset = 0x4, fixed_abs, tag = 'smem constant byte address 0x4 - core index']
  #allocation1 [shape = 'u32[144,128]{1,0:T(1,128)}', space=vmem, size = 0x12000, scoped, tag = 'internal scratch']
  %s0 = inlined_call_operand.vmem [shape: bf16[32,128], index: 0, kind: input, shape index: {}]
  %s1 = inlined_call_operand.vmem [shape: f32[2,1,128], index: 1, kind: input, shape index: {}]
  %s2 = inlined_call_operand.vmem [shape: bf16[128,128], index: 2, kind: input, shape index: {}]
  %s3 = inlined_call_operand.vmem [shape: f32[1,128], index: 3, kind: input, shape index: {}]
  %s4 = inlined_call_operand.vmem [shape: f32[1,128], index: 4, kind: input, shape index: {}]
  %s5 = inlined_call_operand.vmem [shape: bf16[32,128], index: 5, kind: output, shape index: {}]
  %s6 = sld [smem:[#allocation0]]
  $region53: #{efficientnet_model.13} parent=0
    _
  %s8 = ssub.s32 1, %s6
  %s9 = scalar_select 0, %s8, %s6
  loop: start=0, step=1, limit=4
  $region2: #{efficientnet_model.13} parent=0 // loop_pre_header
    _
  $region3: #{efficientnet_model.13} parent=0 // loop_header
    %s11 = sphi 0, %s15
    %p12 = scmp.ge.s32.totalorder %s11, 4
    %s18 = sphi 0, %s30
    %s19 = sphi 0, %s26
    %s20 = sphi 0, %s18
    %s21 = sphi 0, %s19
    %s22 = sphi 0, %s20
    %s23 = sphi 0, %s21
    %s35 = sphi 0, %s37
    %s38 = sphi 0, %s35
    %s39 = sphi 0, %s38
    %s55 = sphi 0, %s39
    %s61 = sphi 0, %s63
    %s64 = sphi 0, %s61
    %s65 = sphi 0, %s64
    %s81 = sphi 0, %s65
    %s85 = sphi 0, %s85
    %s87 = sphi 0, %s85
    %s88 = sphi 0, %s87
    %s102 = sphi 0, %s88
    %s106 = sphi 0, %s106
    %s108 = sphi 0, %s106
    %s109 = sphi 0, %s108
    %s123 = sphi 0, %s109
    %s127 = sphi 0, %s127
    %s129 = sphi 0, %s127
    %s130 = sphi 0, %s129
    %s144 = sphi 0, %s130
    %s152 = sphi 0, %s154
    %s155 = sphi 0, %s152
    %s156 = sphi 0, %s155
    %s172 = sphi 0, %s156
  $region4: #{efficientnet_model.13} parent=0 // loop_header_branch
    %14 = sbr.rel (%p12) target = $region8
  $region5: #{efficientnet_model.13} parent=0 // loop_body
    %s16 = ssub.s32 %s11, 1
    %s17 = ssub.s32 %s11, 2
    %s24 = sadd.s32 1, %s19
    %p25 = scmp.ge.s32.totalorder %s24, 1
    %s26 = scalar_select %p25, 0, %s24
    %s27 = sadd.s32 1, %s18
    %s28 = scalar_select %p25, %s27, %s18
    %p29 = scmp.ge.s32.totalorder %s28, 2
    %s30 = scalar_select %p29, 0, %s28
    %s31 = sadd.s32 %s18, %s19
    %s32 = sadd.s32 %s30, %s26
    %s33 = ssub.s32 %s31, %s32
    %p34 = scmp.eq.s32.totalorder %s33, 0
    %s36 = sadd.s32 %s35, 1
    %s37 = scalar_select %p34, %s35, %s36
    %p40 = pneg %p34
    %p41 = scmp.eq.s32.totalorder %s11, 1
    %p42 = por %p40, %p41
    %p43 = scmp.ne.s32.totalorder %s35, %s38
    %p44 = scmp.eq.s32.totalorder %s11, 0
    %p45 = por %p43, %p44
    %p46 = scmp.ne.s32.totalorder %s35, %s38
    %p47 = scmp.eq.s32.totalorder %s16, 1
    %p48 = por %p46, %p47
    %p49 = scmp.ne.s32.totalorder %s38, %s39
    %p50 = scmp.eq.s32.totalorder %s16, 0
    %p51 = por %p49, %p50
    %p52 = scmp.ne.s32.totalorder %s38, %s39
    %p53 = scmp.eq.s32.totalorder %s17, 1
    %p54 = por %p52, %p53
    %p56 = scmp.ne.s32.totalorder %s39, %s55
    %p57 = scmp.eq.s32.totalorder %s17, 0
    %p58 = por %p56, %p57
    %s59 = ssub.s32 %s18, %s30
    %p60 = scmp.eq.s32.totalorder %s59, 0
    %s62 = sadd.s32 %s61, 1
    %s63 = scalar_select %p60, %s61, %s62
    %p66 = pneg %p60
    %p67 = scmp.eq.s32.totalorder %s11, 1
    %p68 = por %p66, %p67
    %p69 = scmp.ne.s32.totalorder %s61, %s64
    %p70 = scmp.eq.s32.totalorder %s11, 0
    %p71 = por %p69, %p70
    %p72 = scmp.ne.s32.totalorder %s61, %s64
    %p73 = scmp.eq.s32.totalorder %s16, 1
    %p74 = por %p72, %p73
    %p75 = scmp.ne.s32.totalorder %s64, %s65
    %p76 = scmp.eq.s32.totalorder %s16, 0
    %p77 = por %p75, %p76
    %p78 = scmp.ne.s32.totalorder %s64, %s65
    %p79 = scmp.eq.s32.totalorder %s17, 1
    %p80 = por %p78, %p79
    %p82 = scmp.ne.s32.totalorder %s65, %s81
    %p83 = scmp.eq.s32.totalorder %s17, 0
    %p84 = por %p82, %p83
    %s86 = sadd.s32 %s85, 1
    %p89 = scmp.eq.s32.totalorder %s11, 1
    %p90 = scmp.ne.s32.totalorder %s85, %s87
    %p91 = scmp.eq.s32.totalorder %s11, 0
    %p92 = por %p90, %p91
    %p93 = scmp.ne.s32.totalorder %s85, %s87
    %p94 = scmp.eq.s32.totalorder %s16, 1
    %p95 = por %p93, %p94
    %p96 = scmp.ne.s32.totalorder %s87, %s88
    %p97 = scmp.eq.s32.totalorder %s16, 0
    %p98 = por %p96, %p97
    %p99 = scmp.ne.s32.totalorder %s87, %s88
    %p100 = scmp.eq.s32.totalorder %s17, 1
    %p101 = por %p99, %p100
    %p103 = scmp.ne.s32.totalorder %s88, %s102
    %p104 = scmp.eq.s32.totalorder %s17, 0
    %p105 = por %p103, %p104
    %s107 = sadd.s32 %s106, 1
    %p110 = scmp.eq.s32.totalorder %s11, 1
    %p111 = scmp.ne.s32.totalorder %s106, %s108
    %p112 = scmp.eq.s32.totalorder %s11, 0
    %p113 = por %p111, %p112
    %p114 = scmp.ne.s32.totalorder %s106, %s108
    %p115 = scmp.eq.s32.totalorder %s16, 1
    %p116 = por %p114, %p115
    %p117 = scmp.ne.s32.totalorder %s108, %s109
    %p118 = scmp.eq.s32.totalorder %s16, 0
    %p119 = por %p117, %p118
    %p120 = scmp.ne.s32.totalorder %s108, %s109
    %p121 = scmp.eq.s32.totalorder %s17, 1
    %p122 = por %p120, %p121
    %p124 = scmp.ne.s32.totalorder %s109, %s123
    %p125 = scmp.eq.s32.totalorder %s17, 0
    %p126 = por %p124, %p125
    %s128 = sadd.s32 %s127, 1
    %p131 = scmp.eq.s32.totalorder %s11, 1
    %p132 = scmp.ne.s32.totalorder %s127, %s129
    %p133 = scmp.eq.s32.totalorder %s11, 0
    %p134 = por %p132, %p133
    %p135 = scmp.ne.s32.totalorder %s127, %s129
    %p136 = scmp.eq.s32.totalorder %s16, 1
    %p137 = por %p135, %p136
    %p138 = scmp.ne.s32.totalorder %s129, %s130
    %p139 = scmp.eq.s32.totalorder %s16, 0
    %p140 = por %p138, %p139
    %p141 = scmp.ne.s32.totalorder %s129, %s130
    %p142 = scmp.eq.s32.totalorder %s17, 1
    %p143 = por %p141, %p142
    %p145 = scmp.ne.s32.totalorder %s130, %s144
    %p146 = scmp.eq.s32.totalorder %s17, 0
    %p147 = por %p145, %p146
    %s148 = sadd.s32 %s18, %s19
    %s149 = sadd.s32 %s30, %s26
    %s150 = ssub.s32 %s148, %s149
    %p151 = scmp.eq.s32.totalorder %s150, 0
    %s153 = sadd.s32 %s152, 1
    %s154 = scalar_select %p151, %s152, %s153
    %p157 = pneg %p151
    %p158 = scmp.eq.s32.totalorder %s11, 1
    %p159 = por %p157, %p158
    %p160 = scmp.ne.s32.totalorder %s152, %s155
    %p161 = scmp.eq.s32.totalorder %s11, 0
    %p162 = por %p160, %p161
    %p163 = scmp.ne.s32.totalorder %s152, %s155
    %p164 = scmp.eq.s32.totalorder %s16, 1
    %p165 = por %p163, %p164
    %p166 = scmp.ne.s32.totalorder %s155, %s156
    %p167 = scmp.eq.s32.totalorder %s16, 0
    %p168 = por %p166, %p167
    %p169 = scmp.ne.s32.totalorder %s155, %s156
    %p170 = scmp.eq.s32.totalorder %s17, 1
    %p171 = por %p169, %p170
    %p173 = scmp.ne.s32.totalorder %s156, %s172
    %p174 = scmp.eq.s32.totalorder %s17, 0
    %p175 = por %p173, %p174
    %p176 = scmp.le.s32.totalorder 1, %s11
    %p177 = scmp.lt.s32.totalorder %s11, 3
    %p178 = pnand %p176, %p177
    %p179 = pneg %p178
    // Predicated region
    $region9: #{efficientnet_model.13} parent=5 // pred_check
      _
    $region10: #{efficientnet_model.13} parent=5 // pred_check_branch
      %181 = sbr.rel (%p178) target = $region12
    $region11: #{efficientnet_model.13} parent=5 // pred_region
      %s182 = ssub.s32 %s11, 1
      // Predicated region
      $region13: #{efficientnet_model.13} parent=11 // pred_check
        %p183 = pneg %p98
      $region14: #{efficientnet_model.13} parent=11 // pred_check_branch
        %185 = sbr.rel (%p183) target = $region16
      $region15: #{efficientnet_model.13} parent=11 // pred_region
        _
      $region16: #{efficientnet_model.13} parent=11 // pred_fallthru
        _
      // Predicated region
      $region17: #{efficientnet_model.13} parent=11 // pred_check
        %p186 = pneg %p119
      $region18: #{efficientnet_model.13} parent=11 // pred_check_branch
        %188 = sbr.rel (%p186) target = $region20
      $region19: #{efficientnet_model.13} parent=11 // pred_region
        _
      $region20: #{efficientnet_model.13} parent=11 // pred_fallthru
        _
      // Predicated region
      $region21: #{efficientnet_model.13} parent=11 // pred_check
        %p189 = pneg %p140
      $region22: #{efficientnet_model.13} parent=11 // pred_check_branch
        %191 = sbr.rel (%p189) target = $region24
      $region23: #{efficientnet_model.13} parent=11 // pred_region
        _
      $region24: #{efficientnet_model.13} parent=11 // pred_fallthru
        _
    $region12: #{efficientnet_model.13} parent=5 // pred_fallthru
      _
    %p192 = scmp.lt.s32.totalorder %s11, 2
    // Predicated region
    $region25: #{efficientnet_model.13} parent=5 // pred_check
      %p193 = pneg %p192
    $region26: #{efficientnet_model.13} parent=5 // pred_check_branch
      %195 = sbr.rel (%p193) target = $region28
    $region27: #{efficientnet_model.13} parent=5 // pred_region
      // Predicated region
      $region29: #{efficientnet_model.13} parent=27 // pred_check
        %p196 = pneg %p45
      $region30: #{efficientnet_model.13} parent=27 // pred_check_branch
        %198 = sbr.rel (%p196) target = $region32
      $region31: #{efficientnet_model.13} parent=27 // pred_region
        %s199 = sadd.s32 %s18, %s19
        %s200 = smul.u32 2, %s199
        %p201 = scmp.lt.s32.totalorder %s200, 3
        %s202 = scalar_select %p201, %s200, 3
        %s203 = smul.addr %s202, 4
        %s204 = scalar_lea.vmem %s0, %s203
        %s205 = sadd.s32 %s18, %s19
        %s206 = smul.u32 2, %s205
      $region32: #{efficientnet_model.13} parent=27 // pred_fallthru
        _
      // Predicated region
      $region33: #{efficientnet_model.13} parent=27 // pred_check
        %p207 = pneg %p71
      $region34: #{efficientnet_model.13} parent=27 // pred_check_branch
        %209 = sbr.rel (%p207) target = $region36
      $region35: #{efficientnet_model.13} parent=27 // pred_region
        %p210 = scmp.lt.s32.totalorder %s18, 1
        %s211 = scalar_select %p210, %s18, 1
        %s212 = scalar_lea.vmem %s1, %s211
      $region36: #{efficientnet_model.13} parent=27 // pred_fallthru
        _
    $region28: #{efficientnet_model.13} parent=5 // pred_fallthru
      _
    %p213 = scmp.le.s32.totalorder 1, %s11
    %p214 = scmp.lt.s32.totalorder %s11, 3
    %p215 = pnand %p213, %p214
    %p216 = pneg %p215
    // Predicated region
    $region37: #{efficientnet_model.13} parent=5 // pred_check
      _
    $region38: #{efficientnet_model.13} parent=5 // pred_check_branch
      %218 = sbr.rel (%p215) target = $region40
    $region39: #{efficientnet_model.13} parent=5 // pred_region
      %s219 = ssub.s32 %s11, 1
      %s220 = sadd.s32 %s20, %s21
      %s221 = smul.u32 2, %s220
      %p222 = scmp.lt.s32.totalorder %s221, 3
      %s223 = scalar_select %p222, %s221, 3
      %s224 = smul.addr %s223, 4
      %s225 = scalar_lea.vmem %s0, %s224
      %p226 = pneg %p51
      %p227 = pneg %p48
      %p228 = scmp.lt.s32.totalorder %s20, 1
      %s229 = scalar_select %p228, %s20, 1
      %s230 = scalar_lea.vmem %s1, %s229
      %p231 = pneg %p77
      %p232 = pneg %p74
      %p233 = pneg %p98
      %p234 = pneg %p95
      %p235 = pneg %p119
      %p236 = pneg %p116
      %p237 = pneg %p140
      %p238 = pneg %p137
      %p239 = pneg %p168
      %p240 = pneg %p165
      %s241 = sadd.s32 %s20, %s21
      %s242 = smul.u32 2, %s241
      %p243 = scmp.lt.s32.totalorder %s242, 3
      %s244 = scalar_select %p243, %s242, 3
      %s245 = smul.addr %s244, 4
      %s246 = scalar_lea.vmem %s5, %s245
      %s247 = sadd.s32 %s20, %s21
      %s248 = smul.u32 2, %s247
      %p249 = scmp.lt.s32.totalorder %s248, 3
      %s250 = scalar_select %p249, %s248, 3
      %s251 = smul.addr %s250, 4
      %s252 = scalar_lea.vmem %s0, %s251
      %s253 = sadd.s32 %s20, %s21
      %s254 = smul.u32 2, %s253
      %p255 = scmp.lt.s32.totalorder %s20, 1
      %s256 = scalar_select %p255, %s20, 1
      %s257 = scalar_lea.vmem %s1, %s256
      %s258 = sadd.s32 %s20, %s21
      %s259 = smul.u32 2, %s258
      %p260 = scmp.lt.s32.totalorder %s259, 3
      %s261 = scalar_select %p260, %s259, 3
      %s262 = smul.addr %s261, 4
      %s263 = scalar_lea.vmem %s5, %s262
      %s264 = sadd.s32 %s20, %s21
      %s265 = smul.u32 2, %s264
      %v267 = vld [vmem:[%s257] sm:$0x1]
      %v268 = vld [vmem:[%s252] sm:$0xf]
      %v269 = vld [vmem:[%s252 + $0x4] sm:$0xf]
      %v270 = vunpack.c.l.bf16 %v268
      %v271 = vunpack.c.l.bf16 %v269
      %v273 = vlaneseq
      %v274 = vshrl.u32 %v273, 7
      %v275 = vsub.s32 0, %v274
      %v276 = vrot.slane %v267, %v275
      %v278 = vmul.f32 %v270, %v276
      %v279 = vmul.f32 %v271, %v276
      %v280 = vpack.c.bf16 %v279, %v278
      %v281 = vld [vmem:[%s2] sm:$0xf]
      %v282 = vld [vmem:[%s2 + $0x4] sm:$0xf]
      %v283 = vld [vmem:[%s2 + $0x8] sm:$0xf]
      %v284 = vld [vmem:[%s2 + $0xc] sm:$0xf]
      %v285 = vld [vmem:[%s2 + $0x10] sm:$0xf]
      %v286 = vld [vmem:[%s2 + $0x14] sm:$0xf]
      %v287 = vld [vmem:[%s2 + $0x18] sm:$0xf]
      %v288 = vld [vmem:[%s2 + $0x1c] sm:$0xf]
      %v289 = vld [vmem:[%s2 + $0x20] sm:$0xf]
      %v290 = vld [vmem:[%s2 + $0x24] sm:$0xf]
      %v291 = vld [vmem:[%s2 + $0x28] sm:$0xf]
      %v292 = vld [vmem:[%s2 + $0x2c] sm:$0xf]
      %v293 = vld [vmem:[%s2 + $0x30] sm:$0xf]
      %v294 = vld [vmem:[%s2 + $0x34] sm:$0xf]
      %v295 = vld [vmem:[%s2 + $0x38] sm:$0xf]
      %v296 = vld [vmem:[%s2 + $0x3c] sm:$0xf]
      %v313 = vunpack.c.l.b16 %v281
      %v314 = vunpack.c.l.b16 %v282
      %v315 = vunpack.c.l.b16 %v283
      %v316 = vunpack.c.l.b16 %v284
      %v317 = vunpack.c.l.b16 %v285
      %v318 = vunpack.c.l.b16 %v286
      %v319 = vunpack.c.l.b16 %v287
      %v320 = vunpack.c.l.b16 %v288
      %v321 = vunpack.c.l.b16 %v289
      %v322 = vunpack.c.l.b16 %v290
      %v323 = vunpack.c.l.b16 %v291
      %v324 = vunpack.c.l.b16 %v292
      %v325 = vunpack.c.l.b16 %v293
      %v326 = vunpack.c.l.b16 %v294
      %v327 = vunpack.c.l.b16 %v295
      %v328 = vunpack.c.l.b16 %v296
      %v329 = vpack.c.b16 %v314, %v313
      %v330 = vpack.c.b16 %v316, %v315
      %v331 = vpack.c.b16 %v318, %v317
      %v332 = vpack.c.b16 %v320, %v319
      %v333 = vpack.c.b16 %v322, %v321
      %v334 = vpack.c.b16 %v324, %v323
      %v335 = vpack.c.b16 %v326, %v325
      %v336 = vpack.c.b16 %v328, %v327
      %345 = vmatprep.subr.bf16.mxu0 0
      %346 = vmatpush1.bf16.msra.mxu0 %v329
      %347 = vmatprep.subr.bf16.mxu0 0
      %348 = vmatpush1.bf16.msra.mxu0 %v330
      %349 = vmatprep.subr.bf16.mxu0 0
      %350 = vmatpush1.bf16.msra.mxu0 %v331
      %351 = vmatprep.subr.bf16.mxu0 0
      %352 = vmatpush1.bf16.msra.mxu0 %v332
      %353 = vmatprep.subr.bf16.mxu0 0
      %354 = vmatpush1.bf16.msra.mxu0 %v333
      %355 = vmatprep.subr.bf16.mxu0 0
      %356 = vmatpush1.bf16.msra.mxu0 %v334
      %357 = vmatprep.subr.bf16.mxu0 0
      %358 = vmatpush1.bf16.msra.mxu0 %v335
      %359 = vmatprep.subr.bf16.mxu0 0
      %360 = vmatpush1.bf16.msra.mxu0 %v336
      %361 = vmatprep.subr.bf16.mxu0 0
      %362 = vmatpush1.bf16.msra.mxu0 0
      %363 = vmatprep.subr.bf16.mxu0 0
      %364 = vmatpush1.bf16.msra.mxu0 0
      %365 = vmatprep.subr.bf16.mxu0 0
      %366 = vmatpush1.bf16.msra.mxu0 0
      %367 = vmatprep.subr.bf16.mxu0 0
      %368 = vmatpush1.bf16.msra.mxu0 0
      %369 = vmatprep.subr.bf16.mxu0 0
      %370 = vmatpush1.bf16.msra.mxu0 0
      %371 = vmatprep.subr.bf16.mxu0 0
      %372 = vmatpush1.bf16.msra.mxu0 0
      %373 = vmatprep.subr.bf16.mxu0 0
      %374 = vmatpush1.bf16.msra.mxu0 0
      %375 = vmatprep.subr.bf16.mxu0 0
      %376 = vmatpush1.bf16.msra.mxu0 0
      %377 = vmatprep.mubr.bf16.mxu0 0
      %378 = vmatmul.mubr.bf16.gmra.mrb[0].mxu0 %v280
      %v379 = vpop.f32.mrb[0].mxu0
      %v380 = vadd.f32 0.0, %v379
      %v381 = vpop.f32.mrb[0].mxu0
      %v382 = vpop.f32.mrb[0].mxu0
      %v383 = vadd.f32 0.0, %v382
      %v384 = vpop.f32.mrb[0].mxu0
      %385 = vdwg.mxu0
      %v386 = vld [vmem:[%s3] sm:$0x1]
      %v388 = vlaneseq
      %v389 = vshrl.u32 %v388, 7
      %v390 = vsub.s32 0, %v389
      %v391 = vrot.slane %v386, %v390
      %v393 = vmul.f32 %v380, %v391
      %v394 = vmul.f32 %v383, %v391
      %v395 = vld [vmem:[%s4] sm:$0x1]
      %v397 = vlaneseq
      %v398 = vshrl.u32 %v397, 7
      %v399 = vsub.s32 0, %v398
      %v400 = vrot.slane %v395, %v399
      %v402 = vadd.f32 %v393, %v400
      %v403 = vadd.f32 %v394, %v400
      %v404 = vpack.c.bf16 %v403, %v402
      %v406 = vunpack.c.l.b16 %v404
      %v407 = vunpack.c.h.b16 %v404
      %v408 = vpack.c.b16 %v406, %v406
      %v409 = vpack.c.b16 %v407, %v407
      %412 = vst [vmem:[%s263] sm:$0xf] %v408
      %413 = vst [vmem:[%s263 + $0x4] sm:$0xf] %v409
      %s414 = sadd.s32 %s20, %s21
      %s415 = smul.u32 2, %s414
      %p416 = scmp.lt.s32.totalorder %s415, 3
      %s417 = scalar_select %p416, %s415, 3
      %s418 = smul.addr %s417, 4
      %s419 = scalar_lea.vmem %s5, %s418
      // Predicated region
      $region41: #{efficientnet_model.13} parent=39 // pred_check
        %p420 = pneg %p165
      $region42: #{efficientnet_model.13} parent=39 // pred_check_branch
        %422 = sbr.rel (%p420) target = $region44
      $region43: #{efficientnet_model.13} parent=39 // pred_region
        %s423 = sadd.s32 %s20, %s21
        %s424 = smul.u32 2, %s423
      $region44: #{efficientnet_model.13} parent=39 // pred_fallthru
        _
    $region40: #{efficientnet_model.13} parent=5 // pred_fallthru
      _
    %p425 = scmp.le.s32.totalorder 2, %s11
    // Predicated region
    $region45: #{efficientnet_model.13} parent=5 // pred_check
      %p426 = pneg %p425
    $region46: #{efficientnet_model.13} parent=5 // pred_check_branch
      %428 = sbr.rel (%p426) target = $region48
    $region47: #{efficientnet_model.13} parent=5 // pred_region
      %s429 = ssub.s32 %s11, 2
      // Predicated region
      $region49: #{efficientnet_model.13} parent=47 // pred_check
        %p430 = pneg %p171
      $region50: #{efficientnet_model.13} parent=47 // pred_check_branch
        %432 = sbr.rel (%p430) target = $region52
      $region51: #{efficientnet_model.13} parent=47 // pred_region
        %s433 = sadd.s32 %s22, %s23
        %s434 = smul.u32 2, %s433
        %p435 = scmp.lt.s32.totalorder %s434, 3
        %s436 = scalar_select %p435, %s434, 3
        %s437 = smul.addr %s436, 4
        %s438 = scalar_lea.vmem %s5, %s437
      $region52: #{efficientnet_model.13} parent=47 // pred_fallthru
        _
    $region48: #{efficientnet_model.13} parent=5 // pred_fallthru
      _
  $region6: #{efficientnet_model.13} parent=0 // loop_footer
    %s15 = sadd.s32 1, %s11
  $region7: #{efficientnet_model.13} parent=0 // loop_footer_branch
    %10 = sbr.rel target = $region3
  $region8: #{efficientnet_model.13} parent=0 // loop_exit
    _

// kernel: efficientnet_model.14
$region0: #{efficientnet_model.14}
  #allocation0 [shape = 'u32[]', space=smem, size = 0x4, offset = 0x4, fixed_abs, tag = 'smem constant byte address 0x4 - core index']
  #allocation1 [shape = 'u32[144,128]{1,0:T(1,128)}', space=vmem, size = 0x12000, scoped, tag = 'internal scratch']
  %s0 = inlined_call_operand.vmem [shape: bf16[32,128], index: 0, kind: input, shape index: {}]
  %s1 = inlined_call_operand.vmem [shape: bf16[128,128], index: 1, kind: input, shape index: {}]
  %s2 = inlined_call_operand.vmem [shape: f32[1,128], index: 2, kind: input, shape index: {}]
  %s3 = inlined_call_operand.vmem [shape: f32[1,128], index: 3, kind: input, shape index: {}]
  %s4 = inlined_call_operand.vmem [shape: bf16[32,128], index: 4, kind: output, shape index: {}]
  %s5 = sld [smem:[#allocation0]]
  $region26: #{efficientnet_model.14} parent=0
    _
  %s7 = ssub.s32 1, %s5
  %s8 = scalar_select 0, %s7, %s5
  // Predicated region
  $region2: #{efficientnet_model.14} parent=0 // pred_check
    _
  $region3: #{efficientnet_model.14} parent=0 // pred_check_branch
    %10 = sbr.rel (0) target = $region5
  $region4: #{efficientnet_model.14} parent=0 // pred_region
    _
  $region5: #{efficientnet_model.14} parent=0 // pred_fallthru
    _
  // Predicated region
  $region6: #{efficientnet_model.14} parent=0 // pred_check
    _
  $region7: #{efficientnet_model.14} parent=0 // pred_check_branch
    %12 = sbr.rel (0) target = $region9
  $region8: #{efficientnet_model.14} parent=0 // pred_region
    _
  $region9: #{efficientnet_model.14} parent=0 // pred_fallthru
    _
  // Predicated region
  $region10: #{efficientnet_model.14} parent=0 // pred_check
    _
  $region11: #{efficientnet_model.14} parent=0 // pred_check_branch
    %14 = sbr.rel (0) target = $region13
  $region12: #{efficientnet_model.14} parent=0 // pred_region
    _
  $region13: #{efficientnet_model.14} parent=0 // pred_fallthru
    _
  // Predicated region
  $region14: #{efficientnet_model.14} parent=0 // pred_check
    _
  $region15: #{efficientnet_model.14} parent=0 // pred_check_branch
    %16 = sbr.rel (0) target = $region17
  $region16: #{efficientnet_model.14} parent=0 // pred_region
    _
  $region17: #{efficientnet_model.14} parent=0 // pred_fallthru
    _
  %v18 = vld [vmem:[%s0] sm:$0xf]
  %v19 = vld [vmem:[%s0 + $0x4] sm:$0xf]
  %v20 = vld [vmem:[%s0 + $0x8] sm:$0xf]
  %v21 = vld [vmem:[%s0 + $0xc] sm:$0xf]
  %v22 = vld [vmem:[%s1] sm:$0xf]
  %v23 = vld [vmem:[%s1 + $0x4] sm:$0xf]
  %v24 = vld [vmem:[%s1 + $0x8] sm:$0xf]
  %v25 = vld [vmem:[%s1 + $0xc] sm:$0xf]
  %v26 = vld [vmem:[%s1 + $0x10] sm:$0xf]
  %v27 = vld [vmem:[%s1 + $0x14] sm:$0xf]
  %v28 = vld [vmem:[%s1 + $0x18] sm:$0xf]
  %v29 = vld [vmem:[%s1 + $0x1c] sm:$0xf]
  %v30 = vld [vmem:[%s1 + $0x20] sm:$0xf]
  %v31 = vld [vmem:[%s1 + $0x24] sm:$0xf]
  %v32 = vld [vmem:[%s1 + $0x28] sm:$0xf]
  %v33 = vld [vmem:[%s1 + $0x2c] sm:$0xf]
  %v34 = vld [vmem:[%s1 + $0x30] sm:$0xf]
  %v35 = vld [vmem:[%s1 + $0x34] sm:$0xf]
  %v36 = vld [vmem:[%s1 + $0x38] sm:$0xf]
  %v37 = vld [vmem:[%s1 + $0x3c] sm:$0xf]
  %v42 = vunpack.c.l.b16 %v18
  %v43 = vunpack.c.l.b16 %v19
  %v44 = vunpack.c.l.b16 %v20
  %v45 = vunpack.c.l.b16 %v21
  %v46 = vpack.c.b16 %v43, %v42
  %v47 = vpack.c.b16 %v45, %v44
  %v66 = vunpack.c.l.b16 %v22
  %v67 = vunpack.c.l.b16 %v23
  %v68 = vunpack.c.l.b16 %v24
  %v69 = vunpack.c.l.b16 %v25
  %v70 = vunpack.c.l.b16 %v26
  %v71 = vunpack.c.l.b16 %v27
  %v72 = vunpack.c.l.b16 %v28
  %v73 = vunpack.c.l.b16 %v29
  %v74 = vunpack.c.l.b16 %v30
  %v75 = vunpack.c.l.b16 %v31
  %v76 = vunpack.c.l.b16 %v32
  %v77 = vunpack.c.l.b16 %v33
  %v78 = vunpack.c.l.b16 %v34
  %v79 = vunpack.c.l.b16 %v35
  %v80 = vunpack.c.l.b16 %v36
  %v81 = vunpack.c.l.b16 %v37
  %v82 = vpack.c.b16 %v67, %v66
  %v83 = vpack.c.b16 %v69, %v68
  %v84 = vpack.c.b16 %v71, %v70
  %v85 = vpack.c.b16 %v73, %v72
  %v86 = vpack.c.b16 %v75, %v74
  %v87 = vpack.c.b16 %v77, %v76
  %v88 = vpack.c.b16 %v79, %v78
  %v89 = vpack.c.b16 %v81, %v80
  %98 = vmatprep.subr.bf16.mxu0 0
  %99 = vmatpush1.bf16.msra.mxu0 %v82
  %100 = vmatprep.subr.bf16.mxu0 0
  %101 = vmatpush1.bf16.msra.mxu0 %v83
  %102 = vmatprep.subr.bf16.mxu0 0
  %103 = vmatpush1.bf16.msra.mxu0 %v84
  %104 = vmatprep.subr.bf16.mxu0 0
  %105 = vmatpush1.bf16.msra.mxu0 %v85
  %106 = vmatprep.subr.bf16.mxu0 0
  %107 = vmatpush1.bf16.msra.mxu0 %v86
  %108 = vmatprep.subr.bf16.mxu0 0
  %109 = vmatpush1.bf16.msra.mxu0 %v87
  %110 = vmatprep.subr.bf16.mxu0 0
  %111 = vmatpush1.bf16.msra.mxu0 %v88
  %112 = vmatprep.subr.bf16.mxu0 0
  %113 = vmatpush1.bf16.msra.mxu0 %v89
  %114 = vmatprep.subr.bf16.mxu0 0
  %115 = vmatpush1.bf16.msra.mxu0 0
  %116 = vmatprep.subr.bf16.mxu0 0
  %117 = vmatpush1.bf16.msra.mxu0 0
  %118 = vmatprep.subr.bf16.mxu0 0
  %119 = vmatpush1.bf16.msra.mxu0 0
  %120 = vmatprep.subr.bf16.mxu0 0
  %121 = vmatpush1.bf16.msra.mxu0 0
  %122 = vmatprep.subr.bf16.mxu0 0
  %123 = vmatpush1.bf16.msra.mxu0 0
  %124 = vmatprep.subr.bf16.mxu0 0
  %125 = vmatpush1.bf16.msra.mxu0 0
  %126 = vmatprep.subr.bf16.mxu0 0
  %127 = vmatpush1.bf16.msra.mxu0 0
  %128 = vmatprep.subr.bf16.mxu0 0
  %129 = vmatpush1.bf16.msra.mxu0 0
  %130 = vmatprep.mubr.bf16.mxu0 0
  %131 = vmatmul.mubr.bf16.gmra.mrb[0].mxu0 %v46
  %v132 = vpop.f32.mrb[0].mxu0
  %v133 = vadd.f32 0.0, %v132
  %v134 = vpop.f32.mrb[0].mxu0
  %v135 = vpop.f32.mrb[0].mxu0
  %v136 = vadd.f32 0.0, %v135
  %v137 = vpop.f32.mrb[0].mxu0
  %138 = vmatprep.mubr.bf16.mxu0 0
  %139 = vmatmul.mubr.bf16.gmra.mrb[0].mxu0 %v47
  %v140 = vpop.f32.mrb[0].mxu0
  %v141 = vadd.f32 0.0, %v140
  %v142 = vpop.f32.mrb[0].mxu0
  %v143 = vpop.f32.mrb[0].mxu0
  %v144 = vadd.f32 0.0, %v143
  %v145 = vpop.f32.mrb[0].mxu0
  %146 = vdwg.mxu0
  %v147 = vld [vmem:[%s2] sm:$0x1]
  %v149 = vlaneseq
  %v150 = vshrl.u32 %v149, 7
  %v151 = vsub.s32 0, %v150
  %v152 = vrot.slane %v147, %v151
  %v154 = vmul.f32 %v133, %v152
  %v155 = vmul.f32 %v136, %v152
  %v156 = vmul.f32 %v141, %v152
  %v157 = vmul.f32 %v144, %v152
  %v158 = vld [vmem:[%s3] sm:$0x1]
  %v160 = vlaneseq
  %v161 = vshrl.u32 %v160, 7
  %v162 = vsub.s32 0, %v161
  %v163 = vrot.slane %v158, %v162
  %v165 = vadd.f32 %v154, %v163
  %v166 = vadd.f32 %v155, %v163
  %v167 = vadd.f32 %v156, %v163
  %v168 = vadd.f32 %v157, %v163
  %v169 = vxor.u32 %v165, 2147483648
  %v170 = vxor.u32 %v166, 2147483648
  %v171 = vxor.u32 %v167, 2147483648
  %v172 = vxor.u32 %v168, 2147483648
  %v173 = vmul.f32 %v169, 1.442695
  %v174 = vpow.pop %v173
  %v175 = vmul.f32 %v170, 1.442695
  %v176 = vpow.pop %v175
  %v177 = vmul.f32 %v171, 1.442695
  %v178 = vpow.pop %v177
  %v179 = vmul.f32 %v172, 1.442695
  %v180 = vpow.pop %v179
  %v181 = vadd.f32 %v174, 1.0
  %v182 = vadd.f32 %v176, 1.0
  %v183 = vadd.f32 %v178, 1.0
  %v184 = vadd.f32 %v180, 1.0
  %v185 = vrcp.pop %v181
  %v186 = vmul.f32 1.0, %v185
  %v187 = vrcp.pop %v182
  %v188 = vmul.f32 1.0, %v187
  %v189 = vrcp.pop %v183
  %v190 = vmul.f32 1.0, %v189
  %v191 = vrcp.pop %v184
  %v192 = vmul.f32 1.0, %v191
  %v193 = vmul.f32 %v165, %v186
  %v194 = vmul.f32 %v166, %v188
  %v195 = vmul.f32 %v167, %v190
  %v196 = vmul.f32 %v168, %v192
  %v197 = vpack.c.bf16 %v194, %v193
  %v198 = vpack.c.bf16 %v196, %v195
  %v201 = vunpack.c.l.b16 %v197
  %v202 = vunpack.c.h.b16 %v197
  %v203 = vunpack.c.l.b16 %v198
  %v204 = vunpack.c.h.b16 %v198
  %v205 = vpack.c.b16 %v201, %v201
  %v206 = vpack.c.b16 %v202, %v202
  %v207 = vpack.c.b16 %v203, %v203
  %v208 = vpack.c.b16 %v204, %v204
  %213 = vst [vmem:[%s4] sm:$0xf] %v205
  %214 = vst [vmem:[%s4 + $0x4] sm:$0xf] %v206
  %215 = vst [vmem:[%s4 + $0x8] sm:$0xf] %v207
  %216 = vst [vmem:[%s4 + $0xc] sm:$0xf] %v208
  // Predicated region
  $region18: #{efficientnet_model.14} parent=0 // pred_check
    _
  $region19: #{efficientnet_model.14} parent=0 // pred_check_branch
    %218 = sbr.rel (0) target = $region21
  $region20: #{efficientnet_model.14} parent=0 // pred_region
    _
  $region21: #{efficientnet_model.14} parent=0 // pred_fallthru
    _
  // Predicated region
  $region22: #{efficientnet_model.14} parent=0 // pred_check
    _
  $region23: #{efficientnet_model.14} parent=0 // pred_check_branch
    %220 = sbr.rel (0) target = $region25
  $region24: #{efficientnet_model.14} parent=0 // pred_region
    _
  $region25: #{efficientnet_model.14} parent=0 // pred_fallthru
    _

// kernel: efficientnet_model.12
$region0: #{efficientnet_model.12}
  #allocation0 [shape = 'u32[]', space=smem, size = 0x4, offset = 0x4, fixed_abs, tag = 'smem constant byte address 0x4 - core index']
  #allocation1 [shape = 'u32[144,128]{1,0:T(1,128)}', space=vmem, size = 0x12000, scoped, tag = 'internal scratch']
  %s0 = inlined_call_operand.vmem [shape: bf16[9,32,128], index: 0, kind: input, shape index: {}]
  %s1 = inlined_call_operand.vmem [shape: bf16[9,128], index: 1, kind: input, shape index: {}]
  %s2 = inlined_call_operand.vmem [shape: f32[1,128], index: 2, kind: input, shape index: {}]
  %s3 = inlined_call_operand.vmem [shape: f32[1,128], index: 3, kind: input, shape index: {}]
  %s4 = inlined_call_operand.vmem [shape: bf16[32,128], index: 4, kind: output, shape index: {}]
  %s5 = sld [smem:[#allocation0]]
  $region26: #{efficientnet_model.12} parent=0
    _
  %s7 = ssub.s32 1, %s5
  %s8 = scalar_select 0, %s7, %s5
  // Predicated region
  $region2: #{efficientnet_model.12} parent=0 // pred_check
    _
  $region3: #{efficientnet_model.12} parent=0 // pred_check_branch
    %10 = sbr.rel (0) target = $region5
  $region4: #{efficientnet_model.12} parent=0 // pred_region
    _
  $region5: #{efficientnet_model.12} parent=0 // pred_fallthru
    _
  // Predicated region
  $region6: #{efficientnet_model.12} parent=0 // pred_check
    _
  $region7: #{efficientnet_model.12} parent=0 // pred_check_branch
    %12 = sbr.rel (0) target = $region9
  $region8: #{efficientnet_model.12} parent=0 // pred_region
    _
  $region9: #{efficientnet_model.12} parent=0 // pred_fallthru
    _
  // Predicated region
  $region10: #{efficientnet_model.12} parent=0 // pred_check
    _
  $region11: #{efficientnet_model.12} parent=0 // pred_check_branch
    %14 = sbr.rel (0) target = $region13
  $region12: #{efficientnet_model.12} parent=0 // pred_region
    _
  $region13: #{efficientnet_model.12} parent=0 // pred_fallthru
    _
  // Predicated region
  $region14: #{efficientnet_model.12} parent=0 // pred_check
    _
  $region15: #{efficientnet_model.12} parent=0 // pred_check_branch
    %16 = sbr.rel (0) target = $region17
  $region16: #{efficientnet_model.12} parent=0 // pred_region
    _
  $region17: #{efficientnet_model.12} parent=0 // pred_fallthru
    _
  %v17 = vld [vmem:[%s1] sm:$0xf]
  %v18 = vld [vmem:[%s1 + $0x4] sm:$0x1]
  %v19 = vunpack.c.l.bf16 %v17
  %v20 = vunpack.c.l.bf16 %v18
  %v21 = vld [vmem:[%s0] sm:$0xf]
  %v22 = vld [vmem:[%s0 + $0x4] sm:$0xf]
  %v23 = vld [vmem:[%s0 + $0x8] sm:$0xf]
  %v24 = vld [vmem:[%s0 + $0xc] sm:$0xf]
  %v25 = vunpack.c.l.bf16 %v21
  %v26 = vunpack.c.l.bf16 %v22
  %v27 = vunpack.c.l.bf16 %v23
  %v28 = vunpack.c.l.bf16 %v24
  %v29 = vlaneseq
  %v30 = vshrl.u32 %v29, 7
  %v31 = vsub.s32 0, %v30
  %v32 = vrot.slane %v19, %v31
  %v33 = vmul.f32 %v25, %v32
  %v34 = vmul.f32 %v26, %v32
  %v35 = vmul.f32 %v27, %v32
  %v36 = vmul.f32 %v28, %v32
  %s37 = scalar_lea.vmem %s0, 16
  %v38 = vld [vmem:[%s37] sm:$0xf]
  %v39 = vld [vmem:[%s37 + $0x4] sm:$0xf]
  %v40 = vld [vmem:[%s37 + $0x8] sm:$0xf]
  %v41 = vld [vmem:[%s37 + $0xc] sm:$0xf]
  %v42 = vunpack.c.l.bf16 %v38
  %v43 = vunpack.c.l.bf16 %v39
  %v44 = vunpack.c.l.bf16 %v40
  %v45 = vunpack.c.l.bf16 %v41
  %v46 = vlaneseq
  %v47 = vshrl.u32 %v46, 7
  %v48 = vsub.s32 1, %v47
  %v49 = vrot.slane %v19, %v48
  %v50 = vmul.f32 %v42, %v49
  %v51 = vmul.f32 %v43, %v49
  %v52 = vmul.f32 %v44, %v49
  %v53 = vmul.f32 %v45, %v49
  %v54 = vadd.f32 %v33, %v50
  %v55 = vadd.f32 %v34, %v51
  %v56 = vadd.f32 %v35, %v52
  %v57 = vadd.f32 %v36, %v53
  %s58 = scalar_lea.vmem %s0, 32
  %v59 = vld [vmem:[%s58] sm:$0xf]
  %v60 = vld [vmem:[%s58 + $0x4] sm:$0xf]
  %v61 = vld [vmem:[%s58 + $0x8] sm:$0xf]
  %v62 = vld [vmem:[%s58 + $0xc] sm:$0xf]
  %v63 = vunpack.c.l.bf16 %v59
  %v64 = vunpack.c.l.bf16 %v60
  %v65 = vunpack.c.l.bf16 %v61
  %v66 = vunpack.c.l.bf16 %v62
  %v67 = vlaneseq
  %v68 = vshrl.u32 %v67, 7
  %v69 = vsub.s32 2, %v68
  %v70 = vrot.slane %v19, %v69
  %v71 = vmul.f32 %v63, %v70
  %v72 = vmul.f32 %v64, %v70
  %v73 = vmul.f32 %v65, %v70
  %v74 = vmul.f32 %v66, %v70
  %v75 = vadd.f32 %v54, %v71
  %v76 = vadd.f32 %v55, %v72
  %v77 = vadd.f32 %v56, %v73
  %v78 = vadd.f32 %v57, %v74
  %s79 = scalar_lea.vmem %s0, 48
  %v80 = vld [vmem:[%s79] sm:$0xf]
  %v81 = vld [vmem:[%s79 + $0x4] sm:$0xf]
  %v82 = vld [vmem:[%s79 + $0x8] sm:$0xf]
  %v83 = vld [vmem:[%s79 + $0xc] sm:$0xf]
  %v84 = vunpack.c.l.bf16 %v80
  %v85 = vunpack.c.l.bf16 %v81
  %v86 = vunpack.c.l.bf16 %v82
  %v87 = vunpack.c.l.bf16 %v83
  %v88 = vlaneseq
  %v89 = vshrl.u32 %v88, 7
  %v90 = vsub.s32 3, %v89
  %v91 = vrot.slane %v19, %v90
  %v92 = vmul.f32 %v84, %v91
  %v93 = vmul.f32 %v85, %v91
  %v94 = vmul.f32 %v86, %v91
  %v95 = vmul.f32 %v87, %v91
  %v96 = vadd.f32 %v75, %v92
  %v97 = vadd.f32 %v76, %v93
  %v98 = vadd.f32 %v77, %v94
  %v99 = vadd.f32 %v78, %v95
  %s100 = scalar_lea.vmem %s0, 64
  %v101 = vld [vmem:[%s100] sm:$0xf]
  %v102 = vld [vmem:[%s100 + $0x4] sm:$0xf]
  %v103 = vld [vmem:[%s100 + $0x8] sm:$0xf]
  %v104 = vld [vmem:[%s100 + $0xc] sm:$0xf]
  %v105 = vunpack.c.l.bf16 %v101
  %v106 = vunpack.c.l.bf16 %v102
  %v107 = vunpack.c.l.bf16 %v103
  %v108 = vunpack.c.l.bf16 %v104
  %v109 = vlaneseq
  %v110 = vshrl.u32 %v109, 7
  %v111 = vsub.s32 4, %v110
  %v112 = vrot.slane %v19, %v111
  %v113 = vmul.f32 %v105, %v112
  %v114 = vmul.f32 %v106, %v112
  %v115 = vmul.f32 %v107, %v112
  %v116 = vmul.f32 %v108, %v112
  %v117 = vadd.f32 %v96, %v113
  %v118 = vadd.f32 %v97, %v114
  %v119 = vadd.f32 %v98, %v115
  %v120 = vadd.f32 %v99, %v116
  %s121 = scalar_lea.vmem %s0, 80
  %v122 = vld [vmem:[%s121] sm:$0xf]
  %v123 = vld [vmem:[%s121 + $0x4] sm:$0xf]
  %v124 = vld [vmem:[%s121 + $0x8] sm:$0xf]
  %v125 = vld [vmem:[%s121 + $0xc] sm:$0xf]
  %v126 = vunpack.c.l.bf16 %v122
  %v127 = vunpack.c.l.bf16 %v123
  %v128 = vunpack.c.l.bf16 %v124
  %v129 = vunpack.c.l.bf16 %v125
  %v130 = vlaneseq
  %v131 = vshrl.u32 %v130, 7
  %v132 = vsub.s32 5, %v131
  %v133 = vrot.slane %v19, %v132
  %v134 = vmul.f32 %v126, %v133
  %v135 = vmul.f32 %v127, %v133
  %v136 = vmul.f32 %v128, %v133
  %v137 = vmul.f32 %v129, %v133
  %v138 = vadd.f32 %v117, %v134
  %v139 = vadd.f32 %v118, %v135
  %v140 = vadd.f32 %v119, %v136
  %v141 = vadd.f32 %v120, %v137
  %s142 = scalar_lea.vmem %s0, 96
  %v143 = vld [vmem:[%s142] sm:$0xf]
  %v144 = vld [vmem:[%s142 + $0x4] sm:$0xf]
  %v145 = vld [vmem:[%s142 + $0x8] sm:$0xf]
  %v146 = vld [vmem:[%s142 + $0xc] sm:$0xf]
  %v147 = vunpack.c.l.bf16 %v143
  %v148 = vunpack.c.l.bf16 %v144
  %v149 = vunpack.c.l.bf16 %v145
  %v150 = vunpack.c.l.bf16 %v146
  %v151 = vlaneseq
  %v152 = vshrl.u32 %v151, 7
  %v153 = vsub.s32 6, %v152
  %v154 = vrot.slane %v19, %v153
  %v155 = vmul.f32 %v147, %v154
  %v156 = vmul.f32 %v148, %v154
  %v157 = vmul.f32 %v149, %v154
  %v158 = vmul.f32 %v150, %v154
  %v159 = vadd.f32 %v138, %v155
  %v160 = vadd.f32 %v139, %v156
  %v161 = vadd.f32 %v140, %v157
  %v162 = vadd.f32 %v141, %v158
  %s163 = scalar_lea.vmem %s0, 112
  %v164 = vld [vmem:[%s163] sm:$0xf]
  %v165 = vld [vmem:[%s163 + $0x4] sm:$0xf]
  %v166 = vld [vmem:[%s163 + $0x8] sm:$0xf]
  %v167 = vld [vmem:[%s163 + $0xc] sm:$0xf]
  %v168 = vunpack.c.l.bf16 %v164
  %v169 = vunpack.c.l.bf16 %v165
  %v170 = vunpack.c.l.bf16 %v166
  %v171 = vunpack.c.l.bf16 %v167
  %v172 = vlaneseq
  %v173 = vshrl.u32 %v172, 7
  %v174 = vsub.s32 7, %v173
  %v175 = vrot.slane %v19, %v174
  %v176 = vmul.f32 %v168, %v175
  %v177 = vmul.f32 %v169, %v175
  %v178 = vmul.f32 %v170, %v175
  %v179 = vmul.f32 %v171, %v175
  %v180 = vadd.f32 %v159, %v176
  %v181 = vadd.f32 %v160, %v177
  %v182 = vadd.f32 %v161, %v178
  %v183 = vadd.f32 %v162, %v179
  %s184 = scalar_lea.vmem %s0, 128
  %v185 = vld [vmem:[%s184] sm:$0xf]
  %v186 = vld [vmem:[%s184 + $0x4] sm:$0xf]
  %v187 = vld [vmem:[%s184 + $0x8] sm:$0xf]
  %v188 = vld [vmem:[%s184 + $0xc] sm:$0xf]
  %v189 = vunpack.c.l.bf16 %v185
  %v190 = vunpack.c.l.bf16 %v186
  %v191 = vunpack.c.l.bf16 %v187
  %v192 = vunpack.c.l.bf16 %v188
  %v193 = vlaneseq
  %v194 = vshrl.u32 %v193, 7
  %v195 = vsub.s32 0, %v194
  %v196 = vrot.slane %v20, %v195
  %v197 = vmul.f32 %v189, %v196
  %v198 = vmul.f32 %v190, %v196
  %v199 = vmul.f32 %v191, %v196
  %v200 = vmul.f32 %v192, %v196
  %v201 = vadd.f32 %v180, %v197
  %v202 = vadd.f32 %v181, %v198
  %v203 = vadd.f32 %v182, %v199
  %v204 = vadd.f32 %v183, %v200
  %v205 = vld [vmem:[%s2] sm:$0x1]
  %v207 = vlaneseq
  %v208 = vshrl.u32 %v207, 7
  %v209 = vsub.s32 0, %v208
  %v210 = vrot.slane %v205, %v209
  %v212 = vmul.f32 %v201, %v210
  %v213 = vmul.f32 %v202, %v210
  %v214 = vmul.f32 %v203, %v210
  %v215 = vmul.f32 %v204, %v210
  %v216 = vld [vmem:[%s3] sm:$0x1]
  %v218 = vlaneseq
  %v219 = vshrl.u32 %v218, 7
  %v220 = vsub.s32 0, %v219
  %v221 = vrot.slane %v216, %v220
  %v223 = vadd.f32 %v212, %v221
  %v224 = vadd.f32 %v213, %v221
  %v225 = vadd.f32 %v214, %v221
  %v226 = vadd.f32 %v215, %v221
  %v227 = vxor.u32 %v223, 2147483648
  %v228 = vxor.u32 %v224, 2147483648
  %v229 = vxor.u32 %v225, 2147483648
  %v230 = vxor.u32 %v226, 2147483648
  %v231 = vmul.f32 %v227, 1.442695
  %v232 = vpow.pop %v231
  %v233 = vmul.f32 %v228, 1.442695
  %v234 = vpow.pop %v233
  %v235 = vmul.f32 %v229, 1.442695
  %v236 = vpow.pop %v235
  %v237 = vmul.f32 %v230, 1.442695
  %v238 = vpow.pop %v237
  %v239 = vadd.f32 %v232, 1.0
  %v240 = vadd.f32 %v234, 1.0
  %v241 = vadd.f32 %v236, 1.0
  %v242 = vadd.f32 %v238, 1.0
  %v243 = vrcp.pop %v239
  %v244 = vmul.f32 1.0, %v243
  %v245 = vrcp.pop %v240
  %v246 = vmul.f32 1.0, %v245
  %v247 = vrcp.pop %v241
  %v248 = vmul.f32 1.0, %v247
  %v249 = vrcp.pop %v242
  %v250 = vmul.f32 1.0, %v249
  %v251 = vmul.f32 %v223, %v244
  %v252 = vmul.f32 %v224, %v246
  %v253 = vmul.f32 %v225, %v248
  %v254 = vmul.f32 %v226, %v250
  %v255 = vpack.c.bf16 %v252, %v251
  %v256 = vpack.c.bf16 %v254, %v253
  %v259 = vunpack.c.l.b16 %v255
  %v260 = vunpack.c.h.b16 %v255
  %v261 = vunpack.c.l.b16 %v256
  %v262 = vunpack.c.h.b16 %v256
  %v263 = vpack.c.b16 %v259, %v259
  %v264 = vpack.c.b16 %v260, %v260
  %v265 = vpack.c.b16 %v261, %v261
  %v266 = vpack.c.b16 %v262, %v262
  %271 = vst [vmem:[%s4] sm:$0xf] %v263
  %272 = vst [vmem:[%s4 + $0x4] sm:$0xf] %v264
  %273 = vst [vmem:[%s4 + $0x8] sm:$0xf] %v265
  %274 = vst [vmem:[%s4 + $0xc] sm:$0xf] %v266
  // Predicated region
  $region18: #{efficientnet_model.12} parent=0 // pred_check
    _
  $region19: #{efficientnet_model.12} parent=0 // pred_check_branch
    %276 = sbr.rel (0) target = $region21
  $region20: #{efficientnet_model.12} parent=0 // pred_region
    _
  $region21: #{efficientnet_model.12} parent=0 // pred_fallthru
    _
  // Predicated region
  $region22: #{efficientnet_model.12} parent=0 // pred_check
    _
  $region23: #{efficientnet_model.12} parent=0 // pred_check_branch
    %278 = sbr.rel (0) target = $region25
  $region24: #{efficientnet_model.12} parent=0 // pred_region
    _
  $region25: #{efficientnet_model.12} parent=0 // pred_fallthru
    _

</llo_original>
